<compile_context>
chip_gen: v7x
topology: tpu7x:2x2x1
jax: 0.10.0
libtpu: 0.0.40
codegen_flags: <defaults>
</compile_context>

<pallas_src>
import functools

import jax
import jax.numpy as jnp
from jax.experimental import pallas as pl
from jax.experimental.pallas import tpu as pltpu


# ----------------------------------------------------------------------------
# Fused GEMM + shift(=folded BN) [+ residual] [+ ReLU] Pallas kernels
# ----------------------------------------------------------------------------
def _gemm_shift_act_kernel(a_ref, b_ref, shift_ref, o_ref, *, relu):
    acc = jnp.dot(a_ref[...], b_ref[...], preferred_element_type=jnp.float32)
    out = acc + shift_ref[...]
    if relu:
        out = jnp.maximum(out, 0.0)
    o_ref[...] = out.astype(o_ref.dtype)


def _gemm_shift_res_act_kernel(a_ref, b_ref, shift_ref, r_ref, o_ref, *, relu):
    acc = jnp.dot(a_ref[...], b_ref[...], preferred_element_type=jnp.float32)
    out = acc + shift_ref[...] + r_ref[...].astype(jnp.float32)
    if relu:
        out = jnp.maximum(out, 0.0)
    o_ref[...] = out.astype(o_ref.dtype)


# ----------------------------------------------------------------------------
# Tiling / VMEM budget helpers
# ----------------------------------------------------------------------------
@functools.lru_cache(maxsize=None)
def _vmem_budget_bytes():
    cap = 64 << 20                       # conservative (v7x per-TC) default
    try:
        cap = int(pltpu.get_tpu_info().vmem_capacity_bytes)
    except Exception:
        pass
    return int(cap * 3 // 4)             # leave headroom for compiler scratch


@functools.lru_cache(maxsize=None)
def _device_kind():
    try:
        return jax.devices()[0].device_kind.lower()
    except Exception:
        return ""


def _vmem_need_bytes(tm, K, N, has_res):
    a = 2 * tm * K * 2                   # double-buffered bf16 A tile
    w = 2 * K * N * 2                    # resident bf16 weight slab (x2 bufs)
    s = 2 * N * 4 + 1024                 # shift row
    o = 2 * tm * N * 2                   # bf16 output tile
    r = 2 * tm * N * 2 if has_res else 0
    return a + w + s + o + r


def _select_tm(M, K, N, has_res):
    budget = _vmem_budget_bytes()
    kind = _device_kind()
    # v5e MXUs are 4x128x128: TM>128 buys nothing there, just burns VMEM.
    cands = (128,) if ("v5 lite" in kind or "v5e" in kind) else (512, 256, 128)
    for tm in cands:
        if tm > 128:
            if M < 2 * tm:
                continue
            # keep >=4 grid steps so the "parallel" M axis pipelines and splits
            # evenly across v7x's two TensorCores.
            if pl.cdiv(M, tm) < 4:
                continue
        if _vmem_need_bytes(tm, K, N, has_res) <= budget:
            return tm
    if _vmem_need_bytes(128, K, N, has_res) <= budget:
        return 128
    return None


def _use_pallas(M, K, N):
    # Route only reasonably sized GEMMs through pallas_call; tiny problems are
    # dominated by launch / pipeline-step overhead.
    return (M >= 256) and (K >= 64) and (M * K * N >= (1 << 21))


# ----------------------------------------------------------------------------
# Fused GEMM wrapper
# ----------------------------------------------------------------------------
def fused_gemm(a, w, shift, residual=None, relu=False):
    """act((a @ w) + shift [+ residual]); f32 accumulation, bf16 output.

    a: (M, K) bf16 activations, w: (K, N) bf16 (BN scale pre-folded),
    shift: (N,) f32, residual: (M, N) bf16 or None.
    """
    M, K = a.shape
    K2, N = w.shape
    assert K == K2
    a = a.astype(jnp.bfloat16)

    def _xla_fallback():
        out = jnp.dot(a, w, preferred_element_type=jnp.float32) + shift
        if residual is not None:
            out = out + residual.astype(jnp.float32)
        if relu:
            out = jnp.maximum(out, 0.0)
        return out.astype(jnp.bfloat16)

    if not _use_pallas(M, K, N):
        return _xla_fallback()

    TM = _select_tm(M, K, N, residual is not None)
    if TM is None:
        # Resident weight slab would not fit even at TM=128.
        # TODO(synk): add a K-tiled accumulator path for very large K*N GEMMs.
        return _xla_fallback()

    shift_row = shift.astype(jnp.float32).reshape(1, N)

    in_specs = [
        pl.BlockSpec((TM, K), lambda i: (i, 0)),
        # Whole weight slab / shift with constant index_map: DMA'd once, held
        # resident in VMEM across all M tiles.
        pl.BlockSpec((K, N), lambda i: (0, 0)),
        pl.BlockSpec((1, N), lambda i: (0, 0)),
    ]
    args = [a, w, shift_row]
    bytes_accessed = (M * K + K * N + M * N) * 2 + N * 4
    if residual is not None:
        in_specs.append(pl.BlockSpec((TM, N), lambda i: (i, 0)))
        args.append(residual.astype(jnp.bfloat16))
        bytes_accessed += M * N * 2
        kernel = functools.partial(_gemm_shift_res_act_kernel, relu=relu)
    else:
        kernel = functools.partial(_gemm_shift_act_kernel, relu=relu)

    out = pl.pallas_call(
        kernel,
        out_shape=jax.ShapeDtypeStruct((M, N), jnp.bfloat16),
        grid=(pl.cdiv(M, TM),),
        in_specs=in_specs,
        out_specs=pl.BlockSpec((TM, N), lambda i: (i, 0)),
        compiler_params=pltpu.CompilerParams(
            dimension_semantics=("parallel",),
            vmem_limit_bytes=_vmem_budget_bytes()),
        cost_estimate=pl.CostEstimate(
            flops=2 * M * K * N,
            transcendentals=0,
            bytes_accessed=bytes_accessed),
    )(*args)
    return out


# ----------------------------------------------------------------------------
# Conv3d (channels-last, bf16) = cheap patch build + fused GEMM
# ----------------------------------------------------------------------------
def _im2col(x, kdims, stride, padding):
    """x: (B, T, H, W, C) bf16 -> ((M, K) patches, output dims).

    K ordering is (kt, kh, kw, C) with C minor; 1x1x1 convs are pure slicing.
    """
    kt, kh, kw = kdims
    st, sh, sw = stride
    pt, ph, pw = padding
    B, T, H, W, C = x.shape
    To = (T + 2 * pt - kt) // st + 1
    Ho = (H + 2 * ph - kh) // sh + 1
    Wo = (W + 2 * pw - kw) // sw + 1

    if kdims == (1, 1, 1) and padding == (0, 0, 0):
        p = x[:, :To * st:st, :Ho * sh:sh, :Wo * sw:sw, :]
        return p.reshape(B * To * Ho * Wo, C), (B, To, Ho, Wo)

    xp = x
    if (pt, ph, pw) != (0, 0, 0):
        xp = jnp.pad(x, ((0, 0), (pt, pt), (ph, ph), (pw, pw), (0, 0)))
    taps = []
    for it in range(kt):
        for ih in range(kh):
            for iw in range(kw):
                taps.append(xp[:, it:it + To * st:st,
                               ih:ih + Ho * sh:sh,
                               iw:iw + Wo * sw:sw, :])
    p = taps[0] if len(taps) == 1 else jnp.concatenate(taps, axis=-1)
    return p.reshape(B * To * Ho * Wo, kt * kh * kw * C), (B, To, Ho, Wo)


def conv_act(x, p, kdims, stride, padding, residual=None, relu=False):
    """Conv3d (no bias, BN pre-folded into p) + optional residual + ReLU."""
    a, (B, To, Ho, Wo) = _im2col(x, kdims, stride, padding)
    N = p['w'].shape[1]
    r = residual.reshape(-1, N) if residual is not None else None
    out = fused_gemm(a, p['w'], p['b'], residual=r, relu=relu)
    return out.reshape(B, To, Ho, Wo, N)


# ----------------------------------------------------------------------------
# Small glue ops (channels-last, bf16)
# ----------------------------------------------------------------------------
def maxpool3d_133(x):
    """MaxPool3d(kernel=(1,3,3), stride=(1,2,2), padding=(0,1,1))."""
    B, T, H, W, C = x.shape
    xp = jnp.pad(x, ((0, 0), (0, 0), (1, 1), (1, 1), (0, 0)),
                 constant_values=-jnp.inf)
    Ho = (H + 2 - 3) // 2 + 1
    Wo = (W + 2 - 3) // 2 + 1
    out = None
    for ih in range(3):
        for iw in range(3):
            s = xp[:, :, ih:ih + Ho * 2:2, iw:iw + Wo * 2:2, :]
            out = s if out is None else jnp.maximum(out, s)
    return out


# ----------------------------------------------------------------------------
# Parameter construction (deterministic, mirrors the PyTorch __init__);
# BN scale is folded into the bf16 weights here (fold done in f32).
# ----------------------------------------------------------------------------
def build_params(key, class_num=10):
    keys = iter(jax.random.split(key, 256))

    def bn_fold(c, eps=1e-5):
        gamma = jnp.ones((c,), jnp.float32)
        beta = jnp.zeros((c,), jnp.float32)
        mean = jnp.zeros((c,), jnp.float32)
        var = jnp.ones((c,), jnp.float32)
        scale = gamma / jnp.sqrt(var + eps)
        shift = beta - mean * scale
        return scale, shift

    def conv(cin, cout, kdims, bn=True):
        kt, kh, kw = kdims
        w = jax.random.normal(next(keys), (kt * kh * kw * cin, cout),
                              jnp.float32) * 0.02
        if bn:
            scale, shift = bn_fold(cout)
            w = w * scale[None, :]                 # fold BN scale (f32)
        else:
            shift = jnp.zeros((cout,), jnp.float32)
        return {'w': w.astype(jnp.bfloat16), 'b': shift}

    def make_block(in_p, planes, stride, head_conv):
        blk = {}
        if head_conv == 1:
            blk['conv1'] = conv(in_p, planes, (1, 1, 1))
        elif head_conv == 3:
            blk['conv1'] = conv(in_p, planes, (3, 1, 1))
        else:
            raise ValueError('Unsupported head_conv!')
        blk['conv2'] = conv(planes, planes, (1, 3, 3))
        if stride != 1 or in_p != planes:
            blk['ds'] = conv(in_p, planes, (1, 1, 1))
        else:
            blk['ds'] = None
        return blk, {'stride': stride, 'head_conv': head_conv}

    def make_layer(in_p, planes, blocks, stride, head_conv):
        ws, cs = [], []
        w, c = make_block(in_p, planes, stride, head_conv)
        ws.append(w); cs.append(c)
        for _ in range(1, blocks):
            w, c = make_block(planes, planes, 1, head_conv)
            ws.append(w); cs.append(c)
        return ws, cs

    layers = (3, 4, 6, 3)
    weights, cfg = {}, {}

    # fast pathway
    weights['fast_conv1'] = conv(3, 8, (5, 7, 7))
    weights['fast_res2'], cfg['fast_res2'] = make_layer(8, 8, layers[0], 1, 3)
    weights['fast_res3'], cfg['fast_res3'] = make_layer(8, 16, layers[1], 2, 3)
    weights['fast_res4'], cfg['fast_res4'] = make_layer(16, 32, layers[2], 2, 3)
    weights['fast_res5'], cfg['fast_res5'] = make_layer(32, 64, layers[3], 2, 3)
    weights['lateral_p1'] = conv(8, 16, (5, 1, 1), bn=False)
    weights['lateral_res2'] = conv(8, 16, (5, 1, 1), bn=False)
    weights['lateral_res3'] = conv(16, 32, (5, 1, 1), bn=False)
    weights['lateral_res4'] = conv(32, 64, (5, 1, 1), bn=False)

    # slow pathway
    weights['slow_conv1'] = conv(3, 64, (1, 7, 7))
    si = 64 + 64 // 8 * 2                      # 80
    weights['slow_res2'], cfg['slow_res2'] = make_layer(si, 64, layers[0], 1, 1)
    si = 64 + 64 // 8 * 2                      # 80
    weights['slow_res3'], cfg['slow_res3'] = make_layer(si, 128, layers[1], 2, 1)
    si = 128 + 128 // 8 * 2                    # 160
    weights['slow_res4'], cfg['slow_res4'] = make_layer(si, 256, layers[2], 2, 3)
    si = 256 + 256 // 8 * 2                    # 320
    weights['slow_res5'], cfg['slow_res5'] = make_layer(si, 512, layers[3], 2, 3)

    # fc: Linear(64 + 512, class_num, bias=False); stored as (in, out) f32
    weights['fc'] = jax.random.normal(next(keys), (64 + 512, class_num),
                                      jnp.float32) * 0.02
    return weights, cfg


# ----------------------------------------------------------------------------
# Forward pass
# ----------------------------------------------------------------------------
def block_fwd(x, blk, c):
    stride, hc = c['stride'], c['head_conv']
    if hc == 1:
        out = conv_act(x, blk['conv1'], (1, 1, 1), (1, 1, 1), (0, 0, 0),
                       relu=True)
    else:
        out = conv_act(x, blk['conv1'], (3, 1, 1), (1, 1, 1), (1, 0, 0),
                       relu=True)
    if blk['ds'] is not None:
        residual = conv_act(x, blk['ds'], (1, 1, 1), (1, stride, stride),
                            (0, 0, 0))
    else:
        residual = x
    # conv2 + bn2 + residual add + relu fused into one GEMM epilogue
    return conv_act(out, blk['conv2'], (1, 3, 3), (1, stride, stride),
                    (0, 1, 1), residual=residual, relu=True)


def layer_fwd(x, ws, cs):
    for w, c in zip(ws, cs):
        x = block_fwd(x, w, c)
    return x


def fast_path(wt, cfg, x):
    x = conv_act(x, wt['fast_conv1'], (5, 7, 7), (1, 2, 2), (2, 3, 3),
                 relu=True)
    pool1 = maxpool3d_133(x)
    lateral = [conv_act(pool1, wt['lateral_p1'], (5, 1, 1), (8, 1, 1),
                        (2, 0, 0))]
    res2 = layer_fwd(pool1, wt['fast_res2'], cfg['fast_res2'])
    lateral.append(conv_act(res2, wt['lateral_res2'], (5, 1, 1), (8, 1, 1),
                            (2, 0, 0)))
    res3 = layer_fwd(res2, wt['fast_res3'], cfg['fast_res3'])
    lateral.append(conv_act(res3, wt['lateral_res3'], (5, 1, 1), (8, 1, 1),
                            (2, 0, 0)))
    res4 = layer_fwd(res3, wt['fast_res4'], cfg['fast_res4'])
    lateral.append(conv_act(res4, wt['lateral_res4'], (5, 1, 1), (8, 1, 1),
                            (2, 0, 0)))
    res5 = layer_fwd(res4, wt['fast_res5'], cfg['fast_res5'])
    feat = jnp.mean(res5.astype(jnp.float32), axis=(1, 2, 3))   # AvgPool3d(1)
    return feat, lateral


def slow_path(wt, cfg, x, lateral):
    x = conv_act(x, wt['slow_conv1'], (1, 7, 7), (1, 2, 2), (0, 3, 3),
                 relu=True)
    x = maxpool3d_133(x)
    x = jnp.concatenate([x, lateral[0]], axis=-1)
    x = layer_fwd(x, wt['slow_res2'], cfg['slow_res2'])
    x = jnp.concatenate([x, lateral[1]], axis=-1)
    x = layer_fwd(x, wt['slow_res3'], cfg['slow_res3'])
    x = jnp.concatenate([x, lateral[2]], axis=-1)
    x = layer_fwd(x, wt['slow_res4'], cfg['slow_res4'])
    x = jnp.concatenate([x, lateral[3]], axis=-1)
    x = layer_fwd(x, wt['slow_res5'], cfg['slow_res5'])
    return jnp.mean(x.astype(jnp.float32), axis=(1, 2, 3))      # AvgPool3d(1)


def slowfast_forward(wt, x, cfg):
    # x: (B, C, T, H, W) like PyTorch; channels-last + bf16 ONCE, up front.
    x = jnp.transpose(x, (0, 2, 3, 4, 1)).astype(jnp.bfloat16)  # (B,T,H,W,C)
    fast, lateral = fast_path(wt, cfg, x[:, ::2])
    slow = slow_path(wt, cfg, x[:, ::16], lateral)
    feat = jnp.concatenate([slow, fast], axis=1)
    # Dropout(p=0.5) is identity in inference mode.
    # Final FC is a tiny 2 x 576 x 10 GEMM -> plain jnp.dot.
    logits = jnp.dot(feat, wt['fc'], preferred_element_type=jnp.float32)
    return logits


# ----------------------------------------------------------------------------
if __name__ == "__main__":
    key = jax.random.PRNGKey(0)
    wkey, xkey = jax.random.split(key)

    weights, cfg = build_params(wkey, class_num=10)

    # Input video clip: (B, C, T, H, W). T=32 so the fast path sees 16 frames
    # and the slow path sees 2 frames (stride-8 temporal laterals then match).
    x = jax.random.normal(xkey, (2, 3, 32, 16, 16), jnp.float32)

    fwd = jax.jit(functools.partial(slowfast_forward, cfg=cfg))
    out = jax.block_until_ready(fwd(weights, x))

    assert out.shape == (2, 10), out.shape
    assert jnp.all(jnp.isfinite(out))
    print("KERNEL_OK")
</pallas_src>

<mosaic_0001>
module attributes {stable_mosaic.version = 11 : i64} {
  func.func @_gemm_shift_act_kernel(%arg0: i32, %arg1: memref<128x147xbf16, #tpu.memory_space<vmem>>, %arg2: memref<147x64xbf16, #tpu.memory_space<vmem>>, %arg3: memref<1x64xf32, #tpu.memory_space<vmem>>, %arg4: memref<128x64xbf16, #tpu.memory_space<vmem>>) attributes {dimension_semantics = [#tpu.dimension_semantics<parallel>], iteration_bounds = array<i64: 2>, scalar_prefetch = 0 : i64, scratch_operands = 0 : i64, tpu.core_type = #tpu.core_type<tc>, window_params = [{transform_indices = @transform_0, window_bounds = array<i64: 128, 147>}, {pipeline_mode = #tpu.pipeline_mode<synchronous>, transform_indices = @transform_1, window_bounds = array<i64: 147, 64>}, {pipeline_mode = #tpu.pipeline_mode<synchronous>, transform_indices = @transform_2, window_bounds = array<i64: 1, 64>}, {transform_indices = @transform_3, window_bounds = array<i64: 128, 64>}]} {
    %c0 = arith.constant 0 : index
    %c0_0 = arith.constant 0 : index
    %0 = vector.load %arg1[%c0, %c0_0] : memref<128x147xbf16, #tpu.memory_space<vmem>>, vector<128x147xbf16>
    %c0_1 = arith.constant 0 : index
    %c0_2 = arith.constant 0 : index
    %1 = vector.load %arg2[%c0_1, %c0_2] : memref<147x64xbf16, #tpu.memory_space<vmem>>, vector<147x64xbf16>
    %cst = arith.constant dense<0.000000e+00> : vector<128x64xf32>
    %2 = tpu.matmul %0, %1, %cst {dimension_numbers = #tpu.dot_dimension_numbers<[1], [0], [0], [1], [0, 0, 1, 1], [], []>} : vector<128x147xbf16>, vector<147x64xbf16>, vector<128x64xf32> -> vector<128x64xf32>
    %c0_3 = arith.constant 0 : index
    %c0_4 = arith.constant 0 : index
    %3 = vector.load %arg3[%c0_3, %c0_4] : memref<1x64xf32, #tpu.memory_space<vmem>>, vector<1x64xf32>
    %4 = vector.broadcast %3 : vector<1x64xf32> to vector<128x64xf32>
    %5 = arith.addf %2, %4 : vector<128x64xf32>
    %cst_5 = arith.constant 0.000000e+00 : f32
    %6 = vector.broadcast %cst_5 : f32 to vector<128x64xf32>
    %7 = arith.maximumf %5, %6 : vector<128x64xf32>
    %8 = arith.truncf %7 : vector<128x64xf32> to vector<128x64xbf16>
    %c0_6 = arith.constant 0 : index
    %c0_7 = arith.constant 0 : index
    %9 = vector.load %arg4[%c0_6, %c0_7] : memref<128x64xbf16, #tpu.memory_space<vmem>>, vector<128x64xbf16>
    tpu.vector_store %arg4[%c0_6, %c0_7], %8 {strides = array<i32>} : memref<128x64xbf16, #tpu.memory_space<vmem>>, vector<128x64xbf16>,
    return
  }
  func.func @transform_0(%arg0: i32) -> (i32, i32) {
    %c0_i32 = arith.constant 0 : i32
    %c0_i32_0 = arith.constant 0 : i32
    return %arg0, %c0_i32 : i32, i32
  }
  func.func @transform_1(%arg0: i32) -> (i32, i32) {
    %c0_i32 = arith.constant 0 : i32
    %c0_i32_0 = arith.constant 0 : i32
    %c0_i32_1 = arith.constant 0 : i32
    return %c0_i32, %c0_i32_0 : i32, i32
  }
  func.func @transform_2(%arg0: i32) -> (i32, i32) {
    %c0_i32 = arith.constant 0 : i32
    %c0_i32_0 = arith.constant 0 : i32
    %c0_i32_1 = arith.constant 0 : i32
    return %c0_i32, %c0_i32_0 : i32, i32
  }
  func.func @transform_3(%arg0: i32) -> (i32, i32) {
    %c0_i32 = arith.constant 0 : i32
    %c0_i32_0 = arith.constant 0 : i32
    return %arg0, %c0_i32 : i32, i32
  }
}

module attributes {stable_mosaic.version = 11 : i64} {
  func.func @_gemm_shift_act_kernel(%arg0: i32, %arg1: memref<512x735xbf16, #tpu.memory_space<vmem>>, %arg2: memref<735x8xbf16, #tpu.memory_space<vmem>>, %arg3: memref<1x8xf32, #tpu.memory_space<vmem>>, %arg4: memref<512x8xbf16, #tpu.memory_space<vmem>>) attributes {dimension_semantics = [#tpu.dimension_semantics<parallel>], iteration_bounds = array<i64: 4>, scalar_prefetch = 0 : i64, scratch_operands = 0 : i64, tpu.core_type = #tpu.core_type<tc>, window_params = [{transform_indices = @transform_0, window_bounds = array<i64: 512, 735>}, {pipeline_mode = #tpu.pipeline_mode<synchronous>, transform_indices = @transform_1, window_bounds = array<i64: 735, 8>}, {pipeline_mode = #tpu.pipeline_mode<synchronous>, transform_indices = @transform_2, window_bounds = array<i64: 1, 8>}, {transform_indices = @transform_3, window_bounds = array<i64: 512, 8>}]} {
    %c0 = arith.constant 0 : index
    %c0_0 = arith.constant 0 : index
    %0 = vector.load %arg1[%c0, %c0_0] : memref<512x735xbf16, #tpu.memory_space<vmem>>, vector<512x735xbf16>
    %c0_1 = arith.constant 0 : index
    %c0_2 = arith.constant 0 : index
    %1 = vector.load %arg2[%c0_1, %c0_2] : memref<735x8xbf16, #tpu.memory_space<vmem>>, vector<735x8xbf16>
    %cst = arith.constant dense<0.000000e+00> : vector<512x8xf32>
    %2 = tpu.matmul %0, %1, %cst {dimension_numbers = #tpu.dot_dimension_numbers<[1], [0], [0], [1], [0, 0, 1, 1], [], []>} : vector<512x735xbf16>, vector<735x8xbf16>, vector<512x8xf32> -> vector<512x8xf32>
    %c0_3 = arith.constant 0 : index
    %c0_4 = arith.constant 0 : index
    %3 = vector.load %arg3[%c0_3, %c0_4] : memref<1x8xf32, #tpu.memory_space<vmem>>, vector<1x8xf32>
    %4 = vector.broadcast %3 : vector<1x8xf32> to vector<512x8xf32>
    %5 = arith.addf %2, %4 : vector<512x8xf32>
    %cst_5 = arith.constant 0.000000e+00 : f32
    %6 = vector.broadcast %cst_5 : f32 to vector<512x8xf32>
    %7 = arith.maximumf %5, %6 : vector<512x8xf32>
    %8 = arith.truncf %7 : vector<512x8xf32> to vector<512x8xbf16>
    %c0_6 = arith.constant 0 : index
    %c0_7 = arith.constant 0 : index
    %9 = vector.load %arg4[%c0_6, %c0_7] : memref<512x8xbf16, #tpu.memory_space<vmem>>, vector<512x8xbf16>
    tpu.vector_store %arg4[%c0_6, %c0_7], %8 {strides = array<i32>} : memref<512x8xbf16, #tpu.memory_space<vmem>>, vector<512x8xbf16>,
    return
  }
  func.func @transform_0(%arg0: i32) -> (i32, i32) {
    %c0_i32 = arith.constant 0 : i32
    %c0_i32_0 = arith.constant 0 : i32
    return %arg0, %c0_i32 : i32, i32
  }
  func.func @transform_1(%arg0: i32) -> (i32, i32) {
    %c0_i32 = arith.constant 0 : i32
    %c0_i32_0 = arith.constant 0 : i32
    %c0_i32_1 = arith.constant 0 : i32
    return %c0_i32, %c0_i32_0 : i32, i32
  }
  func.func @transform_2(%arg0: i32) -> (i32, i32) {
    %c0_i32 = arith.constant 0 : i32
    %c0_i32_0 = arith.constant 0 : i32
    %c0_i32_1 = arith.constant 0 : i32
    return %c0_i32, %c0_i32_0 : i32, i32
  }
  func.func @transform_3(%arg0: i32) -> (i32, i32) {
    %c0_i32 = arith.constant 0 : i32
    %c0_i32_0 = arith.constant 0 : i32
    return %arg0, %c0_i32 : i32, i32
  }
}

</mosaic_0001>

<llo_original>
// kernel: slowfast_forward.3
$region0: #{slowfast_forward.3}
  #allocation0 [shape = 'u32[]', space=smem, size = 0x4, offset = 0x4, fixed_abs, tag = 'smem constant byte address 0x4 - core index']
  #allocation1 [shape = 'u32[144,128]{1,0:T(1,128)}', space=vmem, size = 0x12000, scoped, tag = 'internal scratch']
  %s0 = inlined_call_operand.vmem [shape: bf16[256,147], index: 0, kind: input, shape index: {}]
  %s1 = inlined_call_operand.vmem [shape: bf16[147,64], index: 1, kind: input, shape index: {}]
  %s2 = inlined_call_operand.vmem [shape: f32[1,64], index: 2, kind: input, shape index: {}]
  %s3 = inlined_call_operand.vmem [shape: bf16[256,64], index: 3, kind: output, shape index: {}]
  %s4 = sld [smem:[#allocation0]]
  $region45: #{slowfast_forward.3} parent=0
    _
  %s6 = ssub.s32 1, %s4
  %s7 = scalar_select 0, %s6, %s4
  loop: start=0, step=1, limit=4
  $region2: #{slowfast_forward.3} parent=0 // loop_pre_header
    _
  $region3: #{slowfast_forward.3} parent=0 // loop_header
    %s9 = sphi 0, %s13
    %p10 = scmp.ge.s32.totalorder %s9, 4
    %s19 = sphi 0, %s21
    %s22 = sphi 0, %s19
    %s23 = sphi 0, %s22
    %s39 = sphi 0, %s23
    %s43 = sphi 0, %s43
    %s45 = sphi 0, %s43
    %s46 = sphi 0, %s45
    %s60 = sphi 0, %s46
    %s64 = sphi 0, %s64
    %s66 = sphi 0, %s64
    %s67 = sphi 0, %s66
    %s81 = sphi 0, %s67
    %s87 = sphi 0, %s89
    %s90 = sphi 0, %s87
    %s91 = sphi 0, %s90
    %s107 = sphi 0, %s91
  $region4: #{slowfast_forward.3} parent=0 // loop_header_branch
    %12 = sbr.rel (%p10) target = $region8
  $region5: #{slowfast_forward.3} parent=0 // loop_body
    %s14 = ssub.s32 %s9, 1
    %s15 = ssub.s32 %s9, 2
    %s16 = sadd.s32 %s9, 1
    %s17 = ssub.s32 %s9, %s16
    %p18 = scmp.eq.s32.totalorder %s17, 0
    %s20 = sadd.s32 %s19, 1
    %s21 = scalar_select %p18, %s19, %s20
    %p24 = pneg %p18
    %p25 = scmp.eq.s32.totalorder %s9, 1
    %p26 = por %p24, %p25
    %p27 = scmp.ne.s32.totalorder %s19, %s22
    %p28 = scmp.eq.s32.totalorder %s9, 0
    %p29 = por %p27, %p28
    %p30 = scmp.ne.s32.totalorder %s19, %s22
    %p31 = scmp.eq.s32.totalorder %s14, 1
    %p32 = por %p30, %p31
    %p33 = scmp.ne.s32.totalorder %s22, %s23
    %p34 = scmp.eq.s32.totalorder %s14, 0
    %p35 = por %p33, %p34
    %p36 = scmp.ne.s32.totalorder %s22, %s23
    %p37 = scmp.eq.s32.totalorder %s15, 1
    %p38 = por %p36, %p37
    %p40 = scmp.ne.s32.totalorder %s23, %s39
    %p41 = scmp.eq.s32.totalorder %s15, 0
    %p42 = por %p40, %p41
    %s44 = sadd.s32 %s43, 1
    %p47 = scmp.eq.s32.totalorder %s9, 1
    %p48 = scmp.ne.s32.totalorder %s43, %s45
    %p49 = scmp.eq.s32.totalorder %s9, 0
    %p50 = por %p48, %p49
    %p51 = scmp.ne.s32.totalorder %s43, %s45
    %p52 = scmp.eq.s32.totalorder %s14, 1
    %p53 = por %p51, %p52
    %p54 = scmp.ne.s32.totalorder %s45, %s46
    %p55 = scmp.eq.s32.totalorder %s14, 0
    %p56 = por %p54, %p55
    %p57 = scmp.ne.s32.totalorder %s45, %s46
    %p58 = scmp.eq.s32.totalorder %s15, 1
    %p59 = por %p57, %p58
    %p61 = scmp.ne.s32.totalorder %s46, %s60
    %p62 = scmp.eq.s32.totalorder %s15, 0
    %p63 = por %p61, %p62
    %s65 = sadd.s32 %s64, 1
    %p68 = scmp.eq.s32.totalorder %s9, 1
    %p69 = scmp.ne.s32.totalorder %s64, %s66
    %p70 = scmp.eq.s32.totalorder %s9, 0
    %p71 = por %p69, %p70
    %p72 = scmp.ne.s32.totalorder %s64, %s66
    %p73 = scmp.eq.s32.totalorder %s14, 1
    %p74 = por %p72, %p73
    %p75 = scmp.ne.s32.totalorder %s66, %s67
    %p76 = scmp.eq.s32.totalorder %s14, 0
    %p77 = por %p75, %p76
    %p78 = scmp.ne.s32.totalorder %s66, %s67
    %p79 = scmp.eq.s32.totalorder %s15, 1
    %p80 = por %p78, %p79
    %p82 = scmp.ne.s32.totalorder %s67, %s81
    %p83 = scmp.eq.s32.totalorder %s15, 0
    %p84 = por %p82, %p83
    %s85 = ssub.s32 %s9, %s16
    %p86 = scmp.eq.s32.totalorder %s85, 0
    %s88 = sadd.s32 %s87, 1
    %s89 = scalar_select %p86, %s87, %s88
    %p92 = pneg %p86
    %p93 = scmp.eq.s32.totalorder %s9, 1
    %p94 = por %p92, %p93
    %p95 = scmp.ne.s32.totalorder %s87, %s90
    %p96 = scmp.eq.s32.totalorder %s9, 0
    %p97 = por %p95, %p96
    %p98 = scmp.ne.s32.totalorder %s87, %s90
    %p99 = scmp.eq.s32.totalorder %s14, 1
    %p100 = por %p98, %p99
    %p101 = scmp.ne.s32.totalorder %s90, %s91
    %p102 = scmp.eq.s32.totalorder %s14, 0
    %p103 = por %p101, %p102
    %p104 = scmp.ne.s32.totalorder %s90, %s91
    %p105 = scmp.eq.s32.totalorder %s15, 1
    %p106 = por %p104, %p105
    %p108 = scmp.ne.s32.totalorder %s91, %s107
    %p109 = scmp.eq.s32.totalorder %s15, 0
    %p110 = por %p108, %p109
    %p111 = scmp.le.s32.totalorder 1, %s9
    %p112 = scmp.lt.s32.totalorder %s9, 3
    %p113 = pnand %p111, %p112
    %p114 = pneg %p113
    // Predicated region
    $region9: #{slowfast_forward.3} parent=5 // pred_check
      _
    $region10: #{slowfast_forward.3} parent=5 // pred_check_branch
      %116 = sbr.rel (%p113) target = $region12
    $region11: #{slowfast_forward.3} parent=5 // pred_region
      %s117 = ssub.s32 %s9, 1
      // Predicated region
      $region13: #{slowfast_forward.3} parent=11 // pred_check
        %p118 = pneg %p56
      $region14: #{slowfast_forward.3} parent=11 // pred_check_branch
        %120 = sbr.rel (%p118) target = $region16
      $region15: #{slowfast_forward.3} parent=11 // pred_region
        _
      $region16: #{slowfast_forward.3} parent=11 // pred_fallthru
        _
      // Predicated region
      $region17: #{slowfast_forward.3} parent=11 // pred_check
        %p121 = pneg %p77
      $region18: #{slowfast_forward.3} parent=11 // pred_check_branch
        %123 = sbr.rel (%p121) target = $region20
      $region19: #{slowfast_forward.3} parent=11 // pred_region
        _
      $region20: #{slowfast_forward.3} parent=11 // pred_fallthru
        _
    $region12: #{slowfast_forward.3} parent=5 // pred_fallthru
      _
    %p124 = scmp.lt.s32.totalorder %s9, 2
    // Predicated region
    $region21: #{slowfast_forward.3} parent=5 // pred_check
      %p125 = pneg %p124
    $region22: #{slowfast_forward.3} parent=5 // pred_check_branch
      %127 = sbr.rel (%p125) target = $region24
    $region23: #{slowfast_forward.3} parent=5 // pred_region
      // Predicated region
      $region25: #{slowfast_forward.3} parent=23 // pred_check
        %p128 = pneg %p29
      $region26: #{slowfast_forward.3} parent=23 // pred_check_branch
        %130 = sbr.rel (%p128) target = $region28
      $region27: #{slowfast_forward.3} parent=23 // pred_region
        %s131 = smul.u32 16, %s9
        %p132 = scmp.lt.s32.totalorder %s131, 31
        %s133 = scalar_select %p132, %s131, 31
        %s134 = smul.addr %s133, 2
        %s135 = smul.addr %s134, 4
        %s136 = scalar_lea.vmem %s0, %s135
        %s137 = smul.u32 16, %s9
      $region28: #{slowfast_forward.3} parent=23 // pred_fallthru
        _
    $region24: #{slowfast_forward.3} parent=5 // pred_fallthru
      _
    %p138 = scmp.le.s32.totalorder 1, %s9
    %p139 = scmp.lt.s32.totalorder %s9, 3
    %p140 = pnand %p138, %p139
    %p141 = pneg %p140
    // Predicated region
    $region29: #{slowfast_forward.3} parent=5 // pred_check
      _
    $region30: #{slowfast_forward.3} parent=5 // pred_check_branch
      %143 = sbr.rel (%p140) target = $region32
    $region31: #{slowfast_forward.3} parent=5 // pred_region
      %s144 = ssub.s32 %s9, 1
      %s145 = smul.u32 16, %s14
      %p146 = scmp.lt.s32.totalorder %s145, 31
      %s147 = scalar_select %p146, %s145, 31
      %s148 = smul.addr %s147, 2
      %s149 = smul.addr %s148, 4
      %s150 = scalar_lea.vmem %s0, %s149
      %p151 = pneg %p35
      %p152 = pneg %p32
      %p153 = pneg %p56
      %p154 = pneg %p53
      %p155 = pneg %p77
      %p156 = pneg %p74
      %p157 = pneg %p103
      %p158 = pneg %p100
      %s159 = smul.u32 16, %s14
      %p160 = scmp.lt.s32.totalorder %s159, 31
      %s161 = scalar_select %p160, %s159, 31
      %s162 = smul.addr %s161, 4
      %s163 = scalar_lea.vmem %s3, %s162
      %s164 = smul.u32 16, %s14
      %p165 = scmp.lt.s32.totalorder %s164, 31
      %s166 = scalar_select %p165, %s164, 31
      %s167 = smul.addr %s166, 2
      %s168 = smul.addr %s167, 4
      %s169 = scalar_lea.vmem %s0, %s168
      %s170 = smul.u32 16, %s14
      %s171 = smul.u32 16, %s14
      %p172 = scmp.lt.s32.totalorder %s171, 31
      %s173 = scalar_select %p172, %s171, 31
      %s174 = smul.addr %s173, 4
      %s175 = scalar_lea.vmem %s3, %s174
      %s176 = smul.u32 16, %s14
      %v178 = vld [vmem:[%s169] sm:$0xff]
      %v179 = vld [vmem:[%s169 + $0x8] sm:$0xff]
      %v180 = vld [vmem:[%s169 + $0x10] sm:$0xff]
      %v181 = vld [vmem:[%s169 + $0x18] sm:$0xff]
      %v182 = vld [vmem:[%s169 + $0x20] sm:$0xff]
      %v183 = vld [vmem:[%s169 + $0x28] sm:$0xff]
      %v184 = vld [vmem:[%s169 + $0x30] sm:$0xff]
      %v185 = vld [vmem:[%s169 + $0x38] sm:$0xff]
      %v186 = vld [vmem:[%s169 + $0x40] sm:$0xff]
      %v187 = vld [vmem:[%s169 + $0x48] sm:$0xff]
      %v188 = vld [vmem:[%s169 + $0x50] sm:$0xff]
      %v189 = vld [vmem:[%s169 + $0x58] sm:$0xff]
      %v190 = vld [vmem:[%s169 + $0x60] sm:$0xff]
      %v191 = vld [vmem:[%s169 + $0x68] sm:$0xff]
      %v192 = vld [vmem:[%s169 + $0x70] sm:$0xff]
      %v193 = vld [vmem:[%s169 + $0x78] sm:$0xff]
      %v194 = vld [vmem:[%s1] sm:$0xf]
      %v195 = vld [vmem:[%s1 + $0x4] sm:$0xf]
      %v196 = vld [vmem:[%s1 + $0x8] sm:$0xf]
      %v197 = vld [vmem:[%s1 + $0xc] sm:$0xf]
      %v198 = vld [vmem:[%s1 + $0x10] sm:$0xf]
      %v199 = vld [vmem:[%s1 + $0x14] sm:$0xf]
      %v200 = vld [vmem:[%s1 + $0x18] sm:$0xf]
      %v201 = vld [vmem:[%s1 + $0x1c] sm:$0xf]
      %v202 = vld [vmem:[%s1 + $0x20] sm:$0xf]
      %v203 = vld [vmem:[%s1 + $0x24] sm:$0xf]
      %v204 = vld [vmem:[%s1 + $0x28] sm:$0xf]
      %v205 = vld [vmem:[%s1 + $0x2c] sm:$0xf]
      %v206 = vld [vmem:[%s1 + $0x30] sm:$0xf]
      %v207 = vld [vmem:[%s1 + $0x34] sm:$0xf]
      %v208 = vld [vmem:[%s1 + $0x38] sm:$0xf]
      %v209 = vld [vmem:[%s1 + $0x3c] sm:$0xf]
      %v210 = vld [vmem:[%s1 + $0x40] sm:$0xf]
      %v211 = vld [vmem:[%s1 + $0x44] sm:$0xf]
      %v212 = vld [vmem:[%s1 + $0x48] sm:$0x3]
      %v213 = vld [vmem:[%s2] sm:$0x1]
      %v215 = vlaneseq
      %v216 = vshrl.u32 %v215, 7
      %v217 = vsub.s32 0, %v216
      %v218 = vrot.slane %v213, %v217
      %v236 = vunpack.c.l.b16 %v178
      %v237 = vunpack.c.h.b16 %v178
      %v238 = vunpack.c.l.b16 %v179
      %v239 = vunpack.c.h.b16 %v179
      %v240 = vunpack.c.l.b16 %v180
      %v241 = vunpack.c.h.b16 %v180
      %v242 = vunpack.c.l.b16 %v181
      %v243 = vunpack.c.h.b16 %v181
      %v244 = vunpack.c.l.b16 %v182
      %v245 = vunpack.c.h.b16 %v182
      %v246 = vunpack.c.l.b16 %v183
      %v247 = vunpack.c.h.b16 %v183
      %v248 = vunpack.c.l.b16 %v184
      %v249 = vunpack.c.h.b16 %v184
      %v250 = vunpack.c.l.b16 %v185
      %v251 = vunpack.c.h.b16 %v185
      %v252 = vunpack.c.l.b16 %v186
      %v253 = vunpack.c.h.b16 %v186
      %v254 = vunpack.c.l.b16 %v187
      %v255 = vunpack.c.h.b16 %v187
      %v256 = vunpack.c.l.b16 %v188
      %v257 = vunpack.c.h.b16 %v188
      %v258 = vunpack.c.l.b16 %v189
      %v259 = vunpack.c.h.b16 %v189
      %v260 = vunpack.c.l.b16 %v190
      %v261 = vunpack.c.h.b16 %v190
      %v262 = vunpack.c.l.b16 %v191
      %v263 = vunpack.c.h.b16 %v191
      %v264 = vunpack.c.l.b16 %v192
      %v265 = vunpack.c.h.b16 %v192
      %v266 = vunpack.c.l.b16 %v193
      %v267 = vunpack.c.h.b16 %v193
      %v268 = vpack.c.b16 %v238, %v236
      %v269 = vpack.c.b16 %v239, %v237
      %v270 = vpack.c.b16 %v242, %v240
      %v271 = vpack.c.b16 %v243, %v241
      %v272 = vpack.c.b16 %v246, %v244
      %v273 = vpack.c.b16 %v247, %v245
      %v274 = vpack.c.b16 %v250, %v248
      %v275 = vpack.c.b16 %v251, %v249
      %v276 = vpack.c.b16 %v254, %v252
      %v277 = vpack.c.b16 %v255, %v253
      %v278 = vpack.c.b16 %v258, %v256
      %v279 = vpack.c.b16 %v259, %v257
      %v280 = vpack.c.b16 %v262, %v260
      %v281 = vpack.c.b16 %v263, %v261
      %v282 = vpack.c.b16 %v266, %v264
      %v283 = vpack.c.b16 %v267, %v265
      %v311 = vunpack.c.l.b16 %v194
      %v312 = vunpack.c.l.b16 %v195
      %v313 = vunpack.c.l.b16 %v196
      %v314 = vunpack.c.l.b16 %v197
      %v315 = vunpack.c.l.b16 %v198
      %v316 = vunpack.c.l.b16 %v199
      %v317 = vunpack.c.l.b16 %v200
      %v318 = vunpack.c.l.b16 %v201
      %v319 = vunpack.c.l.b16 %v202
      %v320 = vunpack.c.l.b16 %v203
      %v321 = vunpack.c.l.b16 %v204
      %v322 = vunpack.c.l.b16 %v205
      %v323 = vunpack.c.l.b16 %v206
      %v324 = vunpack.c.l.b16 %v207
      %v325 = vunpack.c.l.b16 %v208
      %v326 = vunpack.c.l.b16 %v209
      %v327 = vunpack.c.l.b16 %v210
      %v328 = vunpack.c.l.b16 %v211
      %v329 = vunpack.c.l.b16 %v212
      %v330 = vpack.c.b16 %v312, %v311
      %v331 = vpack.c.b16 %v314, %v313
      %v332 = vpack.c.b16 %v316, %v315
      %v333 = vpack.c.b16 %v318, %v317
      %v334 = vpack.c.b16 %v320, %v319
      %v335 = vpack.c.b16 %v322, %v321
      %v336 = vpack.c.b16 %v324, %v323
      %v337 = vpack.c.b16 %v326, %v325
      %v338 = vpack.c.b16 %v328, %v327
      %v339 = vpack.c.b16 %v329, %v329
      %vm349 = vcmask 154624
      %v351 = vsel %vm349, %v269, 0
      %v354 = vsel %vm349, %v271, 0
      %v357 = vsel %vm349, %v273, 0
      %v360 = vsel %vm349, %v275, 0
      %v363 = vsel %vm349, %v277, 0
      %v366 = vsel %vm349, %v279, 0
      %v369 = vsel %vm349, %v281, 0
      %v372 = vsel %vm349, %v283, 0
      %vm374 = vcmask 1040384
      %vm375 = vcmask 1041408
      %v376 = vsel %vm374, 4294967295, 65535
      %v377 = vsel %vm375, %v376, 0
      %v379 = vand.u32 %v339, %v377
      %381 = vmatprep.subr.bf16.mxu0 0
      %382 = vmatpush1.bf16.msra.mxu0 %v330
      %383 = vmatprep.subr.bf16.mxu0 0
      %384 = vmatpush1.bf16.msra.mxu0 %v331
      %385 = vmatprep.subr.bf16.mxu0 0
      %386 = vmatpush1.bf16.msra.mxu0 %v332
      %387 = vmatprep.subr.bf16.mxu0 0
      %388 = vmatpush1.bf16.msra.mxu0 %v333
      %389 = vmatprep.subr.bf16.mxu0 0
      %390 = vmatpush1.bf16.msra.mxu0 %v334
      %391 = vmatprep.subr.bf16.mxu0 0
      %392 = vmatpush1.bf16.msra.mxu0 %v335
      %393 = vmatprep.subr.bf16.mxu0 0
      %394 = vmatpush1.bf16.msra.mxu0 %v336
      %395 = vmatprep.subr.bf16.mxu0 0
      %396 = vmatpush1.bf16.msra.mxu0 %v337
      %397 = vmatprep.subr.bf16.mxu0 0
      %398 = vmatpush1.bf16.msra.mxu0 %v338
      %399 = vmatprep.subr.bf16.mxu0 0
      %400 = vmatpush1.bf16.msra.mxu0 %v379
      %401 = vmatprep.subr.bf16.mxu0 0
      %402 = vmatpush1.bf16.msra.mxu0 0
      %403 = vmatprep.subr.bf16.mxu0 0
      %404 = vmatpush1.bf16.msra.mxu0 0
      %405 = vmatprep.subr.bf16.mxu0 0
      %406 = vmatpush1.bf16.msra.mxu0 0
      %407 = vmatprep.subr.bf16.mxu0 0
      %408 = vmatpush1.bf16.msra.mxu0 0
      %409 = vmatprep.subr.bf16.mxu0 0
      %410 = vmatpush1.bf16.msra.mxu0 0
      %411 = vmatprep.subr.bf16.mxu0 0
      %412 = vmatpush1.bf16.msra.mxu0 0
      %413 = vmatprep.mubr.bf16.mxu0 %v351
      %414 = vmatmul.mubr.bf16.gmra.mrb[0].mxu0 %v268
      %v415 = vpop.f32.mrb[0].mxu0
      %v416 = vadd.f32 %v218, %v415
      %v417 = vpop.f32.mrb[0].mxu0
      %v418 = vpop.f32.mrb[0].mxu0
      %v419 = vadd.f32 %v218, %v418
      %v420 = vpop.f32.mrb[0].mxu0
      %421 = vmatprep.mubr.bf16.mxu0 %v354
      %422 = vmatmul.mubr.bf16.gmra.mrb[0].mxu0 %v270
      %v423 = vpop.f32.mrb[0].mxu0
      %v424 = vadd.f32 %v218, %v423
      %v425 = vpop.f32.mrb[0].mxu0
      %v426 = vpop.f32.mrb[0].mxu0
      %v427 = vadd.f32 %v218, %v426
      %v428 = vpop.f32.mrb[0].mxu0
      %429 = vmatprep.mubr.bf16.mxu0 %v357
      %430 = vmatmul.mubr.bf16.gmra.mrb[0].mxu0 %v272
      %v431 = vpop.f32.mrb[0].mxu0
      %v432 = vadd.f32 %v218, %v431
      %v433 = vpop.f32.mrb[0].mxu0
      %v434 = vpop.f32.mrb[0].mxu0
      %v435 = vadd.f32 %v218, %v434
      %v436 = vpop.f32.mrb[0].mxu0
      %437 = vmatprep.mubr.bf16.mxu0 %v360
      %438 = vmatmul.mubr.bf16.gmra.mrb[0].mxu0 %v274
      %v439 = vpop.f32.mrb[0].mxu0
      %v440 = vadd.f32 %v218, %v439
      %v441 = vpop.f32.mrb[0].mxu0
      %v442 = vpop.f32.mrb[0].mxu0
      %v443 = vadd.f32 %v218, %v442
      %v444 = vpop.f32.mrb[0].mxu0
      %445 = vmatprep.mubr.bf16.mxu0 %v363
      %446 = vmatmul.mubr.bf16.gmra.mrb[0].mxu0 %v276
      %v447 = vpop.f32.mrb[0].mxu0
      %v448 = vadd.f32 %v218, %v447
      %v449 = vpop.f32.mrb[0].mxu0
      %v450 = vpop.f32.mrb[0].mxu0
      %v451 = vadd.f32 %v218, %v450
      %v452 = vpop.f32.mrb[0].mxu0
      %453 = vmatprep.mubr.bf16.mxu0 %v366
      %454 = vmatmul.mubr.bf16.gmra.mrb[0].mxu0 %v278
      %v455 = vpop.f32.mrb[0].mxu0
      %v456 = vadd.f32 %v218, %v455
      %v457 = vpop.f32.mrb[0].mxu0
      %v458 = vpop.f32.mrb[0].mxu0
      %v459 = vadd.f32 %v218, %v458
      %v460 = vpop.f32.mrb[0].mxu0
      %461 = vmatprep.mubr.bf16.mxu0 %v369
      %462 = vmatmul.mubr.bf16.gmra.mrb[0].mxu0 %v280
      %v463 = vpop.f32.mrb[0].mxu0
      %v464 = vadd.f32 %v218, %v463
      %v465 = vpop.f32.mrb[0].mxu0
      %v466 = vpop.f32.mrb[0].mxu0
      %v467 = vadd.f32 %v218, %v466
      %v468 = vpop.f32.mrb[0].mxu0
      %469 = vmatprep.mubr.bf16.mxu0 %v372
      %470 = vmatmul.mubr.bf16.gmra.mrb[0].mxu0 %v282
      %v471 = vpop.f32.mrb[0].mxu0
      %v472 = vadd.f32 %v218, %v471
      %v473 = vpop.f32.mrb[0].mxu0
      %v474 = vpop.f32.mrb[0].mxu0
      %v475 = vadd.f32 %v218, %v474
      %v476 = vpop.f32.mrb[0].mxu0
      %477 = vdwg.mxu0
      %v478 = vmax.f32 %v416, 0.0
      %v479 = vmax.f32 %v419, 0.0
      %v480 = vmax.f32 %v424, 0.0
      %v481 = vmax.f32 %v427, 0.0
      %v482 = vmax.f32 %v432, 0.0
      %v483 = vmax.f32 %v435, 0.0
      %v484 = vmax.f32 %v440, 0.0
      %v485 = vmax.f32 %v443, 0.0
      %v486 = vmax.f32 %v448, 0.0
      %v487 = vmax.f32 %v451, 0.0
      %v488 = vmax.f32 %v456, 0.0
      %v489 = vmax.f32 %v459, 0.0
      %v490 = vmax.f32 %v464, 0.0
      %v491 = vmax.f32 %v467, 0.0
      %v492 = vmax.f32 %v472, 0.0
      %v493 = vmax.f32 %v475, 0.0
      %v494 = vpack.c.bf16 %v479, %v478
      %v495 = vpack.c.bf16 %v481, %v480
      %v496 = vpack.c.bf16 %v483, %v482
      %v497 = vpack.c.bf16 %v485, %v484
      %v498 = vpack.c.bf16 %v487, %v486
      %v499 = vpack.c.bf16 %v489, %v488
      %v500 = vpack.c.bf16 %v491, %v490
      %v501 = vpack.c.bf16 %v493, %v492
      %v510 = vunpack.c.l.b16 %v494
      %v511 = vunpack.c.h.b16 %v494
      %v512 = vunpack.c.l.b16 %v495
      %v513 = vunpack.c.h.b16 %v495
      %v514 = vunpack.c.l.b16 %v496
      %v515 = vunpack.c.h.b16 %v496
      %v516 = vunpack.c.l.b16 %v497
      %v517 = vunpack.c.h.b16 %v497
      %v518 = vunpack.c.l.b16 %v498
      %v519 = vunpack.c.h.b16 %v498
      %v520 = vunpack.c.l.b16 %v499
      %v521 = vunpack.c.h.b16 %v499
      %v522 = vunpack.c.l.b16 %v500
      %v523 = vunpack.c.h.b16 %v500
      %v524 = vunpack.c.l.b16 %v501
      %v525 = vunpack.c.h.b16 %v501
      %v526 = vpack.c.b16 %v510, %v510
      %v527 = vpack.c.b16 %v511, %v511
      %v528 = vpack.c.b16 %v512, %v512
      %v529 = vpack.c.b16 %v513, %v513
      %v530 = vpack.c.b16 %v514, %v514
      %v531 = vpack.c.b16 %v515, %v515
      %v532 = vpack.c.b16 %v516, %v516
      %v533 = vpack.c.b16 %v517, %v517
      %v534 = vpack.c.b16 %v518, %v518
      %v535 = vpack.c.b16 %v519, %v519
      %v536 = vpack.c.b16 %v520, %v520
      %v537 = vpack.c.b16 %v521, %v521
      %v538 = vpack.c.b16 %v522, %v522
      %v539 = vpack.c.b16 %v523, %v523
      %v540 = vpack.c.b16 %v524, %v524
      %v541 = vpack.c.b16 %v525, %v525
      %vm558 = vcmask 519168
      %559 = vst.msk [vmem:[%s175] sm:$0xf] %vm558, %v526
      %560 = vst.msk [vmem:[%s175 + $0x4] sm:$0xf] %vm558, %v527
      %561 = vst.msk [vmem:[%s175 + $0x8] sm:$0xf] %vm558, %v528
      %562 = vst.msk [vmem:[%s175 + $0xc] sm:$0xf] %vm558, %v529
      %563 = vst.msk [vmem:[%s175 + $0x10] sm:$0xf] %vm558, %v530
      %564 = vst.msk [vmem:[%s175 + $0x14] sm:$0xf] %vm558, %v531
      %565 = vst.msk [vmem:[%s175 + $0x18] sm:$0xf] %vm558, %v532
      %566 = vst.msk [vmem:[%s175 + $0x1c] sm:$0xf] %vm558, %v533
      %567 = vst.msk [vmem:[%s175 + $0x20] sm:$0xf] %vm558, %v534
      %568 = vst.msk [vmem:[%s175 + $0x24] sm:$0xf] %vm558, %v535
      %569 = vst.msk [vmem:[%s175 + $0x28] sm:$0xf] %vm558, %v536
      %570 = vst.msk [vmem:[%s175 + $0x2c] sm:$0xf] %vm558, %v537
      %571 = vst.msk [vmem:[%s175 + $0x30] sm:$0xf] %vm558, %v538
      %572 = vst.msk [vmem:[%s175 + $0x34] sm:$0xf] %vm558, %v539
      %573 = vst.msk [vmem:[%s175 + $0x38] sm:$0xf] %vm558, %v540
      %574 = vst.msk [vmem:[%s175 + $0x3c] sm:$0xf] %vm558, %v541
      %s575 = smul.u32 16, %s14
      %p576 = scmp.lt.s32.totalorder %s575, 31
      %s577 = scalar_select %p576, %s575, 31
      %s578 = smul.addr %s577, 4
      %s579 = scalar_lea.vmem %s3, %s578
      // Predicated region
      $region33: #{slowfast_forward.3} parent=31 // pred_check
        %p580 = pneg %p100
      $region34: #{slowfast_forward.3} parent=31 // pred_check_branch
        %582 = sbr.rel (%p580) target = $region36
      $region35: #{slowfast_forward.3} parent=31 // pred_region
        %s583 = smul.u32 16, %s14
      $region36: #{slowfast_forward.3} parent=31 // pred_fallthru
        _
    $region32: #{slowfast_forward.3} parent=5 // pred_fallthru
      _
    %p584 = scmp.le.s32.totalorder 2, %s9
    // Predicated region
    $region37: #{slowfast_forward.3} parent=5 // pred_check
      %p585 = pneg %p584
    $region38: #{slowfast_forward.3} parent=5 // pred_check_branch
      %587 = sbr.rel (%p585) target = $region40
    $region39: #{slowfast_forward.3} parent=5 // pred_region
      %s588 = ssub.s32 %s9, 2
      // Predicated region
      $region41: #{slowfast_forward.3} parent=39 // pred_check
        %p589 = pneg %p106
      $region42: #{slowfast_forward.3} parent=39 // pred_check_branch
        %591 = sbr.rel (%p589) target = $region44
      $region43: #{slowfast_forward.3} parent=39 // pred_region
        %s592 = smul.u32 16, %s15
        %p593 = scmp.lt.s32.totalorder %s592, 31
        %s594 = scalar_select %p593, %s592, 31
        %s595 = smul.addr %s594, 4
        %s596 = scalar_lea.vmem %s3, %s595
      $region44: #{slowfast_forward.3} parent=39 // pred_fallthru
        _
    $region40: #{slowfast_forward.3} parent=5 // pred_fallthru
      _
  $region6: #{slowfast_forward.3} parent=0 // loop_footer
    %s13 = sadd.s32 1, %s9
  $region7: #{slowfast_forward.3} parent=0 // loop_footer_branch
    %8 = sbr.rel target = $region3
  $region8: #{slowfast_forward.3} parent=0 // loop_exit
    _

// kernel: slowfast_forward.2
$region0: #{slowfast_forward.2}
  #allocation0 [shape = 'u32[]', space=smem, size = 0x4, offset = 0x4, fixed_abs, tag = 'smem constant byte address 0x4 - core index']
  #allocation1 [shape = 'u32[144,128]{1,0:T(1,128)}', space=vmem, size = 0x12000, scoped, tag = 'internal scratch']
  %s0 = inlined_call_operand.vmem [shape: bf16[2048,735], index: 0, kind: input, shape index: {}]
  %s1 = inlined_call_operand.vmem [shape: bf16[735,8], index: 1, kind: input, shape index: {}]
  %s2 = inlined_call_operand.vmem [shape: f32[1,8], index: 2, kind: input, shape index: {}]
  %s3 = inlined_call_operand.vmem [shape: bf16[2048,8], index: 3, kind: output, shape index: {}]
  %s4 = sld [smem:[#allocation0]]
  $region45: #{slowfast_forward.2} parent=0
    _
  %s6 = ssub.s32 1, %s4
  %s7 = scalar_select 0, %s6, %s4
  loop: start=0, step=1, limit=6
  $region2: #{slowfast_forward.2} parent=0 // loop_pre_header
    _
  $region3: #{slowfast_forward.2} parent=0 // loop_header
    %s9 = sphi 0, %s13
    %p10 = scmp.ge.s32.totalorder %s9, 6
    %s19 = sphi 0, %s21
    %s22 = sphi 0, %s19
    %s23 = sphi 0, %s22
    %s39 = sphi 0, %s23
    %s43 = sphi 0, %s43
    %s45 = sphi 0, %s43
    %s46 = sphi 0, %s45
    %s60 = sphi 0, %s46
    %s64 = sphi 0, %s64
    %s66 = sphi 0, %s64
    %s67 = sphi 0, %s66
    %s81 = sphi 0, %s67
    %s87 = sphi 0, %s89
    %s90 = sphi 0, %s87
    %s91 = sphi 0, %s90
    %s107 = sphi 0, %s91
  $region4: #{slowfast_forward.2} parent=0 // loop_header_branch
    %12 = sbr.rel (%p10) target = $region8
  $region5: #{slowfast_forward.2} parent=0 // loop_body
    %s14 = ssub.s32 %s9, 1
    %s15 = ssub.s32 %s9, 2
    %s16 = sadd.s32 %s9, 1
    %s17 = ssub.s32 %s9, %s16
    %p18 = scmp.eq.s32.totalorder %s17, 0
    %s20 = sadd.s32 %s19, 1
    %s21 = scalar_select %p18, %s19, %s20
    %p24 = pneg %p18
    %p25 = scmp.eq.s32.totalorder %s9, 3
    %p26 = por %p24, %p25
    %p27 = scmp.ne.s32.totalorder %s19, %s22
    %p28 = scmp.eq.s32.totalorder %s9, 0
    %p29 = por %p27, %p28
    %p30 = scmp.ne.s32.totalorder %s19, %s22
    %p31 = scmp.eq.s32.totalorder %s14, 3
    %p32 = por %p30, %p31
    %p33 = scmp.ne.s32.totalorder %s22, %s23
    %p34 = scmp.eq.s32.totalorder %s14, 0
    %p35 = por %p33, %p34
    %p36 = scmp.ne.s32.totalorder %s22, %s23
    %p37 = scmp.eq.s32.totalorder %s15, 3
    %p38 = por %p36, %p37
    %p40 = scmp.ne.s32.totalorder %s23, %s39
    %p41 = scmp.eq.s32.totalorder %s15, 0
    %p42 = por %p40, %p41
    %s44 = sadd.s32 %s43, 1
    %p47 = scmp.eq.s32.totalorder %s9, 3
    %p48 = scmp.ne.s32.totalorder %s43, %s45
    %p49 = scmp.eq.s32.totalorder %s9, 0
    %p50 = por %p48, %p49
    %p51 = scmp.ne.s32.totalorder %s43, %s45
    %p52 = scmp.eq.s32.totalorder %s14, 3
    %p53 = por %p51, %p52
    %p54 = scmp.ne.s32.totalorder %s45, %s46
    %p55 = scmp.eq.s32.totalorder %s14, 0
    %p56 = por %p54, %p55
    %p57 = scmp.ne.s32.totalorder %s45, %s46
    %p58 = scmp.eq.s32.totalorder %s15, 3
    %p59 = por %p57, %p58
    %p61 = scmp.ne.s32.totalorder %s46, %s60
    %p62 = scmp.eq.s32.totalorder %s15, 0
    %p63 = por %p61, %p62
    %s65 = sadd.s32 %s64, 1
    %p68 = scmp.eq.s32.totalorder %s9, 3
    %p69 = scmp.ne.s32.totalorder %s64, %s66
    %p70 = scmp.eq.s32.totalorder %s9, 0
    %p71 = por %p69, %p70
    %p72 = scmp.ne.s32.totalorder %s64, %s66
    %p73 = scmp.eq.s32.totalorder %s14, 3
    %p74 = por %p72, %p73
    %p75 = scmp.ne.s32.totalorder %s66, %s67
    %p76 = scmp.eq.s32.totalorder %s14, 0
    %p77 = por %p75, %p76
    %p78 = scmp.ne.s32.totalorder %s66, %s67
    %p79 = scmp.eq.s32.totalorder %s15, 3
    %p80 = por %p78, %p79
    %p82 = scmp.ne.s32.totalorder %s67, %s81
    %p83 = scmp.eq.s32.totalorder %s15, 0
    %p84 = por %p82, %p83
    %s85 = ssub.s32 %s9, %s16
    %p86 = scmp.eq.s32.totalorder %s85, 0
    %s88 = sadd.s32 %s87, 1
    %s89 = scalar_select %p86, %s87, %s88
    %p92 = pneg %p86
    %p93 = scmp.eq.s32.totalorder %s9, 3
    %p94 = por %p92, %p93
    %p95 = scmp.ne.s32.totalorder %s87, %s90
    %p96 = scmp.eq.s32.totalorder %s9, 0
    %p97 = por %p95, %p96
    %p98 = scmp.ne.s32.totalorder %s87, %s90
    %p99 = scmp.eq.s32.totalorder %s14, 3
    %p100 = por %p98, %p99
    %p101 = scmp.ne.s32.totalorder %s90, %s91
    %p102 = scmp.eq.s32.totalorder %s14, 0
    %p103 = por %p101, %p102
    %p104 = scmp.ne.s32.totalorder %s90, %s91
    %p105 = scmp.eq.s32.totalorder %s15, 3
    %p106 = por %p104, %p105
    %p108 = scmp.ne.s32.totalorder %s91, %s107
    %p109 = scmp.eq.s32.totalorder %s15, 0
    %p110 = por %p108, %p109
    %p111 = scmp.le.s32.totalorder 1, %s9
    %p112 = scmp.lt.s32.totalorder %s9, 5
    %p113 = pnand %p111, %p112
    %p114 = pneg %p113
    // Predicated region
    $region9: #{slowfast_forward.2} parent=5 // pred_check
      _
    $region10: #{slowfast_forward.2} parent=5 // pred_check_branch
      %116 = sbr.rel (%p113) target = $region12
    $region11: #{slowfast_forward.2} parent=5 // pred_region
      %s117 = ssub.s32 %s9, 1
      // Predicated region
      $region13: #{slowfast_forward.2} parent=11 // pred_check
        %p118 = pneg %p56
      $region14: #{slowfast_forward.2} parent=11 // pred_check_branch
        %120 = sbr.rel (%p118) target = $region16
      $region15: #{slowfast_forward.2} parent=11 // pred_region
        _
      $region16: #{slowfast_forward.2} parent=11 // pred_fallthru
        _
      // Predicated region
      $region17: #{slowfast_forward.2} parent=11 // pred_check
        %p121 = pneg %p77
      $region18: #{slowfast_forward.2} parent=11 // pred_check_branch
        %123 = sbr.rel (%p121) target = $region20
      $region19: #{slowfast_forward.2} parent=11 // pred_region
        _
      $region20: #{slowfast_forward.2} parent=11 // pred_fallthru
        _
    $region12: #{slowfast_forward.2} parent=5 // pred_fallthru
      _
    %p124 = scmp.lt.s32.totalorder %s9, 4
    // Predicated region
    $region21: #{slowfast_forward.2} parent=5 // pred_check
      %p125 = pneg %p124
    $region22: #{slowfast_forward.2} parent=5 // pred_check_branch
      %127 = sbr.rel (%p125) target = $region24
    $region23: #{slowfast_forward.2} parent=5 // pred_region
      // Predicated region
      $region25: #{slowfast_forward.2} parent=23 // pred_check
        %p128 = pneg %p29
      $region26: #{slowfast_forward.2} parent=23 // pred_check_branch
        %130 = sbr.rel (%p128) target = $region28
      $region27: #{slowfast_forward.2} parent=23 // pred_region
        %s131 = smul.u32 64, %s9
        %p132 = scmp.lt.s32.totalorder %s131, 255
        %s133 = scalar_select %p132, %s131, 255
        %s134 = smul.addr %s133, 6
        %s135 = smul.addr %s134, 4
        %s136 = scalar_lea.vmem %s0, %s135
        %s137 = smul.u32 64, %s9
      $region28: #{slowfast_forward.2} parent=23 // pred_fallthru
        _
    $region24: #{slowfast_forward.2} parent=5 // pred_fallthru
      _
    %p138 = scmp.le.s32.totalorder 1, %s9
    %p139 = scmp.lt.s32.totalorder %s9, 5
    %p140 = pnand %p138, %p139
    %p141 = pneg %p140
    // Predicated region
    $region29: #{slowfast_forward.2} parent=5 // pred_check
      _
    $region30: #{slowfast_forward.2} parent=5 // pred_check_branch
      %143 = sbr.rel (%p140) target = $region32
    $region31: #{slowfast_forward.2} parent=5 // pred_region
      %s144 = ssub.s32 %s9, 1
      %s145 = smul.u32 64, %s14
      %p146 = scmp.lt.s32.totalorder %s145, 255
      %s147 = scalar_select %p146, %s145, 255
      %s148 = smul.addr %s147, 6
      %s149 = smul.addr %s148, 4
      %s150 = scalar_lea.vmem %s0, %s149
      %p151 = pneg %p35
      %p152 = pneg %p32
      %p153 = pneg %p56
      %p154 = pneg %p53
      %p155 = pneg %p77
      %p156 = pneg %p74
      %p157 = pneg %p103
      %p158 = pneg %p100
      %s159 = smul.u32 64, %s14
      %p160 = scmp.lt.s32.totalorder %s159, 255
      %s161 = scalar_select %p160, %s159, 255
      %s162 = smul.addr %s161, 4
      %s163 = scalar_lea.vmem %s3, %s162
      %s164 = smul.u32 64, %s14
      %p165 = scmp.lt.s32.totalorder %s164, 255
      %s166 = scalar_select %p165, %s164, 255
      %s167 = smul.addr %s166, 6
      %s168 = smul.addr %s167, 4
      %s169 = scalar_lea.vmem %s0, %s168
      %s170 = smul.u32 64, %s14
      %s171 = smul.u32 64, %s14
      %p172 = scmp.lt.s32.totalorder %s171, 255
      %s173 = scalar_select %p172, %s171, 255
      %s174 = smul.addr %s173, 4
      %s175 = scalar_lea.vmem %s3, %s174
      %s176 = smul.u32 64, %s14
      %v178 = vld [vmem:[%s169] sm:$0xff]
      %v179 = vld [vmem:[%s169 + $0x8] sm:$0xff]
      %v180 = vld [vmem:[%s169 + $0x10] sm:$0xff]
      %v181 = vld [vmem:[%s169 + $0x18] sm:$0xff]
      %v182 = vld [vmem:[%s169 + $0x20] sm:$0xff]
      %v183 = vld [vmem:[%s169 + $0x28] sm:$0xff]
      %v184 = vld [vmem:[%s169 + $0x30] sm:$0xff]
      %v185 = vld [vmem:[%s169 + $0x38] sm:$0xff]
      %v186 = vld [vmem:[%s169 + $0x40] sm:$0xff]
      %v187 = vld [vmem:[%s169 + $0x48] sm:$0xff]
      %v188 = vld [vmem:[%s169 + $0x50] sm:$0xff]
      %v189 = vld [vmem:[%s169 + $0x58] sm:$0xff]
      %v190 = vld [vmem:[%s169 + $0x60] sm:$0xff]
      %v191 = vld [vmem:[%s169 + $0x68] sm:$0xff]
      %v192 = vld [vmem:[%s169 + $0x70] sm:$0xff]
      %v193 = vld [vmem:[%s169 + $0x78] sm:$0xff]
      %v194 = vld [vmem:[%s169 + $0x80] sm:$0xff]
      %v195 = vld [vmem:[%s169 + $0x88] sm:$0xff]
      %v196 = vld [vmem:[%s169 + $0x90] sm:$0xff]
      %v197 = vld [vmem:[%s169 + $0x98] sm:$0xff]
      %v198 = vld [vmem:[%s169 + $0xa0] sm:$0xff]
      %v199 = vld [vmem:[%s169 + $0xa8] sm:$0xff]
      %v200 = vld [vmem:[%s169 + $0xb0] sm:$0xff]
      %v201 = vld [vmem:[%s169 + $0xb8] sm:$0xff]
      %v202 = vld [vmem:[%s169 + $0xc0] sm:$0xff]
      %v203 = vld [vmem:[%s169 + $0xc8] sm:$0xff]
      %v204 = vld [vmem:[%s169 + $0xd0] sm:$0xff]
      %v205 = vld [vmem:[%s169 + $0xd8] sm:$0xff]
      %v206 = vld [vmem:[%s169 + $0xe0] sm:$0xff]
      %v207 = vld [vmem:[%s169 + $0xe8] sm:$0xff]
      %v208 = vld [vmem:[%s169 + $0xf0] sm:$0xff]
      %v209 = vld [vmem:[%s169 + $0xf8] sm:$0xff]
      %v210 = vld [vmem:[%s169 + $0x100] sm:$0xff]
      %v211 = vld [vmem:[%s169 + $0x108] sm:$0xff]
      %v212 = vld [vmem:[%s169 + $0x110] sm:$0xff]
      %v213 = vld [vmem:[%s169 + $0x118] sm:$0xff]
      %v214 = vld [vmem:[%s169 + $0x120] sm:$0xff]
      %v215 = vld [vmem:[%s169 + $0x128] sm:$0xff]
      %v216 = vld [vmem:[%s169 + $0x130] sm:$0xff]
      %v217 = vld [vmem:[%s169 + $0x138] sm:$0xff]
      %v218 = vld [vmem:[%s169 + $0x140] sm:$0xff]
      %v219 = vld [vmem:[%s169 + $0x148] sm:$0xff]
      %v220 = vld [vmem:[%s169 + $0x150] sm:$0xff]
      %v221 = vld [vmem:[%s169 + $0x158] sm:$0xff]
      %v222 = vld [vmem:[%s169 + $0x160] sm:$0xff]
      %v223 = vld [vmem:[%s169 + $0x168] sm:$0xff]
      %v224 = vld [vmem:[%s169 + $0x170] sm:$0xff]
      %v225 = vld [vmem:[%s169 + $0x178] sm:$0xff]
      %v226 = vld [vmem:[%s169 + $0x180] sm:$0xff]
      %v227 = vld [vmem:[%s169 + $0x188] sm:$0xff]
      %v228 = vld [vmem:[%s169 + $0x190] sm:$0xff]
      %v229 = vld [vmem:[%s169 + $0x198] sm:$0xff]
      %v230 = vld [vmem:[%s169 + $0x1a0] sm:$0xff]
      %v231 = vld [vmem:[%s169 + $0x1a8] sm:$0xff]
      %v232 = vld [vmem:[%s169 + $0x1b0] sm:$0xff]
      %v233 = vld [vmem:[%s169 + $0x1b8] sm:$0xff]
      %v234 = vld [vmem:[%s169 + $0x1c0] sm:$0xff]
      %v235 = vld [vmem:[%s169 + $0x1c8] sm:$0xff]
      %v236 = vld [vmem:[%s169 + $0x1d0] sm:$0xff]
      %v237 = vld [vmem:[%s169 + $0x1d8] sm:$0xff]
      %v238 = vld [vmem:[%s169 + $0x1e0] sm:$0xff]
      %v239 = vld [vmem:[%s169 + $0x1e8] sm:$0xff]
      %v240 = vld [vmem:[%s169 + $0x1f0] sm:$0xff]
      %v241 = vld [vmem:[%s169 + $0x1f8] sm:$0xff]
      %v242 = vld [vmem:[%s169 + $0x200] sm:$0xff]
      %v243 = vld [vmem:[%s169 + $0x208] sm:$0xff]
      %v244 = vld [vmem:[%s169 + $0x210] sm:$0xff]
      %v245 = vld [vmem:[%s169 + $0x218] sm:$0xff]
      %v246 = vld [vmem:[%s169 + $0x220] sm:$0xff]
      %v247 = vld [vmem:[%s169 + $0x228] sm:$0xff]
      %v248 = vld [vmem:[%s169 + $0x230] sm:$0xff]
      %v249 = vld [vmem:[%s169 + $0x238] sm:$0xff]
      %v250 = vld [vmem:[%s169 + $0x240] sm:$0xff]
      %v251 = vld [vmem:[%s169 + $0x248] sm:$0xff]
      %v252 = vld [vmem:[%s169 + $0x250] sm:$0xff]
      %v253 = vld [vmem:[%s169 + $0x258] sm:$0xff]
      %v254 = vld [vmem:[%s169 + $0x260] sm:$0xff]
      %v255 = vld [vmem:[%s169 + $0x268] sm:$0xff]
      %v256 = vld [vmem:[%s169 + $0x270] sm:$0xff]
      %v257 = vld [vmem:[%s169 + $0x278] sm:$0xff]
      %v258 = vld [vmem:[%s169 + $0x280] sm:$0xff]
      %v259 = vld [vmem:[%s169 + $0x288] sm:$0xff]
      %v260 = vld [vmem:[%s169 + $0x290] sm:$0xff]
      %v261 = vld [vmem:[%s169 + $0x298] sm:$0xff]
      %v262 = vld [vmem:[%s169 + $0x2a0] sm:$0xff]
      %v263 = vld [vmem:[%s169 + $0x2a8] sm:$0xff]
      %v264 = vld [vmem:[%s169 + $0x2b0] sm:$0xff]
      %v265 = vld [vmem:[%s169 + $0x2b8] sm:$0xff]
      %v266 = vld [vmem:[%s169 + $0x2c0] sm:$0xff]
      %v267 = vld [vmem:[%s169 + $0x2c8] sm:$0xff]
      %v268 = vld [vmem:[%s169 + $0x2d0] sm:$0xff]
      %v269 = vld [vmem:[%s169 + $0x2d8] sm:$0xff]
      %v270 = vld [vmem:[%s169 + $0x2e0] sm:$0xff]
      %v271 = vld [vmem:[%s169 + $0x2e8] sm:$0xff]
      %v272 = vld [vmem:[%s169 + $0x2f0] sm:$0xff]
      %v273 = vld [vmem:[%s169 + $0x2f8] sm:$0xff]
      %v274 = vld [vmem:[%s169 + $0x300] sm:$0xff]
      %v275 = vld [vmem:[%s169 + $0x308] sm:$0xff]
      %v276 = vld [vmem:[%s169 + $0x310] sm:$0xff]
      %v277 = vld [vmem:[%s169 + $0x318] sm:$0xff]
      %v278 = vld [vmem:[%s169 + $0x320] sm:$0xff]
      %v279 = vld [vmem:[%s169 + $0x328] sm:$0xff]
      %v280 = vld [vmem:[%s169 + $0x330] sm:$0xff]
      %v281 = vld [vmem:[%s169 + $0x338] sm:$0xff]
      %v282 = vld [vmem:[%s169 + $0x340] sm:$0xff]
      %v283 = vld [vmem:[%s169 + $0x348] sm:$0xff]
      %v284 = vld [vmem:[%s169 + $0x350] sm:$0xff]
      %v285 = vld [vmem:[%s169 + $0x358] sm:$0xff]
      %v286 = vld [vmem:[%s169 + $0x360] sm:$0xff]
      %v287 = vld [vmem:[%s169 + $0x368] sm:$0xff]
      %v288 = vld [vmem:[%s169 + $0x370] sm:$0xff]
      %v289 = vld [vmem:[%s169 + $0x378] sm:$0xff]
      %v290 = vld [vmem:[%s169 + $0x380] sm:$0xff]
      %v291 = vld [vmem:[%s169 + $0x388] sm:$0xff]
      %v292 = vld [vmem:[%s169 + $0x390] sm:$0xff]
      %v293 = vld [vmem:[%s169 + $0x398] sm:$0xff]
      %v294 = vld [vmem:[%s169 + $0x3a0] sm:$0xff]
      %v295 = vld [vmem:[%s169 + $0x3a8] sm:$0xff]
      %v296 = vld [vmem:[%s169 + $0x3b0] sm:$0xff]
      %v297 = vld [vmem:[%s169 + $0x3b8] sm:$0xff]
      %v298 = vld [vmem:[%s169 + $0x3c0] sm:$0xff]
      %v299 = vld [vmem:[%s169 + $0x3c8] sm:$0xff]
      %v300 = vld [vmem:[%s169 + $0x3d0] sm:$0xff]
      %v301 = vld [vmem:[%s169 + $0x3d8] sm:$0xff]
      %v302 = vld [vmem:[%s169 + $0x3e0] sm:$0xff]
      %v303 = vld [vmem:[%s169 + $0x3e8] sm:$0xff]
      %v304 = vld [vmem:[%s169 + $0x3f0] sm:$0xff]
      %v305 = vld [vmem:[%s169 + $0x3f8] sm:$0xff]
      %v306 = vld [vmem:[%s169 + $0x400] sm:$0xff]
      %v307 = vld [vmem:[%s169 + $0x408] sm:$0xff]
      %v308 = vld [vmem:[%s169 + $0x410] sm:$0xff]
      %v309 = vld [vmem:[%s169 + $0x418] sm:$0xff]
      %v310 = vld [vmem:[%s169 + $0x420] sm:$0xff]
      %v311 = vld [vmem:[%s169 + $0x428] sm:$0xff]
      %v312 = vld [vmem:[%s169 + $0x430] sm:$0xff]
      %v313 = vld [vmem:[%s169 + $0x438] sm:$0xff]
      %v314 = vld [vmem:[%s169 + $0x440] sm:$0xff]
      %v315 = vld [vmem:[%s169 + $0x448] sm:$0xff]
      %v316 = vld [vmem:[%s169 + $0x450] sm:$0xff]
      %v317 = vld [vmem:[%s169 + $0x458] sm:$0xff]
      %v318 = vld [vmem:[%s169 + $0x460] sm:$0xff]
      %v319 = vld [vmem:[%s169 + $0x468] sm:$0xff]
      %v320 = vld [vmem:[%s169 + $0x470] sm:$0xff]
      %v321 = vld [vmem:[%s169 + $0x478] sm:$0xff]
      %v322 = vld [vmem:[%s169 + $0x480] sm:$0xff]
      %v323 = vld [vmem:[%s169 + $0x488] sm:$0xff]
      %v324 = vld [vmem:[%s169 + $0x490] sm:$0xff]
      %v325 = vld [vmem:[%s169 + $0x498] sm:$0xff]
      %v326 = vld [vmem:[%s169 + $0x4a0] sm:$0xff]
      %v327 = vld [vmem:[%s169 + $0x4a8] sm:$0xff]
      %v328 = vld [vmem:[%s169 + $0x4b0] sm:$0xff]
      %v329 = vld [vmem:[%s169 + $0x4b8] sm:$0xff]
      %v330 = vld [vmem:[%s169 + $0x4c0] sm:$0xff]
      %v331 = vld [vmem:[%s169 + $0x4c8] sm:$0xff]
      %v332 = vld [vmem:[%s169 + $0x4d0] sm:$0xff]
      %v333 = vld [vmem:[%s169 + $0x4d8] sm:$0xff]
      %v334 = vld [vmem:[%s169 + $0x4e0] sm:$0xff]
      %v335 = vld [vmem:[%s169 + $0x4e8] sm:$0xff]
      %v336 = vld [vmem:[%s169 + $0x4f0] sm:$0xff]
      %v337 = vld [vmem:[%s169 + $0x4f8] sm:$0xff]
      %v338 = vld [vmem:[%s169 + $0x500] sm:$0xff]
      %v339 = vld [vmem:[%s169 + $0x508] sm:$0xff]
      %v340 = vld [vmem:[%s169 + $0x510] sm:$0xff]
      %v341 = vld [vmem:[%s169 + $0x518] sm:$0xff]
      %v342 = vld [vmem:[%s169 + $0x520] sm:$0xff]
      %v343 = vld [vmem:[%s169 + $0x528] sm:$0xff]
      %v344 = vld [vmem:[%s169 + $0x530] sm:$0xff]
      %v345 = vld [vmem:[%s169 + $0x538] sm:$0xff]
      %v346 = vld [vmem:[%s169 + $0x540] sm:$0xff]
      %v347 = vld [vmem:[%s169 + $0x548] sm:$0xff]
      %v348 = vld [vmem:[%s169 + $0x550] sm:$0xff]
      %v349 = vld [vmem:[%s169 + $0x558] sm:$0xff]
      %v350 = vld [vmem:[%s169 + $0x560] sm:$0xff]
      %v351 = vld [vmem:[%s169 + $0x568] sm:$0xff]
      %v352 = vld [vmem:[%s169 + $0x570] sm:$0xff]
      %v353 = vld [vmem:[%s169 + $0x578] sm:$0xff]
      %v354 = vld [vmem:[%s169 + $0x580] sm:$0xff]
      %v355 = vld [vmem:[%s169 + $0x588] sm:$0xff]
      %v356 = vld [vmem:[%s169 + $0x590] sm:$0xff]
      %v357 = vld [vmem:[%s169 + $0x598] sm:$0xff]
      %v358 = vld [vmem:[%s169 + $0x5a0] sm:$0xff]
      %v359 = vld [vmem:[%s169 + $0x5a8] sm:$0xff]
      %v360 = vld [vmem:[%s169 + $0x5b0] sm:$0xff]
      %v361 = vld [vmem:[%s169 + $0x5b8] sm:$0xff]
      %v362 = vld [vmem:[%s169 + $0x5c0] sm:$0xff]
      %v363 = vld [vmem:[%s169 + $0x5c8] sm:$0xff]
      %v364 = vld [vmem:[%s169 + $0x5d0] sm:$0xff]
      %v365 = vld [vmem:[%s169 + $0x5d8] sm:$0xff]
      %v366 = vld [vmem:[%s169 + $0x5e0] sm:$0xff]
      %v367 = vld [vmem:[%s169 + $0x5e8] sm:$0xff]
      %v368 = vld [vmem:[%s169 + $0x5f0] sm:$0xff]
      %v369 = vld [vmem:[%s169 + $0x5f8] sm:$0xff]
      %v370 = vld [vmem:[%s1] sm:$0xf]
      %v371 = vld [vmem:[%s1 + $0x4] sm:$0xf]
      %v372 = vld [vmem:[%s1 + $0x8] sm:$0xf]
      %v373 = vld [vmem:[%s1 + $0xc] sm:$0xf]
      %v374 = vld [vmem:[%s1 + $0x10] sm:$0xf]
      %v375 = vld [vmem:[%s1 + $0x14] sm:$0xf]
      %v376 = vld [vmem:[%s1 + $0x18] sm:$0xf]
      %v377 = vld [vmem:[%s1 + $0x1c] sm:$0xf]
      %v378 = vld [vmem:[%s1 + $0x20] sm:$0xf]
      %v379 = vld [vmem:[%s1 + $0x24] sm:$0xf]
      %v380 = vld [vmem:[%s1 + $0x28] sm:$0xf]
      %v381 = vld [vmem:[%s1 + $0x2c] sm:$0xf]
      %v382 = vld [vmem:[%s1 + $0x30] sm:$0xf]
      %v383 = vld [vmem:[%s1 + $0x34] sm:$0xf]
      %v384 = vld [vmem:[%s1 + $0x38] sm:$0xf]
      %v385 = vld [vmem:[%s1 + $0x3c] sm:$0xf]
      %v386 = vld [vmem:[%s1 + $0x40] sm:$0xf]
      %v387 = vld [vmem:[%s1 + $0x44] sm:$0xf]
      %v388 = vld [vmem:[%s1 + $0x48] sm:$0xf]
      %v389 = vld [vmem:[%s1 + $0x4c] sm:$0xf]
      %v390 = vld [vmem:[%s1 + $0x50] sm:$0xf]
      %v391 = vld [vmem:[%s1 + $0x54] sm:$0xf]
      %v392 = vld [vmem:[%s1 + $0x58] sm:$0xf]
      %v393 = vld [vmem:[%s1 + $0x5c] sm:$0xf]
      %v394 = vld [vmem:[%s1 + $0x60] sm:$0xf]
      %v395 = vld [vmem:[%s1 + $0x64] sm:$0xf]
      %v396 = vld [vmem:[%s1 + $0x68] sm:$0xf]
      %v397 = vld [vmem:[%s1 + $0x6c] sm:$0xf]
      %v398 = vld [vmem:[%s1 + $0x70] sm:$0xf]
      %v399 = vld [vmem:[%s1 + $0x74] sm:$0xf]
      %v400 = vld [vmem:[%s1 + $0x78] sm:$0xf]
      %v401 = vld [vmem:[%s1 + $0x7c] sm:$0xf]
      %v402 = vld [vmem:[%s1 + $0x80] sm:$0xf]
      %v403 = vld [vmem:[%s1 + $0x84] sm:$0xf]
      %v404 = vld [vmem:[%s1 + $0x88] sm:$0xf]
      %v405 = vld [vmem:[%s1 + $0x8c] sm:$0xf]
      %v406 = vld [vmem:[%s1 + $0x90] sm:$0xf]
      %v407 = vld [vmem:[%s1 + $0x94] sm:$0xf]
      %v408 = vld [vmem:[%s1 + $0x98] sm:$0xf]
      %v409 = vld [vmem:[%s1 + $0x9c] sm:$0xf]
      %v410 = vld [vmem:[%s1 + $0xa0] sm:$0xf]
      %v411 = vld [vmem:[%s1 + $0xa4] sm:$0xf]
      %v412 = vld [vmem:[%s1 + $0xa8] sm:$0xf]
      %v413 = vld [vmem:[%s1 + $0xac] sm:$0xf]
      %v414 = vld [vmem:[%s1 + $0xb0] sm:$0xf]
      %v415 = vld [vmem:[%s1 + $0xb4] sm:$0xf]
      %v416 = vld [vmem:[%s1 + $0xb8] sm:$0xf]
      %v417 = vld [vmem:[%s1 + $0xbc] sm:$0xf]
      %v418 = vld [vmem:[%s1 + $0xc0] sm:$0xf]
      %v419 = vld [vmem:[%s1 + $0xc4] sm:$0xf]
      %v420 = vld [vmem:[%s1 + $0xc8] sm:$0xf]
      %v421 = vld [vmem:[%s1 + $0xcc] sm:$0xf]
      %v422 = vld [vmem:[%s1 + $0xd0] sm:$0xf]
      %v423 = vld [vmem:[%s1 + $0xd4] sm:$0xf]
      %v424 = vld [vmem:[%s1 + $0xd8] sm:$0xf]
      %v425 = vld [vmem:[%s1 + $0xdc] sm:$0xf]
      %v426 = vld [vmem:[%s1 + $0xe0] sm:$0xf]
      %v427 = vld [vmem:[%s1 + $0xe4] sm:$0xf]
      %v428 = vld [vmem:[%s1 + $0xe8] sm:$0xf]
      %v429 = vld [vmem:[%s1 + $0xec] sm:$0xf]
      %v430 = vld [vmem:[%s1 + $0xf0] sm:$0xf]
      %v431 = vld [vmem:[%s1 + $0xf4] sm:$0xf]
      %v432 = vld [vmem:[%s1 + $0xf8] sm:$0xf]
      %v433 = vld [vmem:[%s1 + $0xfc] sm:$0xf]
      %v434 = vld [vmem:[%s1 + $0x100] sm:$0xf]
      %v435 = vld [vmem:[%s1 + $0x104] sm:$0xf]
      %v436 = vld [vmem:[%s1 + $0x108] sm:$0xf]
      %v437 = vld [vmem:[%s1 + $0x10c] sm:$0xf]
      %v438 = vld [vmem:[%s1 + $0x110] sm:$0xf]
      %v439 = vld [vmem:[%s1 + $0x114] sm:$0xf]
      %v440 = vld [vmem:[%s1 + $0x118] sm:$0xf]
      %v441 = vld [vmem:[%s1 + $0x11c] sm:$0xf]
      %v442 = vld [vmem:[%s1 + $0x120] sm:$0xf]
      %v443 = vld [vmem:[%s1 + $0x124] sm:$0xf]
      %v444 = vld [vmem:[%s1 + $0x128] sm:$0xf]
      %v445 = vld [vmem:[%s1 + $0x12c] sm:$0xf]
      %v446 = vld [vmem:[%s1 + $0x130] sm:$0xf]
      %v447 = vld [vmem:[%s1 + $0x134] sm:$0xf]
      %v448 = vld [vmem:[%s1 + $0x138] sm:$0xf]
      %v449 = vld [vmem:[%s1 + $0x13c] sm:$0xf]
      %v450 = vld [vmem:[%s1 + $0x140] sm:$0xf]
      %v451 = vld [vmem:[%s1 + $0x144] sm:$0xf]
      %v452 = vld [vmem:[%s1 + $0x148] sm:$0xf]
      %v453 = vld [vmem:[%s1 + $0x14c] sm:$0xf]
      %v454 = vld [vmem:[%s1 + $0x150] sm:$0xf]
      %v455 = vld [vmem:[%s1 + $0x154] sm:$0xf]
      %v456 = vld [vmem:[%s1 + $0x158] sm:$0xf]
      %v457 = vld [vmem:[%s1 + $0x15c] sm:$0xf]
      %v458 = vld [vmem:[%s1 + $0x160] sm:$0xf]
      %v459 = vld [vmem:[%s1 + $0x164] sm:$0xf]
      %v460 = vld [vmem:[%s1 + $0x168] sm:$0xf]
      %v461 = vld [vmem:[%s1 + $0x16c] sm:$0xf]
      %v462 = vld [vmem:[%s2] sm:$0x1]
      %v464 = vlaneseq
      %v465 = vshrl.u32 %v464, 7
      %v466 = vsub.s32 0, %v465
      %v467 = vrot.slane %v462, %v466
      %v661 = vunpack.c.l.b16 %v178
      %v662 = vunpack.c.h.b16 %v178
      %v663 = vunpack.c.l.b16 %v179
      %v664 = vunpack.c.h.b16 %v179
      %v665 = vunpack.c.l.b16 %v180
      %v666 = vunpack.c.h.b16 %v180
      %v667 = vunpack.c.l.b16 %v181
      %v668 = vunpack.c.h.b16 %v181
      %v669 = vunpack.c.l.b16 %v182
      %v670 = vunpack.c.h.b16 %v182
      %v671 = vunpack.c.l.b16 %v183
      %v672 = vunpack.c.h.b16 %v183
      %v673 = vunpack.c.l.b16 %v184
      %v674 = vunpack.c.h.b16 %v184
      %v675 = vunpack.c.l.b16 %v185
      %v676 = vunpack.c.h.b16 %v185
      %v677 = vunpack.c.l.b16 %v186
      %v678 = vunpack.c.h.b16 %v186
      %v679 = vunpack.c.l.b16 %v187
      %v680 = vunpack.c.h.b16 %v187
      %v681 = vunpack.c.l.b16 %v188
      %v682 = vunpack.c.h.b16 %v188
      %v683 = vunpack.c.l.b16 %v189
      %v684 = vunpack.c.h.b16 %v189
      %v685 = vunpack.c.l.b16 %v190
      %v686 = vunpack.c.h.b16 %v190
      %v687 = vunpack.c.l.b16 %v191
      %v688 = vunpack.c.h.b16 %v191
      %v689 = vunpack.c.l.b16 %v192
      %v690 = vunpack.c.h.b16 %v192
      %v691 = vunpack.c.l.b16 %v193
      %v692 = vunpack.c.h.b16 %v193
      %v693 = vunpack.c.l.b16 %v194
      %v694 = vunpack.c.h.b16 %v194
      %v695 = vunpack.c.l.b16 %v195
      %v696 = vunpack.c.h.b16 %v195
      %v697 = vunpack.c.l.b16 %v196
      %v698 = vunpack.c.h.b16 %v196
      %v699 = vunpack.c.l.b16 %v197
      %v700 = vunpack.c.h.b16 %v197
      %v701 = vunpack.c.l.b16 %v198
      %v702 = vunpack.c.h.b16 %v198
      %v703 = vunpack.c.l.b16 %v199
      %v704 = vunpack.c.h.b16 %v199
      %v705 = vunpack.c.l.b16 %v200
      %v706 = vunpack.c.h.b16 %v200
      %v707 = vunpack.c.l.b16 %v201
      %v708 = vunpack.c.h.b16 %v201
      %v709 = vunpack.c.l.b16 %v202
      %v710 = vunpack.c.h.b16 %v202
      %v711 = vunpack.c.l.b16 %v203
      %v712 = vunpack.c.h.b16 %v203
      %v713 = vunpack.c.l.b16 %v204
      %v714 = vunpack.c.h.b16 %v204
      %v715 = vunpack.c.l.b16 %v205
      %v716 = vunpack.c.h.b16 %v205
      %v717 = vunpack.c.l.b16 %v206
      %v718 = vunpack.c.h.b16 %v206
      %v719 = vunpack.c.l.b16 %v207
      %v720 = vunpack.c.h.b16 %v207
      %v721 = vunpack.c.l.b16 %v208
      %v722 = vunpack.c.h.b16 %v208
      %v723 = vunpack.c.l.b16 %v209
      %v724 = vunpack.c.h.b16 %v209
      %v725 = vunpack.c.l.b16 %v210
      %v726 = vunpack.c.h.b16 %v210
      %v727 = vunpack.c.l.b16 %v211
      %v728 = vunpack.c.h.b16 %v211
      %v729 = vunpack.c.l.b16 %v212
      %v730 = vunpack.c.h.b16 %v212
      %v731 = vunpack.c.l.b16 %v213
      %v732 = vunpack.c.h.b16 %v213
      %v733 = vunpack.c.l.b16 %v214
      %v734 = vunpack.c.h.b16 %v214
      %v735 = vunpack.c.l.b16 %v215
      %v736 = vunpack.c.h.b16 %v215
      %v737 = vunpack.c.l.b16 %v216
      %v738 = vunpack.c.h.b16 %v216
      %v739 = vunpack.c.l.b16 %v217
      %v740 = vunpack.c.h.b16 %v217
      %v741 = vunpack.c.l.b16 %v218
      %v742 = vunpack.c.h.b16 %v218
      %v743 = vunpack.c.l.b16 %v219
      %v744 = vunpack.c.h.b16 %v219
      %v745 = vunpack.c.l.b16 %v220
      %v746 = vunpack.c.h.b16 %v220
      %v747 = vunpack.c.l.b16 %v221
      %v748 = vunpack.c.h.b16 %v221
      %v749 = vunpack.c.l.b16 %v222
      %v750 = vunpack.c.h.b16 %v222
      %v751 = vunpack.c.l.b16 %v223
      %v752 = vunpack.c.h.b16 %v223
      %v753 = vunpack.c.l.b16 %v224
      %v754 = vunpack.c.h.b16 %v224
      %v755 = vunpack.c.l.b16 %v225
      %v756 = vunpack.c.h.b16 %v225
      %v757 = vunpack.c.l.b16 %v226
      %v758 = vunpack.c.h.b16 %v226
      %v759 = vunpack.c.l.b16 %v227
      %v760 = vunpack.c.h.b16 %v227
      %v761 = vunpack.c.l.b16 %v228
      %v762 = vunpack.c.h.b16 %v228
      %v763 = vunpack.c.l.b16 %v229
      %v764 = vunpack.c.h.b16 %v229
      %v765 = vunpack.c.l.b16 %v230
      %v766 = vunpack.c.h.b16 %v230
      %v767 = vunpack.c.l.b16 %v231
      %v768 = vunpack.c.h.b16 %v231
      %v769 = vunpack.c.l.b16 %v232
      %v770 = vunpack.c.h.b16 %v232
      %v771 = vunpack.c.l.b16 %v233
      %v772 = vunpack.c.h.b16 %v233
      %v773 = vunpack.c.l.b16 %v234
      %v774 = vunpack.c.h.b16 %v234
      %v775 = vunpack.c.l.b16 %v235
      %v776 = vunpack.c.h.b16 %v235
      %v777 = vunpack.c.l.b16 %v236
      %v778 = vunpack.c.h.b16 %v236
      %v779 = vunpack.c.l.b16 %v237
      %v780 = vunpack.c.h.b16 %v237
      %v781 = vunpack.c.l.b16 %v238
      %v782 = vunpack.c.h.b16 %v238
      %v783 = vunpack.c.l.b16 %v239
      %v784 = vunpack.c.h.b16 %v239
      %v785 = vunpack.c.l.b16 %v240
      %v786 = vunpack.c.h.b16 %v240
      %v787 = vunpack.c.l.b16 %v241
      %v788 = vunpack.c.h.b16 %v241
      %v789 = vunpack.c.l.b16 %v242
      %v790 = vunpack.c.h.b16 %v242
      %v791 = vunpack.c.l.b16 %v243
      %v792 = vunpack.c.h.b16 %v243
      %v793 = vunpack.c.l.b16 %v244
      %v794 = vunpack.c.h.b16 %v244
      %v795 = vunpack.c.l.b16 %v245
      %v796 = vunpack.c.h.b16 %v245
      %v797 = vunpack.c.l.b16 %v246
      %v798 = vunpack.c.h.b16 %v246
      %v799 = vunpack.c.l.b16 %v247
      %v800 = vunpack.c.h.b16 %v247
      %v801 = vunpack.c.l.b16 %v248
      %v802 = vunpack.c.h.b16 %v248
      %v803 = vunpack.c.l.b16 %v249
      %v804 = vunpack.c.h.b16 %v249
      %v805 = vunpack.c.l.b16 %v250
      %v806 = vunpack.c.h.b16 %v250
      %v807 = vunpack.c.l.b16 %v251
      %v808 = vunpack.c.h.b16 %v251
      %v809 = vunpack.c.l.b16 %v252
      %v810 = vunpack.c.h.b16 %v252
      %v811 = vunpack.c.l.b16 %v253
      %v812 = vunpack.c.h.b16 %v253
      %v813 = vunpack.c.l.b16 %v254
      %v814 = vunpack.c.h.b16 %v254
      %v815 = vunpack.c.l.b16 %v255
      %v816 = vunpack.c.h.b16 %v255
      %v817 = vunpack.c.l.b16 %v256
      %v818 = vunpack.c.h.b16 %v256
      %v819 = vunpack.c.l.b16 %v257
      %v820 = vunpack.c.h.b16 %v257
      %v821 = vunpack.c.l.b16 %v258
      %v822 = vunpack.c.h.b16 %v258
      %v823 = vunpack.c.l.b16 %v259
      %v824 = vunpack.c.h.b16 %v259
      %v825 = vunpack.c.l.b16 %v260
      %v826 = vunpack.c.h.b16 %v260
      %v827 = vunpack.c.l.b16 %v261
      %v828 = vunpack.c.h.b16 %v261
      %v829 = vunpack.c.l.b16 %v262
      %v830 = vunpack.c.h.b16 %v262
      %v831 = vunpack.c.l.b16 %v263
      %v832 = vunpack.c.h.b16 %v263
      %v833 = vunpack.c.l.b16 %v264
      %v834 = vunpack.c.h.b16 %v264
      %v835 = vunpack.c.l.b16 %v265
      %v836 = vunpack.c.h.b16 %v265
      %v837 = vunpack.c.l.b16 %v266
      %v838 = vunpack.c.h.b16 %v266
      %v839 = vunpack.c.l.b16 %v267
      %v840 = vunpack.c.h.b16 %v267
      %v841 = vunpack.c.l.b16 %v268
      %v842 = vunpack.c.h.b16 %v268
      %v843 = vunpack.c.l.b16 %v269
      %v844 = vunpack.c.h.b16 %v269
      %v845 = vunpack.c.l.b16 %v270
      %v846 = vunpack.c.h.b16 %v270
      %v847 = vunpack.c.l.b16 %v271
      %v848 = vunpack.c.h.b16 %v271
      %v849 = vunpack.c.l.b16 %v272
      %v850 = vunpack.c.h.b16 %v272
      %v851 = vunpack.c.l.b16 %v273
      %v852 = vunpack.c.h.b16 %v273
      %v853 = vunpack.c.l.b16 %v274
      %v854 = vunpack.c.h.b16 %v274
      %v855 = vunpack.c.l.b16 %v275
      %v856 = vunpack.c.h.b16 %v275
      %v857 = vunpack.c.l.b16 %v276
      %v858 = vunpack.c.h.b16 %v276
      %v859 = vunpack.c.l.b16 %v277
      %v860 = vunpack.c.h.b16 %v277
      %v861 = vunpack.c.l.b16 %v278
      %v862 = vunpack.c.h.b16 %v278
      %v863 = vunpack.c.l.b16 %v279
      %v864 = vunpack.c.h.b16 %v279
      %v865 = vunpack.c.l.b16 %v280
      %v866 = vunpack.c.h.b16 %v280
      %v867 = vunpack.c.l.b16 %v281
      %v868 = vunpack.c.h.b16 %v281
      %v869 = vunpack.c.l.b16 %v282
      %v870 = vunpack.c.h.b16 %v282
      %v871 = vunpack.c.l.b16 %v283
      %v872 = vunpack.c.h.b16 %v283
      %v873 = vunpack.c.l.b16 %v284
      %v874 = vunpack.c.h.b16 %v284
      %v875 = vunpack.c.l.b16 %v285
      %v876 = vunpack.c.h.b16 %v285
      %v877 = vunpack.c.l.b16 %v286
      %v878 = vunpack.c.h.b16 %v286
      %v879 = vunpack.c.l.b16 %v287
      %v880 = vunpack.c.h.b16 %v287
      %v881 = vunpack.c.l.b16 %v288
      %v882 = vunpack.c.h.b16 %v288
      %v883 = vunpack.c.l.b16 %v289
      %v884 = vunpack.c.h.b16 %v289
      %v885 = vunpack.c.l.b16 %v290
      %v886 = vunpack.c.h.b16 %v290
      %v887 = vunpack.c.l.b16 %v291
      %v888 = vunpack.c.h.b16 %v291
      %v889 = vunpack.c.l.b16 %v292
      %v890 = vunpack.c.h.b16 %v292
      %v891 = vunpack.c.l.b16 %v293
      %v892 = vunpack.c.h.b16 %v293
      %v893 = vunpack.c.l.b16 %v294
      %v894 = vunpack.c.h.b16 %v294
      %v895 = vunpack.c.l.b16 %v295
      %v896 = vunpack.c.h.b16 %v295
      %v897 = vunpack.c.l.b16 %v296
      %v898 = vunpack.c.h.b16 %v296
      %v899 = vunpack.c.l.b16 %v297
      %v900 = vunpack.c.h.b16 %v297
      %v901 = vunpack.c.l.b16 %v298
      %v902 = vunpack.c.h.b16 %v298
      %v903 = vunpack.c.l.b16 %v299
      %v904 = vunpack.c.h.b16 %v299
      %v905 = vunpack.c.l.b16 %v300
      %v906 = vunpack.c.h.b16 %v300
      %v907 = vunpack.c.l.b16 %v301
      %v908 = vunpack.c.h.b16 %v301
      %v909 = vunpack.c.l.b16 %v302
      %v910 = vunpack.c.h.b16 %v302
      %v911 = vunpack.c.l.b16 %v303
      %v912 = vunpack.c.h.b16 %v303
      %v913 = vunpack.c.l.b16 %v304
      %v914 = vunpack.c.h.b16 %v304
      %v915 = vunpack.c.l.b16 %v305
      %v916 = vunpack.c.h.b16 %v305
      %v917 = vunpack.c.l.b16 %v306
      %v918 = vunpack.c.h.b16 %v306
      %v919 = vunpack.c.l.b16 %v307
      %v920 = vunpack.c.h.b16 %v307
      %v921 = vunpack.c.l.b16 %v308
      %v922 = vunpack.c.h.b16 %v308
      %v923 = vunpack.c.l.b16 %v309
      %v924 = vunpack.c.h.b16 %v309
      %v925 = vunpack.c.l.b16 %v310
      %v926 = vunpack.c.h.b16 %v310
      %v927 = vunpack.c.l.b16 %v311
      %v928 = vunpack.c.h.b16 %v311
      %v929 = vunpack.c.l.b16 %v312
      %v930 = vunpack.c.h.b16 %v312
      %v931 = vunpack.c.l.b16 %v313
      %v932 = vunpack.c.h.b16 %v313
      %v933 = vunpack.c.l.b16 %v314
      %v934 = vunpack.c.h.b16 %v314
      %v935 = vunpack.c.l.b16 %v315
      %v936 = vunpack.c.h.b16 %v315
      %v937 = vunpack.c.l.b16 %v316
      %v938 = vunpack.c.h.b16 %v316
      %v939 = vunpack.c.l.b16 %v317
      %v940 = vunpack.c.h.b16 %v317
      %v941 = vunpack.c.l.b16 %v318
      %v942 = vunpack.c.h.b16 %v318
      %v943 = vunpack.c.l.b16 %v319
      %v944 = vunpack.c.h.b16 %v319
      %v945 = vunpack.c.l.b16 %v320
      %v946 = vunpack.c.h.b16 %v320
      %v947 = vunpack.c.l.b16 %v321
      %v948 = vunpack.c.h.b16 %v321
      %v949 = vunpack.c.l.b16 %v322
      %v950 = vunpack.c.h.b16 %v322
      %v951 = vunpack.c.l.b16 %v323
      %v952 = vunpack.c.h.b16 %v323
      %v953 = vunpack.c.l.b16 %v324
      %v954 = vunpack.c.h.b16 %v324
      %v955 = vunpack.c.l.b16 %v325
      %v956 = vunpack.c.h.b16 %v325
      %v957 = vunpack.c.l.b16 %v326
      %v958 = vunpack.c.h.b16 %v326
      %v959 = vunpack.c.l.b16 %v327
      %v960 = vunpack.c.h.b16 %v327
      %v961 = vunpack.c.l.b16 %v328
      %v962 = vunpack.c.h.b16 %v328
      %v963 = vunpack.c.l.b16 %v329
      %v964 = vunpack.c.h.b16 %v329
      %v965 = vunpack.c.l.b16 %v330
      %v966 = vunpack.c.h.b16 %v330
      %v967 = vunpack.c.l.b16 %v331
      %v968 = vunpack.c.h.b16 %v331
      %v969 = vunpack.c.l.b16 %v332
      %v970 = vunpack.c.h.b16 %v332
      %v971 = vunpack.c.l.b16 %v333
      %v972 = vunpack.c.h.b16 %v333
      %v973 = vunpack.c.l.b16 %v334
      %v974 = vunpack.c.h.b16 %v334
      %v975 = vunpack.c.l.b16 %v335
      %v976 = vunpack.c.h.b16 %v335
      %v977 = vunpack.c.l.b16 %v336
      %v978 = vunpack.c.h.b16 %v336
      %v979 = vunpack.c.l.b16 %v337
      %v980 = vunpack.c.h.b16 %v337
      %v981 = vunpack.c.l.b16 %v338
      %v982 = vunpack.c.h.b16 %v338
      %v983 = vunpack.c.l.b16 %v339
      %v984 = vunpack.c.h.b16 %v339
      %v985 = vunpack.c.l.b16 %v340
      %v986 = vunpack.c.h.b16 %v340
      %v987 = vunpack.c.l.b16 %v341
      %v988 = vunpack.c.h.b16 %v341
      %v989 = vunpack.c.l.b16 %v342
      %v990 = vunpack.c.h.b16 %v342
      %v991 = vunpack.c.l.b16 %v343
      %v992 = vunpack.c.h.b16 %v343
      %v993 = vunpack.c.l.b16 %v344
      %v994 = vunpack.c.h.b16 %v344
      %v995 = vunpack.c.l.b16 %v345
      %v996 = vunpack.c.h.b16 %v345
      %v997 = vunpack.c.l.b16 %v346
      %v998 = vunpack.c.h.b16 %v346
      %v999 = vunpack.c.l.b16 %v347
      %v1000 = vunpack.c.h.b16 %v347
      %v1001 = vunpack.c.l.b16 %v348
      %v1002 = vunpack.c.h.b16 %v348
      %v1003 = vunpack.c.l.b16 %v349
      %v1004 = vunpack.c.h.b16 %v349
      %v1005 = vunpack.c.l.b16 %v350
      %v1006 = vunpack.c.h.b16 %v350
      %v1007 = vunpack.c.l.b16 %v351
      %v1008 = vunpack.c.h.b16 %v351
      %v1009 = vunpack.c.l.b16 %v352
      %v1010 = vunpack.c.h.b16 %v352
      %v1011 = vunpack.c.l.b16 %v353
      %v1012 = vunpack.c.h.b16 %v353
      %v1013 = vunpack.c.l.b16 %v354
      %v1014 = vunpack.c.h.b16 %v354
      %v1015 = vunpack.c.l.b16 %v355
      %v1016 = vunpack.c.h.b16 %v355
      %v1017 = vunpack.c.l.b16 %v356
      %v1018 = vunpack.c.h.b16 %v356
      %v1019 = vunpack.c.l.b16 %v357
      %v1020 = vunpack.c.h.b16 %v357
      %v1021 = vunpack.c.l.b16 %v358
      %v1022 = vunpack.c.h.b16 %v358
      %v1023 = vunpack.c.l.b16 %v359
      %v1024 = vunpack.c.h.b16 %v359
      %v1025 = vunpack.c.l.b16 %v360
      %v1026 = vunpack.c.h.b16 %v360
      %v1027 = vunpack.c.l.b16 %v361
      %v1028 = vunpack.c.h.b16 %v361
      %v1029 = vunpack.c.l.b16 %v362
      %v1030 = vunpack.c.h.b16 %v362
      %v1031 = vunpack.c.l.b16 %v363
      %v1032 = vunpack.c.h.b16 %v363
      %v1033 = vunpack.c.l.b16 %v364
      %v1034 = vunpack.c.h.b16 %v364
      %v1035 = vunpack.c.l.b16 %v365
      %v1036 = vunpack.c.h.b16 %v365
      %v1037 = vunpack.c.l.b16 %v366
      %v1038 = vunpack.c.h.b16 %v366
      %v1039 = vunpack.c.l.b16 %v367
      %v1040 = vunpack.c.h.b16 %v367
      %v1041 = vunpack.c.l.b16 %v368
      %v1042 = vunpack.c.h.b16 %v368
      %v1043 = vunpack.c.l.b16 %v369
      %v1044 = vunpack.c.h.b16 %v369
      %v1045 = vpack.c.b16 %v667, %v661
      %v1046 = vpack.c.b16 %v668, %v662
      %v1047 = vpack.c.b16 %v669, %v663
      %v1048 = vpack.c.b16 %v670, %v664
      %v1049 = vpack.c.b16 %v671, %v665
      %v1050 = vpack.c.b16 %v672, %v666
      %v1051 = vpack.c.b16 %v679, %v673
      %v1052 = vpack.c.b16 %v680, %v674
      %v1053 = vpack.c.b16 %v681, %v675
      %v1054 = vpack.c.b16 %v682, %v676
      %v1055 = vpack.c.b16 %v683, %v677
      %v1056 = vpack.c.b16 %v684, %v678
      %v1057 = vpack.c.b16 %v691, %v685
      %v1058 = vpack.c.b16 %v692, %v686
      %v1059 = vpack.c.b16 %v693, %v687
      %v1060 = vpack.c.b16 %v694, %v688
      %v1061 = vpack.c.b16 %v695, %v689
      %v1062 = vpack.c.b16 %v696, %v690
      %v1063 = vpack.c.b16 %v703, %v697
      %v1064 = vpack.c.b16 %v704, %v698
      %v1065 = vpack.c.b16 %v705, %v699
      %v1066 = vpack.c.b16 %v706, %v700
      %v1067 = vpack.c.b16 %v707, %v701
      %v1068 = vpack.c.b16 %v708, %v702
      %v1069 = vpack.c.b16 %v715, %v709
      %v1070 = vpack.c.b16 %v716, %v710
      %v1071 = vpack.c.b16 %v717, %v711
      %v1072 = vpack.c.b16 %v718, %v712
      %v1073 = vpack.c.b16 %v719, %v713
      %v1074 = vpack.c.b16 %v720, %v714
      %v1075 = vpack.c.b16 %v727, %v721
      %v1076 = vpack.c.b16 %v728, %v722
      %v1077 = vpack.c.b16 %v729, %v723
      %v1078 = vpack.c.b16 %v730, %v724
      %v1079 = vpack.c.b16 %v731, %v725
      %v1080 = vpack.c.b16 %v732, %v726
      %v1081 = vpack.c.b16 %v739, %v733
      %v1082 = vpack.c.b16 %v740, %v734
      %v1083 = vpack.c.b16 %v741, %v735
      %v1084 = vpack.c.b16 %v742, %v736
      %v1085 = vpack.c.b16 %v743, %v737
      %v1086 = vpack.c.b16 %v744, %v738
      %v1087 = vpack.c.b16 %v751, %v745
      %v1088 = vpack.c.b16 %v752, %v746
      %v1089 = vpack.c.b16 %v753, %v747
      %v1090 = vpack.c.b16 %v754, %v748
      %v1091 = vpack.c.b16 %v755, %v749
      %v1092 = vpack.c.b16 %v756, %v750
      %v1093 = vpack.c.b16 %v763, %v757
      %v1094 = vpack.c.b16 %v764, %v758
      %v1095 = vpack.c.b16 %v765, %v759
      %v1096 = vpack.c.b16 %v766, %v760
      %v1097 = vpack.c.b16 %v767, %v761
      %v1098 = vpack.c.b16 %v768, %v762
      %v1099 = vpack.c.b16 %v775, %v769
      %v1100 = vpack.c.b16 %v776, %v770
      %v1101 = vpack.c.b16 %v777, %v771
      %v1102 = vpack.c.b16 %v778, %v772
      %v1103 = vpack.c.b16 %v779, %v773
      %v1104 = vpack.c.b16 %v780, %v774
      %v1105 = vpack.c.b16 %v787, %v781
      %v1106 = vpack.c.b16 %v788, %v782
      %v1107 = vpack.c.b16 %v789, %v783
      %v1108 = vpack.c.b16 %v790, %v784
      %v1109 = vpack.c.b16 %v791, %v785
      %v1110 = vpack.c.b16 %v792, %v786
      %v1111 = vpack.c.b16 %v799, %v793
      %v1112 = vpack.c.b16 %v800, %v794
      %v1113 = vpack.c.b16 %v801, %v795
      %v1114 = vpack.c.b16 %v802, %v796
      %v1115 = vpack.c.b16 %v803, %v797
      %v1116 = vpack.c.b16 %v804, %v798
      %v1117 = vpack.c.b16 %v811, %v805
      %v1118 = vpack.c.b16 %v812, %v806
      %v1119 = vpack.c.b16 %v813, %v807
      %v1120 = vpack.c.b16 %v814, %v808
      %v1121 = vpack.c.b16 %v815, %v809
      %v1122 = vpack.c.b16 %v816, %v810
      %v1123 = vpack.c.b16 %v823, %v817
      %v1124 = vpack.c.b16 %v824, %v818
      %v1125 = vpack.c.b16 %v825, %v819
      %v1126 = vpack.c.b16 %v826, %v820
      %v1127 = vpack.c.b16 %v827, %v821
      %v1128 = vpack.c.b16 %v828, %v822
      %v1129 = vpack.c.b16 %v835, %v829
      %v1130 = vpack.c.b16 %v836, %v830
      %v1131 = vpack.c.b16 %v837, %v831
      %v1132 = vpack.c.b16 %v838, %v832
      %v1133 = vpack.c.b16 %v839, %v833
      %v1134 = vpack.c.b16 %v840, %v834
      %v1135 = vpack.c.b16 %v847, %v841
      %v1136 = vpack.c.b16 %v848, %v842
      %v1137 = vpack.c.b16 %v849, %v843
      %v1138 = vpack.c.b16 %v850, %v844
      %v1139 = vpack.c.b16 %v851, %v845
      %v1140 = vpack.c.b16 %v852, %v846
      %v1141 = vpack.c.b16 %v859, %v853
      %v1142 = vpack.c.b16 %v860, %v854
      %v1143 = vpack.c.b16 %v861, %v855
      %v1144 = vpack.c.b16 %v862, %v856
      %v1145 = vpack.c.b16 %v863, %v857
      %v1146 = vpack.c.b16 %v864, %v858
      %v1147 = vpack.c.b16 %v871, %v865
      %v1148 = vpack.c.b16 %v872, %v866
      %v1149 = vpack.c.b16 %v873, %v867
      %v1150 = vpack.c.b16 %v874, %v868
      %v1151 = vpack.c.b16 %v875, %v869
      %v1152 = vpack.c.b16 %v876, %v870
      %v1153 = vpack.c.b16 %v883, %v877
      %v1154 = vpack.c.b16 %v884, %v878
      %v1155 = vpack.c.b16 %v885, %v879
      %v1156 = vpack.c.b16 %v886, %v880
      %v1157 = vpack.c.b16 %v887, %v881
      %v1158 = vpack.c.b16 %v888, %v882
      %v1159 = vpack.c.b16 %v895, %v889
      %v1160 = vpack.c.b16 %v896, %v890
      %v1161 = vpack.c.b16 %v897, %v891
      %v1162 = vpack.c.b16 %v898, %v892
      %v1163 = vpack.c.b16 %v899, %v893
      %v1164 = vpack.c.b16 %v900, %v894
      %v1165 = vpack.c.b16 %v907, %v901
      %v1166 = vpack.c.b16 %v908, %v902
      %v1167 = vpack.c.b16 %v909, %v903
      %v1168 = vpack.c.b16 %v910, %v904
      %v1169 = vpack.c.b16 %v911, %v905
      %v1170 = vpack.c.b16 %v912, %v906
      %v1171 = vpack.c.b16 %v919, %v913
      %v1172 = vpack.c.b16 %v920, %v914
      %v1173 = vpack.c.b16 %v921, %v915
      %v1174 = vpack.c.b16 %v922, %v916
      %v1175 = vpack.c.b16 %v923, %v917
      %v1176 = vpack.c.b16 %v924, %v918
      %v1177 = vpack.c.b16 %v931, %v925
      %v1178 = vpack.c.b16 %v932, %v926
      %v1179 = vpack.c.b16 %v933, %v927
      %v1180 = vpack.c.b16 %v934, %v928
      %v1181 = vpack.c.b16 %v935, %v929
      %v1182 = vpack.c.b16 %v936, %v930
      %v1183 = vpack.c.b16 %v943, %v937
      %v1184 = vpack.c.b16 %v944, %v938
      %v1185 = vpack.c.b16 %v945, %v939
      %v1186 = vpack.c.b16 %v946, %v940
      %v1187 = vpack.c.b16 %v947, %v941
      %v1188 = vpack.c.b16 %v948, %v942
      %v1189 = vpack.c.b16 %v955, %v949
      %v1190 = vpack.c.b16 %v956, %v950
      %v1191 = vpack.c.b16 %v957, %v951
      %v1192 = vpack.c.b16 %v958, %v952
      %v1193 = vpack.c.b16 %v959, %v953
      %v1194 = vpack.c.b16 %v960, %v954
      %v1195 = vpack.c.b16 %v967, %v961
      %v1196 = vpack.c.b16 %v968, %v962
      %v1197 = vpack.c.b16 %v969, %v963
      %v1198 = vpack.c.b16 %v970, %v964
      %v1199 = vpack.c.b16 %v971, %v965
      %v1200 = vpack.c.b16 %v972, %v966
      %v1201 = vpack.c.b16 %v979, %v973
      %v1202 = vpack.c.b16 %v980, %v974
      %v1203 = vpack.c.b16 %v981, %v975
      %v1204 = vpack.c.b16 %v982, %v976
      %v1205 = vpack.c.b16 %v983, %v977
      %v1206 = vpack.c.b16 %v984, %v978
      %v1207 = vpack.c.b16 %v991, %v985
      %v1208 = vpack.c.b16 %v992, %v986
      %v1209 = vpack.c.b16 %v993, %v987
      %v1210 = vpack.c.b16 %v994, %v988
      %v1211 = vpack.c.b16 %v995, %v989
      %v1212 = vpack.c.b16 %v996, %v990
      %v1213 = vpack.c.b16 %v1003, %v997
      %v1214 = vpack.c.b16 %v1004, %v998
      %v1215 = vpack.c.b16 %v1005, %v999
      %v1216 = vpack.c.b16 %v1006, %v1000
      %v1217 = vpack.c.b16 %v1007, %v1001
      %v1218 = vpack.c.b16 %v1008, %v1002
      %v1219 = vpack.c.b16 %v1015, %v1009
      %v1220 = vpack.c.b16 %v1016, %v1010
      %v1221 = vpack.c.b16 %v1017, %v1011
      %v1222 = vpack.c.b16 %v1018, %v1012
      %v1223 = vpack.c.b16 %v1019, %v1013
      %v1224 = vpack.c.b16 %v1020, %v1014
      %v1225 = vpack.c.b16 %v1027, %v1021
      %v1226 = vpack.c.b16 %v1028, %v1022
      %v1227 = vpack.c.b16 %v1029, %v1023
      %v1228 = vpack.c.b16 %v1030, %v1024
      %v1229 = vpack.c.b16 %v1031, %v1025
      %v1230 = vpack.c.b16 %v1032, %v1026
      %v1231 = vpack.c.b16 %v1039, %v1033
      %v1232 = vpack.c.b16 %v1040, %v1034
      %v1233 = vpack.c.b16 %v1041, %v1035
      %v1234 = vpack.c.b16 %v1042, %v1036
      %v1235 = vpack.c.b16 %v1043, %v1037
      %v1236 = vpack.c.b16 %v1044, %v1038
      %v1489 = vunpack.c.l.b16 %v370
      %v1490 = vunpack.c.l.b16 %v371
      %v1491 = vunpack.c.l.b16 %v372
      %v1492 = vunpack.c.l.b16 %v373
      %v1493 = vunpack.c.l.b16 %v374
      %v1494 = vunpack.c.l.b16 %v375
      %v1495 = vunpack.c.l.b16 %v376
      %v1496 = vunpack.c.l.b16 %v377
      %v1497 = vunpack.c.l.b16 %v378
      %v1498 = vunpack.c.l.b16 %v379
      %v1499 = vunpack.c.l.b16 %v380
      %v1500 = vunpack.c.l.b16 %v381
      %v1501 = vunpack.c.l.b16 %v382
      %v1502 = vunpack.c.l.b16 %v383
      %v1503 = vunpack.c.l.b16 %v384
      %v1504 = vunpack.c.l.b16 %v385
      %v1505 = vunpack.c.l.b16 %v386
      %v1506 = vunpack.c.l.b16 %v387
      %v1507 = vunpack.c.l.b16 %v388
      %v1508 = vunpack.c.l.b16 %v389
      %v1509 = vunpack.c.l.b16 %v390
      %v1510 = vunpack.c.l.b16 %v391
      %v1511 = vunpack.c.l.b16 %v392
      %v1512 = vunpack.c.l.b16 %v393
      %v1513 = vunpack.c.l.b16 %v394
      %v1514 = vunpack.c.l.b16 %v395
      %v1515 = vunpack.c.l.b16 %v396
      %v1516 = vunpack.c.l.b16 %v397
      %v1517 = vunpack.c.l.b16 %v398
      %v1518 = vunpack.c.l.b16 %v399
      %v1519 = vunpack.c.l.b16 %v400
      %v1520 = vunpack.c.l.b16 %v401
      %v1521 = vunpack.c.l.b16 %v402
      %v1522 = vunpack.c.l.b16 %v403
      %v1523 = vunpack.c.l.b16 %v404
      %v1524 = vunpack.c.l.b16 %v405
      %v1525 = vunpack.c.l.b16 %v406
      %v1526 = vunpack.c.l.b16 %v407
      %v1527 = vunpack.c.l.b16 %v408
      %v1528 = vunpack.c.l.b16 %v409
      %v1529 = vunpack.c.l.b16 %v410
      %v1530 = vunpack.c.l.b16 %v411
      %v1531 = vunpack.c.l.b16 %v412
      %v1532 = vunpack.c.l.b16 %v413
      %v1533 = vunpack.c.l.b16 %v414
      %v1534 = vunpack.c.l.b16 %v415
      %v1535 = vunpack.c.l.b16 %v416
      %v1536 = vunpack.c.l.b16 %v417
      %v1537 = vunpack.c.l.b16 %v418
      %v1538 = vunpack.c.l.b16 %v419
      %v1539 = vunpack.c.l.b16 %v420
      %v1540 = vunpack.c.l.b16 %v421
      %v1541 = vunpack.c.l.b16 %v422
      %v1542 = vunpack.c.l.b16 %v423
      %v1543 = vunpack.c.l.b16 %v424
      %v1544 = vunpack.c.l.b16 %v425
      %v1545 = vunpack.c.l.b16 %v426
      %v1546 = vunpack.c.l.b16 %v427
      %v1547 = vunpack.c.l.b16 %v428
      %v1548 = vunpack.c.l.b16 %v429
      %v1549 = vunpack.c.l.b16 %v430
      %v1550 = vunpack.c.l.b16 %v431
      %v1551 = vunpack.c.l.b16 %v432
      %v1552 = vunpack.c.l.b16 %v433
      %v1553 = vunpack.c.l.b16 %v434
      %v1554 = vunpack.c.l.b16 %v435
      %v1555 = vunpack.c.l.b16 %v436
      %v1556 = vunpack.c.l.b16 %v437
      %v1557 = vunpack.c.l.b16 %v438
      %v1558 = vunpack.c.l.b16 %v439
      %v1559 = vunpack.c.l.b16 %v440
      %v1560 = vunpack.c.l.b16 %v441
      %v1561 = vunpack.c.l.b16 %v442
      %v1562 = vunpack.c.l.b16 %v443
      %v1563 = vunpack.c.l.b16 %v444
      %v1564 = vunpack.c.l.b16 %v445
      %v1565 = vunpack.c.l.b16 %v446
      %v1566 = vunpack.c.l.b16 %v447
      %v1567 = vunpack.c.l.b16 %v448
      %v1568 = vunpack.c.l.b16 %v449
      %v1569 = vunpack.c.l.b16 %v450
      %v1570 = vunpack.c.l.b16 %v451
      %v1571 = vunpack.c.l.b16 %v452
      %v1572 = vunpack.c.l.b16 %v453
      %v1573 = vunpack.c.l.b16 %v454
      %v1574 = vunpack.c.l.b16 %v455
      %v1575 = vunpack.c.l.b16 %v456
      %v1576 = vunpack.c.l.b16 %v457
      %v1577 = vunpack.c.l.b16 %v458
      %v1578 = vunpack.c.l.b16 %v459
      %v1579 = vunpack.c.l.b16 %v460
      %v1580 = vunpack.c.l.b16 %v461
      %v1581 = vpack.c.b16 %v1490, %v1489
      %v1582 = vpack.c.b16 %v1492, %v1491
      %v1583 = vpack.c.b16 %v1494, %v1493
      %v1584 = vpack.c.b16 %v1496, %v1495
      %v1585 = vpack.c.b16 %v1498, %v1497
      %v1586 = vpack.c.b16 %v1500, %v1499
      %v1587 = vpack.c.b16 %v1502, %v1501
      %v1588 = vpack.c.b16 %v1504, %v1503
      %v1589 = vpack.c.b16 %v1506, %v1505
      %v1590 = vpack.c.b16 %v1508, %v1507
      %v1591 = vpack.c.b16 %v1510, %v1509
      %v1592 = vpack.c.b16 %v1512, %v1511
      %v1593 = vpack.c.b16 %v1514, %v1513
      %v1594 = vpack.c.b16 %v1516, %v1515
      %v1595 = vpack.c.b16 %v1518, %v1517
      %v1596 = vpack.c.b16 %v1520, %v1519
      %v1597 = vpack.c.b16 %v1522, %v1521
      %v1598 = vpack.c.b16 %v1524, %v1523
      %v1599 = vpack.c.b16 %v1526, %v1525
      %v1600 = vpack.c.b16 %v1528, %v1527
      %v1601 = vpack.c.b16 %v1530, %v1529
      %v1602 = vpack.c.b16 %v1532, %v1531
      %v1603 = vpack.c.b16 %v1534, %v1533
      %v1604 = vpack.c.b16 %v1536, %v1535
      %v1605 = vpack.c.b16 %v1538, %v1537
      %v1606 = vpack.c.b16 %v1540, %v1539
      %v1607 = vpack.c.b16 %v1542, %v1541
      %v1608 = vpack.c.b16 %v1544, %v1543
      %v1609 = vpack.c.b16 %v1546, %v1545
      %v1610 = vpack.c.b16 %v1548, %v1547
      %v1611 = vpack.c.b16 %v1550, %v1549
      %v1612 = vpack.c.b16 %v1552, %v1551
      %v1613 = vpack.c.b16 %v1554, %v1553
      %v1614 = vpack.c.b16 %v1556, %v1555
      %v1615 = vpack.c.b16 %v1558, %v1557
      %v1616 = vpack.c.b16 %v1560, %v1559
      %v1617 = vpack.c.b16 %v1562, %v1561
      %v1618 = vpack.c.b16 %v1564, %v1563
      %v1619 = vpack.c.b16 %v1566, %v1565
      %v1620 = vpack.c.b16 %v1568, %v1567
      %v1621 = vpack.c.b16 %v1570, %v1569
      %v1622 = vpack.c.b16 %v1572, %v1571
      %v1623 = vpack.c.b16 %v1574, %v1573
      %v1624 = vpack.c.b16 %v1576, %v1575
      %v1625 = vpack.c.b16 %v1578, %v1577
      %v1626 = vpack.c.b16 %v1580, %v1579
      %vm1672 = vcmask 777216
      %v1674 = vsel %vm1672, %v1050, 0
      %v1677 = vsel %vm1672, %v1056, 0
      %v1680 = vsel %vm1672, %v1062, 0
      %v1683 = vsel %vm1672, %v1068, 0
      %v1686 = vsel %vm1672, %v1074, 0
      %v1689 = vsel %vm1672, %v1080, 0
      %v1692 = vsel %vm1672, %v1086, 0
      %v1695 = vsel %vm1672, %v1092, 0
      %v1698 = vsel %vm1672, %v1098, 0
      %v1701 = vsel %vm1672, %v1104, 0
      %v1704 = vsel %vm1672, %v1110, 0
      %v1707 = vsel %vm1672, %v1116, 0
      %v1710 = vsel %vm1672, %v1122, 0
      %v1713 = vsel %vm1672, %v1128, 0
      %v1716 = vsel %vm1672, %v1134, 0
      %v1719 = vsel %vm1672, %v1140, 0
      %v1722 = vsel %vm1672, %v1146, 0
      %v1725 = vsel %vm1672, %v1152, 0
      %v1728 = vsel %vm1672, %v1158, 0
      %v1731 = vsel %vm1672, %v1164, 0
      %v1734 = vsel %vm1672, %v1170, 0
      %v1737 = vsel %vm1672, %v1176, 0
      %v1740 = vsel %vm1672, %v1182, 0
      %v1743 = vsel %vm1672, %v1188, 0
      %v1746 = vsel %vm1672, %v1194, 0
      %v1749 = vsel %vm1672, %v1200, 0
      %v1752 = vsel %vm1672, %v1206, 0
      %v1755 = vsel %vm1672, %v1212, 0
      %v1758 = vsel %vm1672, %v1218, 0
      %v1761 = vsel %vm1672, %v1224, 0
      %v1764 = vsel %vm1672, %v1230, 0
      %v1767 = vsel %vm1672, %v1236, 0
      %vm1769 = vcmask 1046528
      %vm1770 = vcmask 1047552
      %v1771 = vsel %vm1769, 4294967295, 65535
      %v1772 = vsel %vm1770, %v1771, 0
      %v1774 = vand.u32 %v1626, %v1772
      %1776 = vmatprep.subr.bf16.mxu0 0
      %1777 = vmatpush1.bf16.msra.mxu0 %v1581
      %1778 = vmatprep.subr.bf16.mxu0 0
      %1779 = vmatpush1.bf16.msra.mxu0 %v1582
      %1780 = vmatprep.subr.bf16.mxu0 0
      %1781 = vmatpush1.bf16.msra.mxu0 %v1583
      %1782 = vmatprep.subr.bf16.mxu0 0
      %1783 = vmatpush1.bf16.msra.mxu0 %v1584
      %1784 = vmatprep.subr.bf16.mxu0 0
      %1785 = vmatpush1.bf16.msra.mxu0 %v1585
      %1786 = vmatprep.subr.bf16.mxu0 0
      %1787 = vmatpush1.bf16.msra.mxu0 %v1586
      %1788 = vmatprep.subr.bf16.mxu0 0
      %1789 = vmatpush1.bf16.msra.mxu0 %v1587
      %1790 = vmatprep.subr.bf16.mxu0 0
      %1791 = vmatpush1.bf16.msra.mxu0 %v1588
      %1792 = vmatprep.subr.bf16.mxu0 0
      %1793 = vmatpush1.bf16.msra.mxu0 %v1589
      %1794 = vmatprep.subr.bf16.mxu0 0
      %1795 = vmatpush1.bf16.msra.mxu0 %v1590
      %1796 = vmatprep.subr.bf16.mxu0 0
      %1797 = vmatpush1.bf16.msra.mxu0 %v1591
      %1798 = vmatprep.subr.bf16.mxu0 0
      %1799 = vmatpush1.bf16.msra.mxu0 %v1592
      %1800 = vmatprep.subr.bf16.mxu0 0
      %1801 = vmatpush1.bf16.msra.mxu0 %v1593
      %1802 = vmatprep.subr.bf16.mxu0 0
      %1803 = vmatpush1.bf16.msra.mxu0 %v1594
      %1804 = vmatprep.subr.bf16.mxu0 0
      %1805 = vmatpush1.bf16.msra.mxu0 %v1595
      %1806 = vmatprep.subr.bf16.mxu0 0
      %1807 = vmatpush1.bf16.msra.mxu0 %v1596
      %1808 = vmatprep.mubr.bf16.mxu0 %v1046
      %1809 = vmatmul.mubr.bf16.gmra.mrb[0].mxu0 %v1045
      %v1810 = vpop.f32.mrb[0].mxu0
      %v1811 = vadd.f32 %v467, %v1810
      %v1812 = vpop.f32.mrb[0].mxu0
      %v1813 = vpop.f32.mrb[0].mxu0
      %v1814 = vadd.f32 %v467, %v1813
      %v1815 = vpop.f32.mrb[0].mxu0
      %1816 = vmatprep.mubr.bf16.mxu0 %v1052
      %1817 = vmatmul.mubr.bf16.gmra.mrb[0].mxu0 %v1051
      %v1818 = vpop.f32.mrb[0].mxu0
      %v1819 = vadd.f32 %v467, %v1818
      %v1820 = vpop.f32.mrb[0].mxu0
      %v1821 = vpop.f32.mrb[0].mxu0
      %v1822 = vadd.f32 %v467, %v1821
      %v1823 = vpop.f32.mrb[0].mxu0
      %1824 = vmatprep.mubr.bf16.mxu0 %v1058
      %1825 = vmatmul.mubr.bf16.gmra.mrb[0].mxu0 %v1057
      %v1826 = vpop.f32.mrb[0].mxu0
      %v1827 = vadd.f32 %v467, %v1826
      %v1828 = vpop.f32.mrb[0].mxu0
      %v1829 = vpop.f32.mrb[0].mxu0
      %v1830 = vadd.f32 %v467, %v1829
      %v1831 = vpop.f32.mrb[0].mxu0
      %1832 = vmatprep.mubr.bf16.mxu0 %v1064
      %1833 = vmatmul.mubr.bf16.gmra.mrb[0].mxu0 %v1063
      %v1834 = vpop.f32.mrb[0].mxu0
      %v1835 = vadd.f32 %v467, %v1834
      %v1836 = vpop.f32.mrb[0].mxu0
      %v1837 = vpop.f32.mrb[0].mxu0
      %v1838 = vadd.f32 %v467, %v1837
      %v1839 = vpop.f32.mrb[0].mxu0
      %1840 = vmatprep.mubr.bf16.mxu0 %v1070
      %1841 = vmatmul.mubr.bf16.gmra.mrb[0].mxu0 %v1069
      %v1842 = vpop.f32.mrb[0].mxu0
      %v1843 = vadd.f32 %v467, %v1842
      %v1844 = vpop.f32.mrb[0].mxu0
      %v1845 = vpop.f32.mrb[0].mxu0
      %v1846 = vadd.f32 %v467, %v1845
      %v1847 = vpop.f32.mrb[0].mxu0
      %1848 = vmatprep.mubr.bf16.mxu0 %v1076
      %1849 = vmatmul.mubr.bf16.gmra.mrb[0].mxu0 %v1075
      %v1850 = vpop.f32.mrb[0].mxu0
      %v1851 = vadd.f32 %v467, %v1850
      %v1852 = vpop.f32.mrb[0].mxu0
      %v1853 = vpop.f32.mrb[0].mxu0
      %v1854 = vadd.f32 %v467, %v1853
      %v1855 = vpop.f32.mrb[0].mxu0
      %1856 = vmatprep.mubr.bf16.mxu0 %v1082
      %1857 = vmatmul.mubr.bf16.gmra.mrb[0].mxu0 %v1081
      %v1858 = vpop.f32.mrb[0].mxu0
      %v1859 = vadd.f32 %v467, %v1858
      %v1860 = vpop.f32.mrb[0].mxu0
      %v1861 = vpop.f32.mrb[0].mxu0
      %v1862 = vadd.f32 %v467, %v1861
      %v1863 = vpop.f32.mrb[0].mxu0
      %1864 = vmatprep.mubr.bf16.mxu0 %v1088
      %1865 = vmatmul.mubr.bf16.gmra.mrb[0].mxu0 %v1087
      %v1866 = vpop.f32.mrb[0].mxu0
      %v1867 = vadd.f32 %v467, %v1866
      %v1868 = vpop.f32.mrb[0].mxu0
      %v1869 = vpop.f32.mrb[0].mxu0
      %v1870 = vadd.f32 %v467, %v1869
      %v1871 = vpop.f32.mrb[0].mxu0
      %1872 = vmatprep.mubr.bf16.mxu0 %v1094
      %1873 = vmatmul.mubr.bf16.gmra.mrb[0].mxu0 %v1093
      %v1874 = vpop.f32.mrb[0].mxu0
      %v1875 = vadd.f32 %v467, %v1874
      %v1876 = vpop.f32.mrb[0].mxu0
      %v1877 = vpop.f32.mrb[0].mxu0
      %v1878 = vadd.f32 %v467, %v1877
      %v1879 = vpop.f32.mrb[0].mxu0
      %1880 = vmatprep.mubr.bf16.mxu0 %v1100
      %1881 = vmatmul.mubr.bf16.gmra.mrb[0].mxu0 %v1099
      %v1882 = vpop.f32.mrb[0].mxu0
      %v1883 = vadd.f32 %v467, %v1882
      %v1884 = vpop.f32.mrb[0].mxu0
      %v1885 = vpop.f32.mrb[0].mxu0
      %v1886 = vadd.f32 %v467, %v1885
      %v1887 = vpop.f32.mrb[0].mxu0
      %1888 = vmatprep.mubr.bf16.mxu0 %v1106
      %1889 = vmatmul.mubr.bf16.gmra.mrb[0].mxu0 %v1105
      %v1890 = vpop.f32.mrb[0].mxu0
      %v1891 = vadd.f32 %v467, %v1890
      %v1892 = vpop.f32.mrb[0].mxu0
      %v1893 = vpop.f32.mrb[0].mxu0
      %v1894 = vadd.f32 %v467, %v1893
      %v1895 = vpop.f32.mrb[0].mxu0
      %1896 = vmatprep.mubr.bf16.mxu0 %v1112
      %1897 = vmatmul.mubr.bf16.gmra.mrb[0].mxu0 %v1111
      %v1898 = vpop.f32.mrb[0].mxu0
      %v1899 = vadd.f32 %v467, %v1898
      %v1900 = vpop.f32.mrb[0].mxu0
      %v1901 = vpop.f32.mrb[0].mxu0
      %v1902 = vadd.f32 %v467, %v1901
      %v1903 = vpop.f32.mrb[0].mxu0
      %1904 = vmatprep.mubr.bf16.mxu0 %v1118
      %1905 = vmatmul.mubr.bf16.gmra.mrb[0].mxu0 %v1117
      %v1906 = vpop.f32.mrb[0].mxu0
      %v1907 = vadd.f32 %v467, %v1906
      %v1908 = vpop.f32.mrb[0].mxu0
      %v1909 = vpop.f32.mrb[0].mxu0
      %v1910 = vadd.f32 %v467, %v1909
      %v1911 = vpop.f32.mrb[0].mxu0
      %1912 = vmatprep.mubr.bf16.mxu0 %v1124
      %1913 = vmatmul.mubr.bf16.gmra.mrb[0].mxu0 %v1123
      %v1914 = vpop.f32.mrb[0].mxu0
      %v1915 = vadd.f32 %v467, %v1914
      %v1916 = vpop.f32.mrb[0].mxu0
      %v1917 = vpop.f32.mrb[0].mxu0
      %v1918 = vadd.f32 %v467, %v1917
      %v1919 = vpop.f32.mrb[0].mxu0
      %1920 = vmatprep.mubr.bf16.mxu0 %v1130
      %1921 = vmatmul.mubr.bf16.gmra.mrb[0].mxu0 %v1129
      %v1922 = vpop.f32.mrb[0].mxu0
      %v1923 = vadd.f32 %v467, %v1922
      %v1924 = vpop.f32.mrb[0].mxu0
      %v1925 = vpop.f32.mrb[0].mxu0
      %v1926 = vadd.f32 %v467, %v1925
      %v1927 = vpop.f32.mrb[0].mxu0
      %1928 = vmatprep.mubr.bf16.mxu0 %v1136
      %1929 = vmatmul.mubr.bf16.gmra.mrb[0].mxu0 %v1135
      %v1930 = vpop.f32.mrb[0].mxu0
      %v1931 = vadd.f32 %v467, %v1930
      %v1932 = vpop.f32.mrb[0].mxu0
      %v1933 = vpop.f32.mrb[0].mxu0
      %v1934 = vadd.f32 %v467, %v1933
      %v1935 = vpop.f32.mrb[0].mxu0
      %1936 = vmatprep.mubr.bf16.mxu0 %v1142
      %1937 = vmatmul.mubr.bf16.gmra.mrb[0].mxu0 %v1141
      %v1938 = vpop.f32.mrb[0].mxu0
      %v1939 = vadd.f32 %v467, %v1938
      %v1940 = vpop.f32.mrb[0].mxu0
      %v1941 = vpop.f32.mrb[0].mxu0
      %v1942 = vadd.f32 %v467, %v1941
      %v1943 = vpop.f32.mrb[0].mxu0
      %1944 = vmatprep.mubr.bf16.mxu0 %v1148
      %1945 = vmatmul.mubr.bf16.gmra.mrb[0].mxu0 %v1147
      %v1946 = vpop.f32.mrb[0].mxu0
      %v1947 = vadd.f32 %v467, %v1946
      %v1948 = vpop.f32.mrb[0].mxu0
      %v1949 = vpop.f32.mrb[0].mxu0
      %v1950 = vadd.f32 %v467, %v1949
      %v1951 = vpop.f32.mrb[0].mxu0
      %1952 = vmatprep.mubr.bf16.mxu0 %v1154
      %1953 = vmatmul.mubr.bf16.gmra.mrb[0].mxu0 %v1153
      %v1954 = vpop.f32.mrb[0].mxu0
      %v1955 = vadd.f32 %v467, %v1954
      %v1956 = vpop.f32.mrb[0].mxu0
      %v1957 = vpop.f32.mrb[0].mxu0
      %v1958 = vadd.f32 %v467, %v1957
      %v1959 = vpop.f32.mrb[0].mxu0
      %1960 = vmatprep.mubr.bf16.mxu0 %v1160
      %1961 = vmatmul.mubr.bf16.gmra.mrb[0].mxu0 %v1159
      %v1962 = vpop.f32.mrb[0].mxu0
      %v1963 = vadd.f32 %v467, %v1962
      %v1964 = vpop.f32.mrb[0].mxu0
      %v1965 = vpop.f32.mrb[0].mxu0
      %v1966 = vadd.f32 %v467, %v1965
      %v1967 = vpop.f32.mrb[0].mxu0
      %1968 = vmatprep.mubr.bf16.mxu0 %v1166
      %1969 = vmatmul.mubr.bf16.gmra.mrb[0].mxu0 %v1165
      %v1970 = vpop.f32.mrb[0].mxu0
      %v1971 = vadd.f32 %v467, %v1970
      %v1972 = vpop.f32.mrb[0].mxu0
      %v1973 = vpop.f32.mrb[0].mxu0
      %v1974 = vadd.f32 %v467, %v1973
      %v1975 = vpop.f32.mrb[0].mxu0
      %1976 = vmatprep.mubr.bf16.mxu0 %v1172
      %1977 = vmatmul.mubr.bf16.gmra.mrb[0].mxu0 %v1171
      %v1978 = vpop.f32.mrb[0].mxu0
      %v1979 = vadd.f32 %v467, %v1978
      %v1980 = vpop.f32.mrb[0].mxu0
      %v1981 = vpop.f32.mrb[0].mxu0
      %v1982 = vadd.f32 %v467, %v1981
      %v1983 = vpop.f32.mrb[0].mxu0
      %1984 = vmatprep.mubr.bf16.mxu0 %v1178
      %1985 = vmatmul.mubr.bf16.gmra.mrb[0].mxu0 %v1177
      %v1986 = vpop.f32.mrb[0].mxu0
      %v1987 = vadd.f32 %v467, %v1986
      %v1988 = vpop.f32.mrb[0].mxu0
      %v1989 = vpop.f32.mrb[0].mxu0
      %v1990 = vadd.f32 %v467, %v1989
      %v1991 = vpop.f32.mrb[0].mxu0
      %1992 = vmatprep.mubr.bf16.mxu0 %v1184
      %1993 = vmatmul.mubr.bf16.gmra.mrb[0].mxu0 %v1183
      %v1994 = vpop.f32.mrb[0].mxu0
      %v1995 = vadd.f32 %v467, %v1994
      %v1996 = vpop.f32.mrb[0].mxu0
      %v1997 = vpop.f32.mrb[0].mxu0
      %v1998 = vadd.f32 %v467, %v1997
      %v1999 = vpop.f32.mrb[0].mxu0
      %2000 = vmatprep.mubr.bf16.mxu0 %v1190
      %2001 = vmatmul.mubr.bf16.gmra.mrb[0].mxu0 %v1189
      %v2002 = vpop.f32.mrb[0].mxu0
      %v2003 = vadd.f32 %v467, %v2002
      %v2004 = vpop.f32.mrb[0].mxu0
      %v2005 = vpop.f32.mrb[0].mxu0
      %v2006 = vadd.f32 %v467, %v2005
      %v2007 = vpop.f32.mrb[0].mxu0
      %2008 = vmatprep.mubr.bf16.mxu0 %v1196
      %2009 = vmatmul.mubr.bf16.gmra.mrb[0].mxu0 %v1195
      %v2010 = vpop.f32.mrb[0].mxu0
      %v2011 = vadd.f32 %v467, %v2010
      %v2012 = vpop.f32.mrb[0].mxu0
      %v2013 = vpop.f32.mrb[0].mxu0
      %v2014 = vadd.f32 %v467, %v2013
      %v2015 = vpop.f32.mrb[0].mxu0
      %2016 = vmatprep.mubr.bf16.mxu0 %v1202
      %2017 = vmatmul.mubr.bf16.gmra.mrb[0].mxu0 %v1201
      %v2018 = vpop.f32.mrb[0].mxu0
      %v2019 = vadd.f32 %v467, %v2018
      %v2020 = vpop.f32.mrb[0].mxu0
      %v2021 = vpop.f32.mrb[0].mxu0
      %v2022 = vadd.f32 %v467, %v2021
      %v2023 = vpop.f32.mrb[0].mxu0
      %2024 = vmatprep.mubr.bf16.mxu0 %v1208
      %2025 = vmatmul.mubr.bf16.gmra.mrb[0].mxu0 %v1207
      %v2026 = vpop.f32.mrb[0].mxu0
      %v2027 = vadd.f32 %v467, %v2026
      %v2028 = vpop.f32.mrb[0].mxu0
      %v2029 = vpop.f32.mrb[0].mxu0
      %v2030 = vadd.f32 %v467, %v2029
      %v2031 = vpop.f32.mrb[0].mxu0
      %2032 = vmatprep.mubr.bf16.mxu0 %v1214
      %2033 = vmatmul.mubr.bf16.gmra.mrb[0].mxu0 %v1213
      %v2034 = vpop.f32.mrb[0].mxu0
      %v2035 = vadd.f32 %v467, %v2034
      %v2036 = vpop.f32.mrb[0].mxu0
      %v2037 = vpop.f32.mrb[0].mxu0
      %v2038 = vadd.f32 %v467, %v2037
      %v2039 = vpop.f32.mrb[0].mxu0
      %2040 = vmatprep.mubr.bf16.mxu0 %v1220
      %2041 = vmatmul.mubr.bf16.gmra.mrb[0].mxu0 %v1219
      %v2042 = vpop.f32.mrb[0].mxu0
      %v2043 = vadd.f32 %v467, %v2042
      %v2044 = vpop.f32.mrb[0].mxu0
      %v2045 = vpop.f32.mrb[0].mxu0
      %v2046 = vadd.f32 %v467, %v2045
      %v2047 = vpop.f32.mrb[0].mxu0
      %2048 = vmatprep.mubr.bf16.mxu0 %v1226
      %2049 = vmatmul.mubr.bf16.gmra.mrb[0].mxu0 %v1225
      %v2050 = vpop.f32.mrb[0].mxu0
      %v2051 = vadd.f32 %v467, %v2050
      %v2052 = vpop.f32.mrb[0].mxu0
      %v2053 = vpop.f32.mrb[0].mxu0
      %v2054 = vadd.f32 %v467, %v2053
      %v2055 = vpop.f32.mrb[0].mxu0
      %2056 = vmatprep.mubr.bf16.mxu0 %v1232
      %2057 = vmatmul.mubr.bf16.gmra.mrb[0].mxu0 %v1231
      %v2058 = vpop.f32.mrb[0].mxu0
      %v2059 = vadd.f32 %v467, %v2058
      %v2060 = vpop.f32.mrb[0].mxu0
      %v2061 = vpop.f32.mrb[0].mxu0
      %v2062 = vadd.f32 %v467, %v2061
      %v2063 = vpop.f32.mrb[0].mxu0
      %2064 = vdwg.mxu0
      %2065 = vmatprep.subr.bf16.mxu0 0
      %2066 = vmatpush1.bf16.msra.mxu0 %v1597
      %2067 = vmatprep.subr.bf16.mxu0 0
      %2068 = vmatpush1.bf16.msra.mxu0 %v1598
      %2069 = vmatprep.subr.bf16.mxu0 0
      %2070 = vmatpush1.bf16.msra.mxu0 %v1599
      %2071 = vmatprep.subr.bf16.mxu0 0
      %2072 = vmatpush1.bf16.msra.mxu0 %v1600
      %2073 = vmatprep.subr.bf16.mxu0 0
      %2074 = vmatpush1.bf16.msra.mxu0 %v1601
      %2075 = vmatprep.subr.bf16.mxu0 0
      %2076 = vmatpush1.bf16.msra.mxu0 %v1602
      %2077 = vmatprep.subr.bf16.mxu0 0
      %2078 = vmatpush1.bf16.msra.mxu0 %v1603
      %2079 = vmatprep.subr.bf16.mxu0 0
      %2080 = vmatpush1.bf16.msra.mxu0 %v1604
      %2081 = vmatprep.subr.bf16.mxu0 0
      %2082 = vmatpush1.bf16.msra.mxu0 %v1605
      %2083 = vmatprep.subr.bf16.mxu0 0
      %2084 = vmatpush1.bf16.msra.mxu0 %v1606
      %2085 = vmatprep.subr.bf16.mxu0 0
      %2086 = vmatpush1.bf16.msra.mxu0 %v1607
      %2087 = vmatprep.subr.bf16.mxu0 0
      %2088 = vmatpush1.bf16.msra.mxu0 %v1608
      %2089 = vmatprep.subr.bf16.mxu0 0
      %2090 = vmatpush1.bf16.msra.mxu0 %v1609
      %2091 = vmatprep.subr.bf16.mxu0 0
      %2092 = vmatpush1.bf16.msra.mxu0 %v1610
      %2093 = vmatprep.subr.bf16.mxu0 0
      %2094 = vmatpush1.bf16.msra.mxu0 %v1611
      %2095 = vmatprep.subr.bf16.mxu0 0
      %2096 = vmatpush1.bf16.msra.mxu0 %v1612
      %2097 = vmatprep.mubr.bf16.mxu0 %v1048
      %2098 = vmatmul.mubr.bf16.gmra.mrb[0].mxu0 %v1047
      %v2099 = vpop.f32.mrb[0].mxu0
      %v2100 = vadd.f32 %v1811, %v2099
      %v2101 = vpop.f32.mrb[0].mxu0
      %v2102 = vpop.f32.mrb[0].mxu0
      %v2103 = vadd.f32 %v1814, %v2102
      %v2104 = vpop.f32.mrb[0].mxu0
      %2105 = vmatprep.mubr.bf16.mxu0 %v1054
      %2106 = vmatmul.mubr.bf16.gmra.mrb[0].mxu0 %v1053
      %v2107 = vpop.f32.mrb[0].mxu0
      %v2108 = vadd.f32 %v1819, %v2107
      %v2109 = vpop.f32.mrb[0].mxu0
      %v2110 = vpop.f32.mrb[0].mxu0
      %v2111 = vadd.f32 %v1822, %v2110
      %v2112 = vpop.f32.mrb[0].mxu0
      %2113 = vmatprep.mubr.bf16.mxu0 %v1060
      %2114 = vmatmul.mubr.bf16.gmra.mrb[0].mxu0 %v1059
      %v2115 = vpop.f32.mrb[0].mxu0
      %v2116 = vadd.f32 %v1827, %v2115
      %v2117 = vpop.f32.mrb[0].mxu0
      %v2118 = vpop.f32.mrb[0].mxu0
      %v2119 = vadd.f32 %v1830, %v2118
      %v2120 = vpop.f32.mrb[0].mxu0
      %2121 = vmatprep.mubr.bf16.mxu0 %v1066
      %2122 = vmatmul.mubr.bf16.gmra.mrb[0].mxu0 %v1065
      %v2123 = vpop.f32.mrb[0].mxu0
      %v2124 = vadd.f32 %v1835, %v2123
      %v2125 = vpop.f32.mrb[0].mxu0
      %v2126 = vpop.f32.mrb[0].mxu0
      %v2127 = vadd.f32 %v1838, %v2126
      %v2128 = vpop.f32.mrb[0].mxu0
      %2129 = vmatprep.mubr.bf16.mxu0 %v1072
      %2130 = vmatmul.mubr.bf16.gmra.mrb[0].mxu0 %v1071
      %v2131 = vpop.f32.mrb[0].mxu0
      %v2132 = vadd.f32 %v1843, %v2131
      %v2133 = vpop.f32.mrb[0].mxu0
      %v2134 = vpop.f32.mrb[0].mxu0
      %v2135 = vadd.f32 %v1846, %v2134
      %v2136 = vpop.f32.mrb[0].mxu0
      %2137 = vmatprep.mubr.bf16.mxu0 %v1078
      %2138 = vmatmul.mubr.bf16.gmra.mrb[0].mxu0 %v1077
      %v2139 = vpop.f32.mrb[0].mxu0
      %v2140 = vadd.f32 %v1851, %v2139
      %v2141 = vpop.f32.mrb[0].mxu0
      %v2142 = vpop.f32.mrb[0].mxu0
      %v2143 = vadd.f32 %v1854, %v2142
      %v2144 = vpop.f32.mrb[0].mxu0
      %2145 = vmatprep.mubr.bf16.mxu0 %v1084
      %2146 = vmatmul.mubr.bf16.gmra.mrb[0].mxu0 %v1083
      %v2147 = vpop.f32.mrb[0].mxu0
      %v2148 = vadd.f32 %v1859, %v2147
      %v2149 = vpop.f32.mrb[0].mxu0
      %v2150 = vpop.f32.mrb[0].mxu0
      %v2151 = vadd.f32 %v1862, %v2150
      %v2152 = vpop.f32.mrb[0].mxu0
      %2153 = vmatprep.mubr.bf16.mxu0 %v1090
      %2154 = vmatmul.mubr.bf16.gmra.mrb[0].mxu0 %v1089
      %v2155 = vpop.f32.mrb[0].mxu0
      %v2156 = vadd.f32 %v1867, %v2155
      %v2157 = vpop.f32.mrb[0].mxu0
      %v2158 = vpop.f32.mrb[0].mxu0
      %v2159 = vadd.f32 %v1870, %v2158
      %v2160 = vpop.f32.mrb[0].mxu0
      %2161 = vmatprep.mubr.bf16.mxu0 %v1096
      %2162 = vmatmul.mubr.bf16.gmra.mrb[0].mxu0 %v1095
      %v2163 = vpop.f32.mrb[0].mxu0
      %v2164 = vadd.f32 %v1875, %v2163
      %v2165 = vpop.f32.mrb[0].mxu0
      %v2166 = vpop.f32.mrb[0].mxu0
      %v2167 = vadd.f32 %v1878, %v2166
      %v2168 = vpop.f32.mrb[0].mxu0
      %2169 = vmatprep.mubr.bf16.mxu0 %v1102
      %2170 = vmatmul.mubr.bf16.gmra.mrb[0].mxu0 %v1101
      %v2171 = vpop.f32.mrb[0].mxu0
      %v2172 = vadd.f32 %v1883, %v2171
      %v2173 = vpop.f32.mrb[0].mxu0
      %v2174 = vpop.f32.mrb[0].mxu0
      %v2175 = vadd.f32 %v1886, %v2174
      %v2176 = vpop.f32.mrb[0].mxu0
      %2177 = vmatprep.mubr.bf16.mxu0 %v1108
      %2178 = vmatmul.mubr.bf16.gmra.mrb[0].mxu0 %v1107
      %v2179 = vpop.f32.mrb[0].mxu0
      %v2180 = vadd.f32 %v1891, %v2179
      %v2181 = vpop.f32.mrb[0].mxu0
      %v2182 = vpop.f32.mrb[0].mxu0
      %v2183 = vadd.f32 %v1894, %v2182
      %v2184 = vpop.f32.mrb[0].mxu0
      %2185 = vmatprep.mubr.bf16.mxu0 %v1114
      %2186 = vmatmul.mubr.bf16.gmra.mrb[0].mxu0 %v1113
      %v2187 = vpop.f32.mrb[0].mxu0
      %v2188 = vadd.f32 %v1899, %v2187
      %v2189 = vpop.f32.mrb[0].mxu0
      %v2190 = vpop.f32.mrb[0].mxu0
      %v2191 = vadd.f32 %v1902, %v2190
      %v2192 = vpop.f32.mrb[0].mxu0
      %2193 = vmatprep.mubr.bf16.mxu0 %v1120
      %2194 = vmatmul.mubr.bf16.gmra.mrb[0].mxu0 %v1119
      %v2195 = vpop.f32.mrb[0].mxu0
      %v2196 = vadd.f32 %v1907, %v2195
      %v2197 = vpop.f32.mrb[0].mxu0
      %v2198 = vpop.f32.mrb[0].mxu0
      %v2199 = vadd.f32 %v1910, %v2198
      %v2200 = vpop.f32.mrb[0].mxu0
      %2201 = vmatprep.mubr.bf16.mxu0 %v1126
      %2202 = vmatmul.mubr.bf16.gmra.mrb[0].mxu0 %v1125
      %v2203 = vpop.f32.mrb[0].mxu0
      %v2204 = vadd.f32 %v1915, %v2203
      %v2205 = vpop.f32.mrb[0].mxu0
      %v2206 = vpop.f32.mrb[0].mxu0
      %v2207 = vadd.f32 %v1918, %v2206
      %v2208 = vpop.f32.mrb[0].mxu0
      %2209 = vmatprep.mubr.bf16.mxu0 %v1132
      %2210 = vmatmul.mubr.bf16.gmra.mrb[0].mxu0 %v1131
      %v2211 = vpop.f32.mrb[0].mxu0
      %v2212 = vadd.f32 %v1923, %v2211
      %v2213 = vpop.f32.mrb[0].mxu0
      %v2214 = vpop.f32.mrb[0].mxu0
      %v2215 = vadd.f32 %v1926, %v2214
      %v2216 = vpop.f32.mrb[0].mxu0
      %2217 = vmatprep.mubr.bf16.mxu0 %v1138
      %2218 = vmatmul.mubr.bf16.gmra.mrb[0].mxu0 %v1137
      %v2219 = vpop.f32.mrb[0].mxu0
      %v2220 = vadd.f32 %v1931, %v2219
      %v2221 = vpop.f32.mrb[0].mxu0
      %v2222 = vpop.f32.mrb[0].mxu0
      %v2223 = vadd.f32 %v1934, %v2222
      %v2224 = vpop.f32.mrb[0].mxu0
      %2225 = vmatprep.mubr.bf16.mxu0 %v1144
      %2226 = vmatmul.mubr.bf16.gmra.mrb[0].mxu0 %v1143
      %v2227 = vpop.f32.mrb[0].mxu0
      %v2228 = vadd.f32 %v1939, %v2227
      %v2229 = vpop.f32.mrb[0].mxu0
      %v2230 = vpop.f32.mrb[0].mxu0
      %v2231 = vadd.f32 %v1942, %v2230
      %v2232 = vpop.f32.mrb[0].mxu0
      %2233 = vmatprep.mubr.bf16.mxu0 %v1150
      %2234 = vmatmul.mubr.bf16.gmra.mrb[0].mxu0 %v1149
      %v2235 = vpop.f32.mrb[0].mxu0
      %v2236 = vadd.f32 %v1947, %v2235
      %v2237 = vpop.f32.mrb[0].mxu0
      %v2238 = vpop.f32.mrb[0].mxu0
      %v2239 = vadd.f32 %v1950, %v2238
      %v2240 = vpop.f32.mrb[0].mxu0
      %2241 = vmatprep.mubr.bf16.mxu0 %v1156
      %2242 = vmatmul.mubr.bf16.gmra.mrb[0].mxu0 %v1155
      %v2243 = vpop.f32.mrb[0].mxu0
      %v2244 = vadd.f32 %v1955, %v2243
      %v2245 = vpop.f32.mrb[0].mxu0
      %v2246 = vpop.f32.mrb[0].mxu0
      %v2247 = vadd.f32 %v1958, %v2246
      %v2248 = vpop.f32.mrb[0].mxu0
      %2249 = vmatprep.mubr.bf16.mxu0 %v1162
      %2250 = vmatmul.mubr.bf16.gmra.mrb[0].mxu0 %v1161
      %v2251 = vpop.f32.mrb[0].mxu0
      %v2252 = vadd.f32 %v1963, %v2251
      %v2253 = vpop.f32.mrb[0].mxu0
      %v2254 = vpop.f32.mrb[0].mxu0
      %v2255 = vadd.f32 %v1966, %v2254
      %v2256 = vpop.f32.mrb[0].mxu0
      %2257 = vmatprep.mubr.bf16.mxu0 %v1168
      %2258 = vmatmul.mubr.bf16.gmra.mrb[0].mxu0 %v1167
      %v2259 = vpop.f32.mrb[0].mxu0
      %v2260 = vadd.f32 %v1971, %v2259
      %v2261 = vpop.f32.mrb[0].mxu0
      %v2262 = vpop.f32.mrb[0].mxu0
      %v2263 = vadd.f32 %v1974, %v2262
      %v2264 = vpop.f32.mrb[0].mxu0
      %2265 = vmatprep.mubr.bf16.mxu0 %v1174
      %2266 = vmatmul.mubr.bf16.gmra.mrb[0].mxu0 %v1173
      %v2267 = vpop.f32.mrb[0].mxu0
      %v2268 = vadd.f32 %v1979, %v2267
      %v2269 = vpop.f32.mrb[0].mxu0
      %v2270 = vpop.f32.mrb[0].mxu0
      %v2271 = vadd.f32 %v1982, %v2270
      %v2272 = vpop.f32.mrb[0].mxu0
      %2273 = vmatprep.mubr.bf16.mxu0 %v1180
      %2274 = vmatmul.mubr.bf16.gmra.mrb[0].mxu0 %v1179
      %v2275 = vpop.f32.mrb[0].mxu0
      %v2276 = vadd.f32 %v1987, %v2275
      %v2277 = vpop.f32.mrb[0].mxu0
      %v2278 = vpop.f32.mrb[0].mxu0
      %v2279 = vadd.f32 %v1990, %v2278
      %v2280 = vpop.f32.mrb[0].mxu0
      %2281 = vmatprep.mubr.bf16.mxu0 %v1186
      %2282 = vmatmul.mubr.bf16.gmra.mrb[0].mxu0 %v1185
      %v2283 = vpop.f32.mrb[0].mxu0
      %v2284 = vadd.f32 %v1995, %v2283
      %v2285 = vpop.f32.mrb[0].mxu0
      %v2286 = vpop.f32.mrb[0].mxu0
      %v2287 = vadd.f32 %v1998, %v2286
      %v2288 = vpop.f32.mrb[0].mxu0
      %2289 = vmatprep.mubr.bf16.mxu0 %v1192
      %2290 = vmatmul.mubr.bf16.gmra.mrb[0].mxu0 %v1191
      %v2291 = vpop.f32.mrb[0].mxu0
      %v2292 = vadd.f32 %v2003, %v2291
      %v2293 = vpop.f32.mrb[0].mxu0
      %v2294 = vpop.f32.mrb[0].mxu0
      %v2295 = vadd.f32 %v2006, %v2294
      %v2296 = vpop.f32.mrb[0].mxu0
      %2297 = vmatprep.mubr.bf16.mxu0 %v1198
      %2298 = vmatmul.mubr.bf16.gmra.mrb[0].mxu0 %v1197
      %v2299 = vpop.f32.mrb[0].mxu0
      %v2300 = vadd.f32 %v2011, %v2299
      %v2301 = vpop.f32.mrb[0].mxu0
      %v2302 = vpop.f32.mrb[0].mxu0
      %v2303 = vadd.f32 %v2014, %v2302
      %v2304 = vpop.f32.mrb[0].mxu0
      %2305 = vmatprep.mubr.bf16.mxu0 %v1204
      %2306 = vmatmul.mubr.bf16.gmra.mrb[0].mxu0 %v1203
      %v2307 = vpop.f32.mrb[0].mxu0
      %v2308 = vadd.f32 %v2019, %v2307
      %v2309 = vpop.f32.mrb[0].mxu0
      %v2310 = vpop.f32.mrb[0].mxu0
      %v2311 = vadd.f32 %v2022, %v2310
      %v2312 = vpop.f32.mrb[0].mxu0
      %2313 = vmatprep.mubr.bf16.mxu0 %v1210
      %2314 = vmatmul.mubr.bf16.gmra.mrb[0].mxu0 %v1209
      %v2315 = vpop.f32.mrb[0].mxu0
      %v2316 = vadd.f32 %v2027, %v2315
      %v2317 = vpop.f32.mrb[0].mxu0
      %v2318 = vpop.f32.mrb[0].mxu0
      %v2319 = vadd.f32 %v2030, %v2318
      %v2320 = vpop.f32.mrb[0].mxu0
      %2321 = vmatprep.mubr.bf16.mxu0 %v1216
      %2322 = vmatmul.mubr.bf16.gmra.mrb[0].mxu0 %v1215
      %v2323 = vpop.f32.mrb[0].mxu0
      %v2324 = vadd.f32 %v2035, %v2323
      %v2325 = vpop.f32.mrb[0].mxu0
      %v2326 = vpop.f32.mrb[0].mxu0
      %v2327 = vadd.f32 %v2038, %v2326
      %v2328 = vpop.f32.mrb[0].mxu0
      %2329 = vmatprep.mubr.bf16.mxu0 %v1222
      %2330 = vmatmul.mubr.bf16.gmra.mrb[0].mxu0 %v1221
      %v2331 = vpop.f32.mrb[0].mxu0
      %v2332 = vadd.f32 %v2043, %v2331
      %v2333 = vpop.f32.mrb[0].mxu0
      %v2334 = vpop.f32.mrb[0].mxu0
      %v2335 = vadd.f32 %v2046, %v2334
      %v2336 = vpop.f32.mrb[0].mxu0
      %2337 = vmatprep.mubr.bf16.mxu0 %v1228
      %2338 = vmatmul.mubr.bf16.gmra.mrb[0].mxu0 %v1227
      %v2339 = vpop.f32.mrb[0].mxu0
      %v2340 = vadd.f32 %v2051, %v2339
      %v2341 = vpop.f32.mrb[0].mxu0
      %v2342 = vpop.f32.mrb[0].mxu0
      %v2343 = vadd.f32 %v2054, %v2342
      %v2344 = vpop.f32.mrb[0].mxu0
      %2345 = vmatprep.mubr.bf16.mxu0 %v1234
      %2346 = vmatmul.mubr.bf16.gmra.mrb[0].mxu0 %v1233
      %v2347 = vpop.f32.mrb[0].mxu0
      %v2348 = vadd.f32 %v2059, %v2347
      %v2349 = vpop.f32.mrb[0].mxu0
      %v2350 = vpop.f32.mrb[0].mxu0
      %v2351 = vadd.f32 %v2062, %v2350
      %v2352 = vpop.f32.mrb[0].mxu0
      %2353 = vdwg.mxu0
      %2354 = vmatprep.subr.bf16.mxu0 0
      %2355 = vmatpush1.bf16.msra.mxu0 %v1613
      %2356 = vmatprep.subr.bf16.mxu0 0
      %2357 = vmatpush1.bf16.msra.mxu0 %v1614
      %2358 = vmatprep.subr.bf16.mxu0 0
      %2359 = vmatpush1.bf16.msra.mxu0 %v1615
      %2360 = vmatprep.subr.bf16.mxu0 0
      %2361 = vmatpush1.bf16.msra.mxu0 %v1616
      %2362 = vmatprep.subr.bf16.mxu0 0
      %2363 = vmatpush1.bf16.msra.mxu0 %v1617
      %2364 = vmatprep.subr.bf16.mxu0 0
      %2365 = vmatpush1.bf16.msra.mxu0 %v1618
      %2366 = vmatprep.subr.bf16.mxu0 0
      %2367 = vmatpush1.bf16.msra.mxu0 %v1619
      %2368 = vmatprep.subr.bf16.mxu0 0
      %2369 = vmatpush1.bf16.msra.mxu0 %v1620
      %2370 = vmatprep.subr.bf16.mxu0 0
      %2371 = vmatpush1.bf16.msra.mxu0 %v1621
      %2372 = vmatprep.subr.bf16.mxu0 0
      %2373 = vmatpush1.bf16.msra.mxu0 %v1622
      %2374 = vmatprep.subr.bf16.mxu0 0
      %2375 = vmatpush1.bf16.msra.mxu0 %v1623
      %2376 = vmatprep.subr.bf16.mxu0 0
      %2377 = vmatpush1.bf16.msra.mxu0 %v1624
      %2378 = vmatprep.subr.bf16.mxu0 0
      %2379 = vmatpush1.bf16.msra.mxu0 %v1625
      %2380 = vmatprep.subr.bf16.mxu0 0
      %2381 = vmatpush1.bf16.msra.mxu0 %v1774
      %2382 = vmatprep.subr.bf16.mxu0 0
      %2383 = vmatpush1.bf16.msra.mxu0 0
      %2384 = vmatprep.subr.bf16.mxu0 0
      %2385 = vmatpush1.bf16.msra.mxu0 0
      %2386 = vmatprep.mubr.bf16.mxu0 %v1674
      %2387 = vmatmul.mubr.bf16.gmra.mrb[0].mxu0 %v1049
      %v2388 = vpop.f32.mrb[0].mxu0
      %v2389 = vadd.f32 %v2100, %v2388
      %v2390 = vpop.f32.mrb[0].mxu0
      %v2391 = vpop.f32.mrb[0].mxu0
      %v2392 = vadd.f32 %v2103, %v2391
      %v2393 = vpop.f32.mrb[0].mxu0
      %2394 = vmatprep.mubr.bf16.mxu0 %v1677
      %2395 = vmatmul.mubr.bf16.gmra.mrb[0].mxu0 %v1055
      %v2396 = vpop.f32.mrb[0].mxu0
      %v2397 = vadd.f32 %v2108, %v2396
      %v2398 = vpop.f32.mrb[0].mxu0
      %v2399 = vpop.f32.mrb[0].mxu0
      %v2400 = vadd.f32 %v2111, %v2399
      %v2401 = vpop.f32.mrb[0].mxu0
      %2402 = vmatprep.mubr.bf16.mxu0 %v1680
      %2403 = vmatmul.mubr.bf16.gmra.mrb[0].mxu0 %v1061
      %v2404 = vpop.f32.mrb[0].mxu0
      %v2405 = vadd.f32 %v2116, %v2404
      %v2406 = vpop.f32.mrb[0].mxu0
      %v2407 = vpop.f32.mrb[0].mxu0
      %v2408 = vadd.f32 %v2119, %v2407
      %v2409 = vpop.f32.mrb[0].mxu0
      %2410 = vmatprep.mubr.bf16.mxu0 %v1683
      %2411 = vmatmul.mubr.bf16.gmra.mrb[0].mxu0 %v1067
      %v2412 = vpop.f32.mrb[0].mxu0
      %v2413 = vadd.f32 %v2124, %v2412
      %v2414 = vpop.f32.mrb[0].mxu0
      %v2415 = vpop.f32.mrb[0].mxu0
      %v2416 = vadd.f32 %v2127, %v2415
      %v2417 = vpop.f32.mrb[0].mxu0
      %2418 = vmatprep.mubr.bf16.mxu0 %v1686
      %2419 = vmatmul.mubr.bf16.gmra.mrb[0].mxu0 %v1073
      %v2420 = vpop.f32.mrb[0].mxu0
      %v2421 = vadd.f32 %v2132, %v2420
      %v2422 = vpop.f32.mrb[0].mxu0
      %v2423 = vpop.f32.mrb[0].mxu0
      %v2424 = vadd.f32 %v2135, %v2423
      %v2425 = vpop.f32.mrb[0].mxu0
      %2426 = vmatprep.mubr.bf16.mxu0 %v1689
      %2427 = vmatmul.mubr.bf16.gmra.mrb[0].mxu0 %v1079
      %v2428 = vpop.f32.mrb[0].mxu0
      %v2429 = vadd.f32 %v2140, %v2428
      %v2430 = vpop.f32.mrb[0].mxu0
      %v2431 = vpop.f32.mrb[0].mxu0
      %v2432 = vadd.f32 %v2143, %v2431
      %v2433 = vpop.f32.mrb[0].mxu0
      %2434 = vmatprep.mubr.bf16.mxu0 %v1692
      %2435 = vmatmul.mubr.bf16.gmra.mrb[0].mxu0 %v1085
      %v2436 = vpop.f32.mrb[0].mxu0
      %v2437 = vadd.f32 %v2148, %v2436
      %v2438 = vpop.f32.mrb[0].mxu0
      %v2439 = vpop.f32.mrb[0].mxu0
      %v2440 = vadd.f32 %v2151, %v2439
      %v2441 = vpop.f32.mrb[0].mxu0
      %2442 = vmatprep.mubr.bf16.mxu0 %v1695
      %2443 = vmatmul.mubr.bf16.gmra.mrb[0].mxu0 %v1091
      %v2444 = vpop.f32.mrb[0].mxu0
      %v2445 = vadd.f32 %v2156, %v2444
      %v2446 = vpop.f32.mrb[0].mxu0
      %v2447 = vpop.f32.mrb[0].mxu0
      %v2448 = vadd.f32 %v2159, %v2447
      %v2449 = vpop.f32.mrb[0].mxu0
      %2450 = vmatprep.mubr.bf16.mxu0 %v1698
      %2451 = vmatmul.mubr.bf16.gmra.mrb[0].mxu0 %v1097
      %v2452 = vpop.f32.mrb[0].mxu0
      %v2453 = vadd.f32 %v2164, %v2452
      %v2454 = vpop.f32.mrb[0].mxu0
      %v2455 = vpop.f32.mrb[0].mxu0
      %v2456 = vadd.f32 %v2167, %v2455
      %v2457 = vpop.f32.mrb[0].mxu0
      %2458 = vmatprep.mubr.bf16.mxu0 %v1701
      %2459 = vmatmul.mubr.bf16.gmra.mrb[0].mxu0 %v1103
      %v2460 = vpop.f32.mrb[0].mxu0
      %v2461 = vadd.f32 %v2172, %v2460
      %v2462 = vpop.f32.mrb[0].mxu0
      %v2463 = vpop.f32.mrb[0].mxu0
      %v2464 = vadd.f32 %v2175, %v2463
      %v2465 = vpop.f32.mrb[0].mxu0
      %2466 = vmatprep.mubr.bf16.mxu0 %v1704
      %2467 = vmatmul.mubr.bf16.gmra.mrb[0].mxu0 %v1109
      %v2468 = vpop.f32.mrb[0].mxu0
      %v2469 = vadd.f32 %v2180, %v2468
      %v2470 = vpop.f32.mrb[0].mxu0
      %v2471 = vpop.f32.mrb[0].mxu0
      %v2472 = vadd.f32 %v2183, %v2471
      %v2473 = vpop.f32.mrb[0].mxu0
      %2474 = vmatprep.mubr.bf16.mxu0 %v1707
      %2475 = vmatmul.mubr.bf16.gmra.mrb[0].mxu0 %v1115
      %v2476 = vpop.f32.mrb[0].mxu0
      %v2477 = vadd.f32 %v2188, %v2476
      %v2478 = vpop.f32.mrb[0].mxu0
      %v2479 = vpop.f32.mrb[0].mxu0
      %v2480 = vadd.f32 %v2191, %v2479
      %v2481 = vpop.f32.mrb[0].mxu0
      %2482 = vmatprep.mubr.bf16.mxu0 %v1710
      %2483 = vmatmul.mubr.bf16.gmra.mrb[0].mxu0 %v1121
      %v2484 = vpop.f32.mrb[0].mxu0
      %v2485 = vadd.f32 %v2196, %v2484
      %v2486 = vpop.f32.mrb[0].mxu0
      %v2487 = vpop.f32.mrb[0].mxu0
      %v2488 = vadd.f32 %v2199, %v2487
      %v2489 = vpop.f32.mrb[0].mxu0
      %2490 = vmatprep.mubr.bf16.mxu0 %v1713
      %2491 = vmatmul.mubr.bf16.gmra.mrb[0].mxu0 %v1127
      %v2492 = vpop.f32.mrb[0].mxu0
      %v2493 = vadd.f32 %v2204, %v2492
      %v2494 = vpop.f32.mrb[0].mxu0
      %v2495 = vpop.f32.mrb[0].mxu0
      %v2496 = vadd.f32 %v2207, %v2495
      %v2497 = vpop.f32.mrb[0].mxu0
      %2498 = vmatprep.mubr.bf16.mxu0 %v1716
      %2499 = vmatmul.mubr.bf16.gmra.mrb[0].mxu0 %v1133
      %v2500 = vpop.f32.mrb[0].mxu0
      %v2501 = vadd.f32 %v2212, %v2500
      %v2502 = vpop.f32.mrb[0].mxu0
      %v2503 = vpop.f32.mrb[0].mxu0
      %v2504 = vadd.f32 %v2215, %v2503
      %v2505 = vpop.f32.mrb[0].mxu0
      %2506 = vmatprep.mubr.bf16.mxu0 %v1719
      %2507 = vmatmul.mubr.bf16.gmra.mrb[0].mxu0 %v1139
      %v2508 = vpop.f32.mrb[0].mxu0
      %v2509 = vadd.f32 %v2220, %v2508
      %v2510 = vpop.f32.mrb[0].mxu0
      %v2511 = vpop.f32.mrb[0].mxu0
      %v2512 = vadd.f32 %v2223, %v2511
      %v2513 = vpop.f32.mrb[0].mxu0
      %2514 = vmatprep.mubr.bf16.mxu0 %v1722
      %2515 = vmatmul.mubr.bf16.gmra.mrb[0].mxu0 %v1145
      %v2516 = vpop.f32.mrb[0].mxu0
      %v2517 = vadd.f32 %v2228, %v2516
      %v2518 = vpop.f32.mrb[0].mxu0
      %v2519 = vpop.f32.mrb[0].mxu0
      %v2520 = vadd.f32 %v2231, %v2519
      %v2521 = vpop.f32.mrb[0].mxu0
      %2522 = vmatprep.mubr.bf16.mxu0 %v1725
      %2523 = vmatmul.mubr.bf16.gmra.mrb[0].mxu0 %v1151
      %v2524 = vpop.f32.mrb[0].mxu0
      %v2525 = vadd.f32 %v2236, %v2524
      %v2526 = vpop.f32.mrb[0].mxu0
      %v2527 = vpop.f32.mrb[0].mxu0
      %v2528 = vadd.f32 %v2239, %v2527
      %v2529 = vpop.f32.mrb[0].mxu0
      %2530 = vmatprep.mubr.bf16.mxu0 %v1728
      %2531 = vmatmul.mubr.bf16.gmra.mrb[0].mxu0 %v1157
      %v2532 = vpop.f32.mrb[0].mxu0
      %v2533 = vadd.f32 %v2244, %v2532
      %v2534 = vpop.f32.mrb[0].mxu0
      %v2535 = vpop.f32.mrb[0].mxu0
      %v2536 = vadd.f32 %v2247, %v2535
      %v2537 = vpop.f32.mrb[0].mxu0
      %2538 = vmatprep.mubr.bf16.mxu0 %v1731
      %2539 = vmatmul.mubr.bf16.gmra.mrb[0].mxu0 %v1163
      %v2540 = vpop.f32.mrb[0].mxu0
      %v2541 = vadd.f32 %v2252, %v2540
      %v2542 = vpop.f32.mrb[0].mxu0
      %v2543 = vpop.f32.mrb[0].mxu0
      %v2544 = vadd.f32 %v2255, %v2543
      %v2545 = vpop.f32.mrb[0].mxu0
      %2546 = vmatprep.mubr.bf16.mxu0 %v1734
      %2547 = vmatmul.mubr.bf16.gmra.mrb[0].mxu0 %v1169
      %v2548 = vpop.f32.mrb[0].mxu0
      %v2549 = vadd.f32 %v2260, %v2548
      %v2550 = vpop.f32.mrb[0].mxu0
      %v2551 = vpop.f32.mrb[0].mxu0
      %v2552 = vadd.f32 %v2263, %v2551
      %v2553 = vpop.f32.mrb[0].mxu0
      %2554 = vmatprep.mubr.bf16.mxu0 %v1737
      %2555 = vmatmul.mubr.bf16.gmra.mrb[0].mxu0 %v1175
      %v2556 = vpop.f32.mrb[0].mxu0
      %v2557 = vadd.f32 %v2268, %v2556
      %v2558 = vpop.f32.mrb[0].mxu0
      %v2559 = vpop.f32.mrb[0].mxu0
      %v2560 = vadd.f32 %v2271, %v2559
      %v2561 = vpop.f32.mrb[0].mxu0
      %2562 = vmatprep.mubr.bf16.mxu0 %v1740
      %2563 = vmatmul.mubr.bf16.gmra.mrb[0].mxu0 %v1181
      %v2564 = vpop.f32.mrb[0].mxu0
      %v2565 = vadd.f32 %v2276, %v2564
      %v2566 = vpop.f32.mrb[0].mxu0
      %v2567 = vpop.f32.mrb[0].mxu0
      %v2568 = vadd.f32 %v2279, %v2567
      %v2569 = vpop.f32.mrb[0].mxu0
      %2570 = vmatprep.mubr.bf16.mxu0 %v1743
      %2571 = vmatmul.mubr.bf16.gmra.mrb[0].mxu0 %v1187
      %v2572 = vpop.f32.mrb[0].mxu0
      %v2573 = vadd.f32 %v2284, %v2572
      %v2574 = vpop.f32.mrb[0].mxu0
      %v2575 = vpop.f32.mrb[0].mxu0
      %v2576 = vadd.f32 %v2287, %v2575
      %v2577 = vpop.f32.mrb[0].mxu0
      %2578 = vmatprep.mubr.bf16.mxu0 %v1746
      %2579 = vmatmul.mubr.bf16.gmra.mrb[0].mxu0 %v1193
      %v2580 = vpop.f32.mrb[0].mxu0
      %v2581 = vadd.f32 %v2292, %v2580
      %v2582 = vpop.f32.mrb[0].mxu0
      %v2583 = vpop.f32.mrb[0].mxu0
      %v2584 = vadd.f32 %v2295, %v2583
      %v2585 = vpop.f32.mrb[0].mxu0
      %2586 = vmatprep.mubr.bf16.mxu0 %v1749
      %2587 = vmatmul.mubr.bf16.gmra.mrb[0].mxu0 %v1199
      %v2588 = vpop.f32.mrb[0].mxu0
      %v2589 = vadd.f32 %v2300, %v2588
      %v2590 = vpop.f32.mrb[0].mxu0
      %v2591 = vpop.f32.mrb[0].mxu0
      %v2592 = vadd.f32 %v2303, %v2591
      %v2593 = vpop.f32.mrb[0].mxu0
      %2594 = vmatprep.mubr.bf16.mxu0 %v1752
      %2595 = vmatmul.mubr.bf16.gmra.mrb[0].mxu0 %v1205
      %v2596 = vpop.f32.mrb[0].mxu0
      %v2597 = vadd.f32 %v2308, %v2596
      %v2598 = vpop.f32.mrb[0].mxu0
      %v2599 = vpop.f32.mrb[0].mxu0
      %v2600 = vadd.f32 %v2311, %v2599
      %v2601 = vpop.f32.mrb[0].mxu0
      %2602 = vmatprep.mubr.bf16.mxu0 %v1755
      %2603 = vmatmul.mubr.bf16.gmra.mrb[0].mxu0 %v1211
      %v2604 = vpop.f32.mrb[0].mxu0
      %v2605 = vadd.f32 %v2316, %v2604
      %v2606 = vpop.f32.mrb[0].mxu0
      %v2607 = vpop.f32.mrb[0].mxu0
      %v2608 = vadd.f32 %v2319, %v2607
      %v2609 = vpop.f32.mrb[0].mxu0
      %2610 = vmatprep.mubr.bf16.mxu0 %v1758
      %2611 = vmatmul.mubr.bf16.gmra.mrb[0].mxu0 %v1217
      %v2612 = vpop.f32.mrb[0].mxu0
      %v2613 = vadd.f32 %v2324, %v2612
      %v2614 = vpop.f32.mrb[0].mxu0
      %v2615 = vpop.f32.mrb[0].mxu0
      %v2616 = vadd.f32 %v2327, %v2615
      %v2617 = vpop.f32.mrb[0].mxu0
      %2618 = vmatprep.mubr.bf16.mxu0 %v1761
      %2619 = vmatmul.mubr.bf16.gmra.mrb[0].mxu0 %v1223
      %v2620 = vpop.f32.mrb[0].mxu0
      %v2621 = vadd.f32 %v2332, %v2620
      %v2622 = vpop.f32.mrb[0].mxu0
      %v2623 = vpop.f32.mrb[0].mxu0
      %v2624 = vadd.f32 %v2335, %v2623
      %v2625 = vpop.f32.mrb[0].mxu0
      %2626 = vmatprep.mubr.bf16.mxu0 %v1764
      %2627 = vmatmul.mubr.bf16.gmra.mrb[0].mxu0 %v1229
      %v2628 = vpop.f32.mrb[0].mxu0
      %v2629 = vadd.f32 %v2340, %v2628
      %v2630 = vpop.f32.mrb[0].mxu0
      %v2631 = vpop.f32.mrb[0].mxu0
      %v2632 = vadd.f32 %v2343, %v2631
      %v2633 = vpop.f32.mrb[0].mxu0
      %2634 = vmatprep.mubr.bf16.mxu0 %v1767
      %2635 = vmatmul.mubr.bf16.gmra.mrb[0].mxu0 %v1235
      %v2636 = vpop.f32.mrb[0].mxu0
      %v2637 = vadd.f32 %v2348, %v2636
      %v2638 = vpop.f32.mrb[0].mxu0
      %v2639 = vpop.f32.mrb[0].mxu0
      %v2640 = vadd.f32 %v2351, %v2639
      %v2641 = vpop.f32.mrb[0].mxu0
      %2642 = vdwg.mxu0
      %v2643 = vmax.f32 %v2389, 0.0
      %v2644 = vmax.f32 %v2392, 0.0
      %v2645 = vmax.f32 %v2397, 0.0
      %v2646 = vmax.f32 %v2400, 0.0
      %v2647 = vmax.f32 %v2405, 0.0
      %v2648 = vmax.f32 %v2408, 0.0
      %v2649 = vmax.f32 %v2413, 0.0
      %v2650 = vmax.f32 %v2416, 0.0
      %v2651 = vmax.f32 %v2421, 0.0
      %v2652 = vmax.f32 %v2424, 0.0
      %v2653 = vmax.f32 %v2429, 0.0
      %v2654 = vmax.f32 %v2432, 0.0
      %v2655 = vmax.f32 %v2437, 0.0
      %v2656 = vmax.f32 %v2440, 0.0
      %v2657 = vmax.f32 %v2445, 0.0
      %v2658 = vmax.f32 %v2448, 0.0
      %v2659 = vmax.f32 %v2453, 0.0
      %v2660 = vmax.f32 %v2456, 0.0
      %v2661 = vmax.f32 %v2461, 0.0
      %v2662 = vmax.f32 %v2464, 0.0
      %v2663 = vmax.f32 %v2469, 0.0
      %v2664 = vmax.f32 %v2472, 0.0
      %v2665 = vmax.f32 %v2477, 0.0
      %v2666 = vmax.f32 %v2480, 0.0
      %v2667 = vmax.f32 %v2485, 0.0
      %v2668 = vmax.f32 %v2488, 0.0
      %v2669 = vmax.f32 %v2493, 0.0
      %v2670 = vmax.f32 %v2496, 0.0
      %v2671 = vmax.f32 %v2501, 0.0
      %v2672 = vmax.f32 %v2504, 0.0
      %v2673 = vmax.f32 %v2509, 0.0
      %v2674 = vmax.f32 %v2512, 0.0
      %v2675 = vmax.f32 %v2517, 0.0
      %v2676 = vmax.f32 %v2520, 0.0
      %v2677 = vmax.f32 %v2525, 0.0
      %v2678 = vmax.f32 %v2528, 0.0
      %v2679 = vmax.f32 %v2533, 0.0
      %v2680 = vmax.f32 %v2536, 0.0
      %v2681 = vmax.f32 %v2541, 0.0
      %v2682 = vmax.f32 %v2544, 0.0
      %v2683 = vmax.f32 %v2549, 0.0
      %v2684 = vmax.f32 %v2552, 0.0
      %v2685 = vmax.f32 %v2557, 0.0
      %v2686 = vmax.f32 %v2560, 0.0
      %v2687 = vmax.f32 %v2565, 0.0
      %v2688 = vmax.f32 %v2568, 0.0
      %v2689 = vmax.f32 %v2573, 0.0
      %v2690 = vmax.f32 %v2576, 0.0
      %v2691 = vmax.f32 %v2581, 0.0
      %v2692 = vmax.f32 %v2584, 0.0
      %v2693 = vmax.f32 %v2589, 0.0
      %v2694 = vmax.f32 %v2592, 0.0
      %v2695 = vmax.f32 %v2597, 0.0
      %v2696 = vmax.f32 %v2600, 0.0
      %v2697 = vmax.f32 %v2605, 0.0
      %v2698 = vmax.f32 %v2608, 0.0
      %v2699 = vmax.f32 %v2613, 0.0
      %v2700 = vmax.f32 %v2616, 0.0
      %v2701 = vmax.f32 %v2621, 0.0
      %v2702 = vmax.f32 %v2624, 0.0
      %v2703 = vmax.f32 %v2629, 0.0
      %v2704 = vmax.f32 %v2632, 0.0
      %v2705 = vmax.f32 %v2637, 0.0
      %v2706 = vmax.f32 %v2640, 0.0
      %v2707 = vpack.c.bf16 %v2644, %v2643
      %v2708 = vpack.c.bf16 %v2646, %v2645
      %v2709 = vpack.c.bf16 %v2648, %v2647
      %v2710 = vpack.c.bf16 %v2650, %v2649
      %v2711 = vpack.c.bf16 %v2652, %v2651
      %v2712 = vpack.c.bf16 %v2654, %v2653
      %v2713 = vpack.c.bf16 %v2656, %v2655
      %v2714 = vpack.c.bf16 %v2658, %v2657
      %v2715 = vpack.c.bf16 %v2660, %v2659
      %v2716 = vpack.c.bf16 %v2662, %v2661
      %v2717 = vpack.c.bf16 %v2664, %v2663
      %v2718 = vpack.c.bf16 %v2666, %v2665
      %v2719 = vpack.c.bf16 %v2668, %v2667
      %v2720 = vpack.c.bf16 %v2670, %v2669
      %v2721 = vpack.c.bf16 %v2672, %v2671
      %v2722 = vpack.c.bf16 %v2674, %v2673
      %v2723 = vpack.c.bf16 %v2676, %v2675
      %v2724 = vpack.c.bf16 %v2678, %v2677
      %v2725 = vpack.c.bf16 %v2680, %v2679
      %v2726 = vpack.c.bf16 %v2682, %v2681
      %v2727 = vpack.c.bf16 %v2684, %v2683
      %v2728 = vpack.c.bf16 %v2686, %v2685
      %v2729 = vpack.c.bf16 %v2688, %v2687
      %v2730 = vpack.c.bf16 %v2690, %v2689
      %v2731 = vpack.c.bf16 %v2692, %v2691
      %v2732 = vpack.c.bf16 %v2694, %v2693
      %v2733 = vpack.c.bf16 %v2696, %v2695
      %v2734 = vpack.c.bf16 %v2698, %v2697
      %v2735 = vpack.c.bf16 %v2700, %v2699
      %v2736 = vpack.c.bf16 %v2702, %v2701
      %v2737 = vpack.c.bf16 %v2704, %v2703
      %v2738 = vpack.c.bf16 %v2706, %v2705
      %v2771 = vunpack.c.l.b16 %v2707
      %v2772 = vunpack.c.h.b16 %v2707
      %v2773 = vunpack.c.l.b16 %v2708
      %v2774 = vunpack.c.h.b16 %v2708
      %v2775 = vunpack.c.l.b16 %v2709
      %v2776 = vunpack.c.h.b16 %v2709
      %v2777 = vunpack.c.l.b16 %v2710
      %v2778 = vunpack.c.h.b16 %v2710
      %v2779 = vunpack.c.l.b16 %v2711
      %v2780 = vunpack.c.h.b16 %v2711
      %v2781 = vunpack.c.l.b16 %v2712
      %v2782 = vunpack.c.h.b16 %v2712
      %v2783 = vunpack.c.l.b16 %v2713
      %v2784 = vunpack.c.h.b16 %v2713
      %v2785 = vunpack.c.l.b16 %v2714
      %v2786 = vunpack.c.h.b16 %v2714
      %v2787 = vunpack.c.l.b16 %v2715
      %v2788 = vunpack.c.h.b16 %v2715
      %v2789 = vunpack.c.l.b16 %v2716
      %v2790 = vunpack.c.h.b16 %v2716
      %v2791 = vunpack.c.l.b16 %v2717
      %v2792 = vunpack.c.h.b16 %v2717
      %v2793 = vunpack.c.l.b16 %v2718
      %v2794 = vunpack.c.h.b16 %v2718
      %v2795 = vunpack.c.l.b16 %v2719
      %v2796 = vunpack.c.h.b16 %v2719
      %v2797 = vunpack.c.l.b16 %v2720
      %v2798 = vunpack.c.h.b16 %v2720
      %v2799 = vunpack.c.l.b16 %v2721
      %v2800 = vunpack.c.h.b16 %v2721
      %v2801 = vunpack.c.l.b16 %v2722
      %v2802 = vunpack.c.h.b16 %v2722
      %v2803 = vunpack.c.l.b16 %v2723
      %v2804 = vunpack.c.h.b16 %v2723
      %v2805 = vunpack.c.l.b16 %v2724
      %v2806 = vunpack.c.h.b16 %v2724
      %v2807 = vunpack.c.l.b16 %v2725
      %v2808 = vunpack.c.h.b16 %v2725
      %v2809 = vunpack.c.l.b16 %v2726
      %v2810 = vunpack.c.h.b16 %v2726
      %v2811 = vunpack.c.l.b16 %v2727
      %v2812 = vunpack.c.h.b16 %v2727
      %v2813 = vunpack.c.l.b16 %v2728
      %v2814 = vunpack.c.h.b16 %v2728
      %v2815 = vunpack.c.l.b16 %v2729
      %v2816 = vunpack.c.h.b16 %v2729
      %v2817 = vunpack.c.l.b16 %v2730
      %v2818 = vunpack.c.h.b16 %v2730
      %v2819 = vunpack.c.l.b16 %v2731
      %v2820 = vunpack.c.h.b16 %v2731
      %v2821 = vunpack.c.l.b16 %v2732
      %v2822 = vunpack.c.h.b16 %v2732
      %v2823 = vunpack.c.l.b16 %v2733
      %v2824 = vunpack.c.h.b16 %v2733
      %v2825 = vunpack.c.l.b16 %v2734
      %v2826 = vunpack.c.h.b16 %v2734
      %v2827 = vunpack.c.l.b16 %v2735
      %v2828 = vunpack.c.h.b16 %v2735
      %v2829 = vunpack.c.l.b16 %v2736
      %v2830 = vunpack.c.h.b16 %v2736
      %v2831 = vunpack.c.l.b16 %v2737
      %v2832 = vunpack.c.h.b16 %v2737
      %v2833 = vunpack.c.l.b16 %v2738
      %v2834 = vunpack.c.h.b16 %v2738
      %v2835 = vpack.c.b16 %v2771, %v2771
      %v2836 = vpack.c.b16 %v2772, %v2772
      %v2837 = vpack.c.b16 %v2773, %v2773
      %v2838 = vpack.c.b16 %v2774, %v2774
      %v2839 = vpack.c.b16 %v2775, %v2775
      %v2840 = vpack.c.b16 %v2776, %v2776
      %v2841 = vpack.c.b16 %v2777, %v2777
      %v2842 = vpack.c.b16 %v2778, %v2778
      %v2843 = vpack.c.b16 %v2779, %v2779
      %v2844 = vpack.c.b16 %v2780, %v2780
      %v2845 = vpack.c.b16 %v2781, %v2781
      %v2846 = vpack.c.b16 %v2782, %v2782
      %v2847 = vpack.c.b16 %v2783, %v2783
      %v2848 = vpack.c.b16 %v2784, %v2784
      %v2849 = vpack.c.b16 %v2785, %v2785
      %v2850 = vpack.c.b16 %v2786, %v2786
      %v2851 = vpack.c.b16 %v2787, %v2787
      %v2852 = vpack.c.b16 %v2788, %v2788
      %v2853 = vpack.c.b16 %v2789, %v2789
      %v2854 = vpack.c.b16 %v2790, %v2790
      %v2855 = vpack.c.b16 %v2791, %v2791
      %v2856 = vpack.c.b16 %v2792, %v2792
      %v2857 = vpack.c.b16 %v2793, %v2793
      %v2858 = vpack.c.b16 %v2794, %v2794
      %v2859 = vpack.c.b16 %v2795, %v2795
      %v2860 = vpack.c.b16 %v2796, %v2796
      %v2861 = vpack.c.b16 %v2797, %v2797
      %v2862 = vpack.c.b16 %v2798, %v2798
      %v2863 = vpack.c.b16 %v2799, %v2799
      %v2864 = vpack.c.b16 %v2800, %v2800
      %v2865 = vpack.c.b16 %v2801, %v2801
      %v2866 = vpack.c.b16 %v2802, %v2802
      %v2867 = vpack.c.b16 %v2803, %v2803
      %v2868 = vpack.c.b16 %v2804, %v2804
      %v2869 = vpack.c.b16 %v2805, %v2805
      %v2870 = vpack.c.b16 %v2806, %v2806
      %v2871 = vpack.c.b16 %v2807, %v2807
      %v2872 = vpack.c.b16 %v2808, %v2808
      %v2873 = vpack.c.b16 %v2809, %v2809
      %v2874 = vpack.c.b16 %v2810, %v2810
      %v2875 = vpack.c.b16 %v2811, %v2811
      %v2876 = vpack.c.b16 %v2812, %v2812
      %v2877 = vpack.c.b16 %v2813, %v2813
      %v2878 = vpack.c.b16 %v2814, %v2814
      %v2879 = vpack.c.b16 %v2815, %v2815
      %v2880 = vpack.c.b16 %v2816, %v2816
      %v2881 = vpack.c.b16 %v2817, %v2817
      %v2882 = vpack.c.b16 %v2818, %v2818
      %v2883 = vpack.c.b16 %v2819, %v2819
      %v2884 = vpack.c.b16 %v2820, %v2820
      %v2885 = vpack.c.b16 %v2821, %v2821
      %v2886 = vpack.c.b16 %v2822, %v2822
      %v2887 = vpack.c.b16 %v2823, %v2823
      %v2888 = vpack.c.b16 %v2824, %v2824
      %v2889 = vpack.c.b16 %v2825, %v2825
      %v2890 = vpack.c.b16 %v2826, %v2826
      %v2891 = vpack.c.b16 %v2827, %v2827
      %v2892 = vpack.c.b16 %v2828, %v2828
      %v2893 = vpack.c.b16 %v2829, %v2829
      %v2894 = vpack.c.b16 %v2830, %v2830
      %v2895 = vpack.c.b16 %v2831, %v2831
      %v2896 = vpack.c.b16 %v2832, %v2832
      %v2897 = vpack.c.b16 %v2833, %v2833
      %v2898 = vpack.c.b16 %v2834, %v2834
      %vm2963 = vcmask 60416
      %2964 = vst.msk [vmem:[%s175] sm:$0xf] %vm2963, %v2835
      %2965 = vst.msk [vmem:[%s175 + $0x4] sm:$0xf] %vm2963, %v2836
      %2966 = vst.msk [vmem:[%s175 + $0x8] sm:$0xf] %vm2963, %v2837
      %2967 = vst.msk [vmem:[%s175 + $0xc] sm:$0xf] %vm2963, %v2838
      %2968 = vst.msk [vmem:[%s175 + $0x10] sm:$0xf] %vm2963, %v2839
      %2969 = vst.msk [vmem:[%s175 + $0x14] sm:$0xf] %vm2963, %v2840
      %2970 = vst.msk [vmem:[%s175 + $0x18] sm:$0xf] %vm2963, %v2841
      %2971 = vst.msk [vmem:[%s175 + $0x1c] sm:$0xf] %vm2963, %v2842
      %2972 = vst.msk [vmem:[%s175 + $0x20] sm:$0xf] %vm2963, %v2843
      %2973 = vst.msk [vmem:[%s175 + $0x24] sm:$0xf] %vm2963, %v2844
      %2974 = vst.msk [vmem:[%s175 + $0x28] sm:$0xf] %vm2963, %v2845
      %2975 = vst.msk [vmem:[%s175 + $0x2c] sm:$0xf] %vm2963, %v2846
      %2976 = vst.msk [vmem:[%s175 + $0x30] sm:$0xf] %vm2963, %v2847
      %2977 = vst.msk [vmem:[%s175 + $0x34] sm:$0xf] %vm2963, %v2848
      %2978 = vst.msk [vmem:[%s175 + $0x38] sm:$0xf] %vm2963, %v2849
      %2979 = vst.msk [vmem:[%s175 + $0x3c] sm:$0xf] %vm2963, %v2850
      %2980 = vst.msk [vmem:[%s175 + $0x40] sm:$0xf] %vm2963, %v2851
      %2981 = vst.msk [vmem:[%s175 + $0x44] sm:$0xf] %vm2963, %v2852
      %2982 = vst.msk [vmem:[%s175 + $0x48] sm:$0xf] %vm2963, %v2853
      %2983 = vst.msk [vmem:[%s175 + $0x4c] sm:$0xf] %vm2963, %v2854
      %2984 = vst.msk [vmem:[%s175 + $0x50] sm:$0xf] %vm2963, %v2855
      %2985 = vst.msk [vmem:[%s175 + $0x54] sm:$0xf] %vm2963, %v2856
      %2986 = vst.msk [vmem:[%s175 + $0x58] sm:$0xf] %vm2963, %v2857
      %2987 = vst.msk [vmem:[%s175 + $0x5c] sm:$0xf] %vm2963, %v2858
      %2988 = vst.msk [vmem:[%s175 + $0x60] sm:$0xf] %vm2963, %v2859
      %2989 = vst.msk [vmem:[%s175 + $0x64] sm:$0xf] %vm2963, %v2860
      %2990 = vst.msk [vmem:[%s175 + $0x68] sm:$0xf] %vm2963, %v2861
      %2991 = vst.msk [vmem:[%s175 + $0x6c] sm:$0xf] %vm2963, %v2862
      %2992 = vst.msk [vmem:[%s175 + $0x70] sm:$0xf] %vm2963, %v2863
      %2993 = vst.msk [vmem:[%s175 + $0x74] sm:$0xf] %vm2963, %v2864
      %2994 = vst.msk [vmem:[%s175 + $0x78] sm:$0xf] %vm2963, %v2865
      %2995 = vst.msk [vmem:[%s175 + $0x7c] sm:$0xf] %vm2963, %v2866
      %2996 = vst.msk [vmem:[%s175 + $0x80] sm:$0xf] %vm2963, %v2867
      %2997 = vst.msk [vmem:[%s175 + $0x84] sm:$0xf] %vm2963, %v2868
      %2998 = vst.msk [vmem:[%s175 + $0x88] sm:$0xf] %vm2963, %v2869
      %2999 = vst.msk [vmem:[%s175 + $0x8c] sm:$0xf] %vm2963, %v2870
      %3000 = vst.msk [vmem:[%s175 + $0x90] sm:$0xf] %vm2963, %v2871
      %3001 = vst.msk [vmem:[%s175 + $0x94] sm:$0xf] %vm2963, %v2872
      %3002 = vst.msk [vmem:[%s175 + $0x98] sm:$0xf] %vm2963, %v2873
      %3003 = vst.msk [vmem:[%s175 + $0x9c] sm:$0xf] %vm2963, %v2874
      %3004 = vst.msk [vmem:[%s175 + $0xa0] sm:$0xf] %vm2963, %v2875
      %3005 = vst.msk [vmem:[%s175 + $0xa4] sm:$0xf] %vm2963, %v2876
      %3006 = vst.msk [vmem:[%s175 + $0xa8] sm:$0xf] %vm2963, %v2877
      %3007 = vst.msk [vmem:[%s175 + $0xac] sm:$0xf] %vm2963, %v2878
      %3008 = vst.msk [vmem:[%s175 + $0xb0] sm:$0xf] %vm2963, %v2879
      %3009 = vst.msk [vmem:[%s175 + $0xb4] sm:$0xf] %vm2963, %v2880
      %3010 = vst.msk [vmem:[%s175 + $0xb8] sm:$0xf] %vm2963, %v2881
      %3011 = vst.msk [vmem:[%s175 + $0xbc] sm:$0xf] %vm2963, %v2882
      %3012 = vst.msk [vmem:[%s175 + $0xc0] sm:$0xf] %vm2963, %v2883
      %3013 = vst.msk [vmem:[%s175 + $0xc4] sm:$0xf] %vm2963, %v2884
      %3014 = vst.msk [vmem:[%s175 + $0xc8] sm:$0xf] %vm2963, %v2885
      %3015 = vst.msk [vmem:[%s175 + $0xcc] sm:$0xf] %vm2963, %v2886
      %3016 = vst.msk [vmem:[%s175 + $0xd0] sm:$0xf] %vm2963, %v2887
      %3017 = vst.msk [vmem:[%s175 + $0xd4] sm:$0xf] %vm2963, %v2888
      %3018 = vst.msk [vmem:[%s175 + $0xd8] sm:$0xf] %vm2963, %v2889
      %3019 = vst.msk [vmem:[%s175 + $0xdc] sm:$0xf] %vm2963, %v2890
      %3020 = vst.msk [vmem:[%s175 + $0xe0] sm:$0xf] %vm2963, %v2891
      %3021 = vst.msk [vmem:[%s175 + $0xe4] sm:$0xf] %vm2963, %v2892
      %3022 = vst.msk [vmem:[%s175 + $0xe8] sm:$0xf] %vm2963, %v2893
      %3023 = vst.msk [vmem:[%s175 + $0xec] sm:$0xf] %vm2963, %v2894
      %3024 = vst.msk [vmem:[%s175 + $0xf0] sm:$0xf] %vm2963, %v2895
      %3025 = vst.msk [vmem:[%s175 + $0xf4] sm:$0xf] %vm2963, %v2896
      %3026 = vst.msk [vmem:[%s175 + $0xf8] sm:$0xf] %vm2963, %v2897
      %3027 = vst.msk [vmem:[%s175 + $0xfc] sm:$0xf] %vm2963, %v2898
      %s3028 = smul.u32 64, %s14
      %p3029 = scmp.lt.s32.totalorder %s3028, 255
      %s3030 = scalar_select %p3029, %s3028, 255
      %s3031 = smul.addr %s3030, 4
      %s3032 = scalar_lea.vmem %s3, %s3031
      // Predicated region
      $region33: #{slowfast_forward.2} parent=31 // pred_check
        %p3033 = pneg %p100
      $region34: #{slowfast_forward.2} parent=31 // pred_check_branch
        %3035 = sbr.rel (%p3033) target = $region36
      $region35: #{slowfast_forward.2} parent=31 // pred_region
        %s3036 = smul.u32 64, %s14
      $region36: #{slowfast_forward.2} parent=31 // pred_fallthru
        _
    $region32: #{slowfast_forward.2} parent=5 // pred_fallthru
      _
    %p3037 = scmp.le.s32.totalorder 2, %s9
    // Predicated region
    $region37: #{slowfast_forward.2} parent=5 // pred_check
      %p3038 = pneg %p3037
    $region38: #{slowfast_forward.2} parent=5 // pred_check_branch
      %3040 = sbr.rel (%p3038) target = $region40
    $region39: #{slowfast_forward.2} parent=5 // pred_region
      %s3041 = ssub.s32 %s9, 2
      // Predicated region
      $region41: #{slowfast_forward.2} parent=39 // pred_check
        %p3042 = pneg %p106
      $region42: #{slowfast_forward.2} parent=39 // pred_check_branch
        %3044 = sbr.rel (%p3042) target = $region44
      $region43: #{slowfast_forward.2} parent=39 // pred_region
        %s3045 = smul.u32 64, %s15
        %p3046 = scmp.lt.s32.totalorder %s3045, 255
        %s3047 = scalar_select %p3046, %s3045, 255
        %s3048 = smul.addr %s3047, 4
        %s3049 = scalar_lea.vmem %s3, %s3048
      $region44: #{slowfast_forward.2} parent=39 // pred_fallthru
        _
    $region40: #{slowfast_forward.2} parent=5 // pred_fallthru
      _
  $region6: #{slowfast_forward.2} parent=0 // loop_footer
    %s13 = sadd.s32 1, %s9
  $region7: #{slowfast_forward.2} parent=0 // loop_footer_branch
    %8 = sbr.rel target = $region3
  $region8: #{slowfast_forward.2} parent=0 // loop_exit
    _

</llo_original>
